<compile_context>
chip_gen: v7x
topology: tpu7x:2x2x1
jax: 0.10.0
libtpu: 0.0.40
codegen_flags: <defaults>
</compile_context>

<pallas_src>
import functools

import jax
import jax.numpy as jnp
from jax.experimental import pallas as pl
from jax.experimental.pallas import tpu as pltpu


_TM_MAX = 512          # batch-tile rows (256 -> 512 amortizes per-step overhead)
_LANE = 128


def _round_up(a, m):
    return ((a + m - 1) // m) * m


def _pick_tk(size):
    """K tile for layer 1: whole-K for small inputs, K-tile very large ones."""
    if size <= 8192:
        return size
    for cand in (4096, 2048, 1024, 512, 256, 128):
        if size % cand == 0:
            return cand
    # TODO(synk): zero-pad K in prepare_params when size has no multiple-of-128
    # divisor (e.g. 4*84*84 = 28224) so a huge w1 can still be K-tiled.
    return size


def _mlp_kernel(x_ref,
                w1_ref, b1_ref,
                w2_ref, b2_ref,
                w3_ref, b3_ref,
                w4_ref, b4_ref,
                o_ref, acc_ref):
    k = pl.program_id(1)

    @pl.when(k == 0)
    def _():
        acc_ref[...] = jnp.zeros_like(acc_ref)

    # In-kernel f32 -> bf16 cast of the activation tile (VPU has slack; saves a
    # full HBM round trip that the old wrapper-side astype cost).
    x = x_ref[...].astype(jnp.bfloat16)
    acc_ref[...] += jnp.dot(x, w1_ref[...], preferred_element_type=jnp.float32)

    @pl.when(k == pl.num_programs(1) - 1)
    def _():
        # Bias/ReLU on the f32 accumulator, re-cast to bf16 between MXU layers.
        h = jnp.maximum(acc_ref[...] + b1_ref[...], 0.0).astype(jnp.bfloat16)

        h = jnp.dot(h, w2_ref[...], preferred_element_type=jnp.float32) + b2_ref[...]
        h = jnp.maximum(h, 0.0).astype(jnp.bfloat16)

        h = jnp.dot(h, w3_ref[...], preferred_element_type=jnp.float32) + b3_ref[...]
        h = jnp.maximum(h, 0.0).astype(jnp.bfloat16)

        h = jnp.dot(h, w4_ref[...], preferred_element_type=jnp.float32) + b4_ref[...]
        o_ref[...] = h.astype(o_ref.dtype)


def prepare_params(params):
    """One-time (off the hot path) conversion of f32 (in,out)/(1,out) params to
    the kernel's at-rest layout: bf16 weights, f32 biases, the 64-wide hidden
    dim and actions_n zero-padded to 128 lanes (zeros keep the math exact)."""
    w1 = params["w1"].astype(jnp.bfloat16)
    w2 = params["w2"].astype(jnp.bfloat16)
    w3 = params["w3"]
    w4 = params["w4"]
    h3 = w3.shape[1]                        # 64
    actions_n = w4.shape[1]
    h3_pad = _round_up(h3, _LANE)           # 128
    n_pad = _round_up(actions_n, _LANE)     # 128

    w3p = jnp.zeros((w3.shape[0], h3_pad), jnp.bfloat16).at[:, :h3].set(
        w3.astype(jnp.bfloat16))
    b3p = jnp.zeros((1, h3_pad), jnp.float32).at[:, :h3].set(params["b3"])
    w4p = jnp.zeros((h3_pad, n_pad), jnp.bfloat16).at[:h3, :actions_n].set(
        w4.astype(jnp.bfloat16))
    b4p = jnp.zeros((1, n_pad), jnp.float32).at[:, :actions_n].set(params["b4"])

    return {
        "w1": w1, "b1": params["b1"],
        "w2": w2, "b2": params["b2"],
        "w3": w3p, "b3": b3p,
        "w4": w4p, "b4": b4p,
    }


@functools.partial(jax.jit, static_argnames=("actions_n", "single_buffer_weights"))
def simple_ff_forward(x, params, actions_n, single_buffer_weights=True):
    """x: (B, C, H, W) f32; params: output of prepare_params().  Returns (B, actions_n) f32."""
    B = x.shape[0]
    x_flat = x.reshape(B, -1)               # same as torch x.view(B, -1)
    size = x_flat.shape[1]

    w1, b1 = params["w1"], params["b1"]
    w2, b2 = params["w2"], params["b2"]
    w3, b3 = params["w3"], params["b3"]
    w4, b4 = params["w4"], params["b4"]
    h1 = w1.shape[1]                        # 512
    n_pad = w4.shape[1]                     # padded actions (128)

    tm = B if B <= _TM_MAX else _TM_MAX
    tk = _pick_tk(size)
    num_bt = (B + tm - 1) // tm             # partial last batch tile is masked by Pallas
    num_k = (size + tk - 1) // tk           # exact by construction of _pick_tk

    def resident(shape):
        # Constant index_map -> fetched from HBM once, VMEM-resident all grid.
        index_map = lambda i, k: (0, 0)
        if single_buffer_weights:
            return pl.BlockSpec(shape, index_map, pipeline_mode=pl.Buffered(1))
        return pl.BlockSpec(shape, index_map)

    if num_k == 1:
        w1_spec = resident(w1.shape)
    else:
        # K-tiled layer-1 weight: streamed per K step, keep default double buffering.
        w1_spec = pl.BlockSpec((tk, h1), lambda i, k: (k, 0))

    # Only shard batch tiles across TensorCores when there is real parallel work;
    # otherwise both cores would re-fetch all weights (weight-HBM-bound regime).
    batch_sem = "parallel" if num_bt >= 8 else "arbitrary"

    out = pl.pallas_call(
        _mlp_kernel,
        out_shape=jax.ShapeDtypeStruct((B, n_pad), jnp.float32),
        grid_spec=pltpu.PrefetchScalarGridSpec(
            num_scalar_prefetch=0,
            grid=(num_bt, num_k),
            in_specs=[
                pl.BlockSpec((tm, tk), lambda i, k: (i, k)),   # x: pipelined f32 tiles
                w1_spec, resident(b1.shape),
                resident(w2.shape), resident(b2.shape),
                resident(w3.shape), resident(b3.shape),
                resident(w4.shape), resident(b4.shape),
            ],
            out_specs=pl.BlockSpec((tm, n_pad), lambda i, k: (i, 0)),
            scratch_shapes=[pltpu.VMEM((tm, h1), jnp.float32)],   # layer-1 f32 accumulator
        ),
        compiler_params=pltpu.CompilerParams(
            dimension_semantics=(batch_sem, "arbitrary"),
            vmem_limit_bytes=32 * 1024 * 1024,
        ),
    )(x_flat, w1, b1, w2, b2, w3, b3, w4, b4)

    return out[:, :actions_n]


def init_params(shape, actions_n, key):
    """Deterministic init mimicking nn.Linear's U(-1/sqrt(fan_in), +)."""
    size = 1
    for d in shape:
        size *= d
    dims = [(size, 512), (512, 512), (512, 64), (64, actions_n)]
    params = {}
    keys = jax.random.split(key, 2 * len(dims))
    for idx, (fan_in, fan_out) in enumerate(dims):
        bound = 1.0 / (fan_in ** 0.5)
        params[f"w{idx + 1}"] = jax.random.uniform(
            keys[2 * idx], (fan_in, fan_out), minval=-bound, maxval=bound,
            dtype=jnp.float32)
        params[f"b{idx + 1}"] = jax.random.uniform(
            keys[2 * idx + 1], (1, fan_out), minval=-bound, maxval=bound,
            dtype=jnp.float32)
    return params


if __name__ == "__main__":
    key = jax.random.PRNGKey(0)
    k_x, k_p = jax.random.split(key)

    # Module signature: simpleFF(shape, actions_n); shape is per-sample (C, H, W).
    shape = (4, 16, 16)      # size = 1024
    actions_n = 6
    batch = 2

    x = jax.random.normal(k_x, (batch,) + shape, dtype=jnp.float32)
    params = init_params(shape, actions_n, k_p)
    prepped = jax.block_until_ready(prepare_params(params))   # one-time conversion

    try:
        out = jax.block_until_ready(
            simple_ff_forward(x, prepped, actions_n, single_buffer_weights=True))
    except Exception:
        # JAX versions without BlockSpec(pipeline_mode=pl.Buffered(1)) support:
        # fall back to default double-buffered resident weights.
        out = jax.block_until_ready(
            simple_ff_forward(x, prepped, actions_n, single_buffer_weights=False))

    # Pure-JAX f32 reference (kernel runs bf16 matmuls -> loosened tolerance).
    def ref(x, p):
        h = x.reshape(x.shape[0], -1)
        h = jnp.maximum(h @ p["w1"] + p["b1"], 0.0)
        h = jnp.maximum(h @ p["w2"] + p["b2"], 0.0)
        h = jnp.maximum(h @ p["w3"] + p["b3"], 0.0)
        return h @ p["w4"] + p["b4"]

    expected = ref(x, params)
    assert out.shape == (batch, actions_n), out.shape
    assert jnp.allclose(out, expected, atol=5e-2, rtol=5e-2), (
        float(jnp.max(jnp.abs(out - expected))))

    print("KERNEL_OK")
</pallas_src>

<mosaic_0001>
module attributes {stable_mosaic.version = 11 : i64} {
  func.func @_mlp_kernel(%arg0: i32, %arg1: i32, %arg2: memref<2x1024xf32, #tpu.memory_space<vmem>>, %arg3: memref<1024x512xbf16, #tpu.memory_space<vmem>>, %arg4: memref<1x512xf32, #tpu.memory_space<vmem>>, %arg5: memref<512x512xbf16, #tpu.memory_space<vmem>>, %arg6: memref<1x512xf32, #tpu.memory_space<vmem>>, %arg7: memref<512x128xbf16, #tpu.memory_space<vmem>>, %arg8: memref<1x128xf32, #tpu.memory_space<vmem>>, %arg9: memref<128x128xbf16, #tpu.memory_space<vmem>>, %arg10: memref<1x128xf32, #tpu.memory_space<vmem>>, %arg11: memref<2x128xf32, #tpu.memory_space<vmem>>, %arg12: memref<2x512xf32, #tpu.memory_space<vmem>>) attributes {dimension_semantics = [#tpu.dimension_semantics<arbitrary>, #tpu.dimension_semantics<arbitrary>], iteration_bounds = array<i64: 1, 1>, scalar_prefetch = 0 : i64, scratch_operands = 1 : i64, tpu.core_type = #tpu.core_type<tc>, window_params = [{transform_indices = @transform_0, window_bounds = array<i64: 2, 1024>}, {pipeline_mode = #tpu.pipeline_mode<synchronous>, transform_indices = @transform_1, window_bounds = array<i64: 1024, 512>}, {pipeline_mode = #tpu.pipeline_mode<synchronous>, transform_indices = @transform_2, window_bounds = array<i64: 1, 512>}, {pipeline_mode = #tpu.pipeline_mode<synchronous>, transform_indices = @transform_3, window_bounds = array<i64: 512, 512>}, {pipeline_mode = #tpu.pipeline_mode<synchronous>, transform_indices = @transform_4, window_bounds = array<i64: 1, 512>}, {pipeline_mode = #tpu.pipeline_mode<synchronous>, transform_indices = @transform_5, window_bounds = array<i64: 512, 128>}, {pipeline_mode = #tpu.pipeline_mode<synchronous>, transform_indices = @transform_6, window_bounds = array<i64: 1, 128>}, {pipeline_mode = #tpu.pipeline_mode<synchronous>, transform_indices = @transform_7, window_bounds = array<i64: 128, 128>}, {pipeline_mode = #tpu.pipeline_mode<synchronous>, transform_indices = @transform_8, window_bounds = array<i64: 1, 128>}, {transform_indices = @transform_9, window_bounds = array<i64: 2, 128>}]} {
    %c0_i32 = arith.constant 0 : i32
    %0 = arith.cmpi eq, %arg1, %c0_i32 : i32
    %1 = arith.extui %0 : i1 to i32
    %c0_i32_0 = arith.constant 0 : i32
    %2 = arith.cmpi ne, %1, %c0_i32_0 : i32
    scf.if %2 {
      %cst_10 = arith.constant 0.000000e+00 : f32
      %13 = vector.broadcast %cst_10 : f32 to vector<2x512xf32>
      %c0_11 = arith.constant 0 : index
      %c0_12 = arith.constant 0 : index
      %14 = vector.load %arg12[%c0_11, %c0_12] : memref<2x512xf32, #tpu.memory_space<vmem>>, vector<2x512xf32>
      tpu.vector_store %arg12[%c0_11, %c0_12], %13 {strides = array<i32>} : memref<2x512xf32, #tpu.memory_space<vmem>>, vector<2x512xf32>,
    } else {
    }
    %c0 = arith.constant 0 : index
    %c0_1 = arith.constant 0 : index
    %3 = vector.load %arg2[%c0, %c0_1] : memref<2x1024xf32, #tpu.memory_space<vmem>>, vector<2x1024xf32>
    %4 = arith.truncf %3 : vector<2x1024xf32> to vector<2x1024xbf16>
    %c0_2 = arith.constant 0 : index
    %c0_3 = arith.constant 0 : index
    %5 = vector.load %arg12[%c0_2, %c0_3] : memref<2x512xf32, #tpu.memory_space<vmem>>, vector<2x512xf32>
    %c0_4 = arith.constant 0 : index
    %c0_5 = arith.constant 0 : index
    %6 = vector.load %arg3[%c0_4, %c0_5] : memref<1024x512xbf16, #tpu.memory_space<vmem>>, vector<1024x512xbf16>
    %cst = arith.constant dense<0.000000e+00> : vector<2x512xf32>
    %7 = tpu.matmul %4, %6, %cst {dimension_numbers = #tpu.dot_dimension_numbers<[1], [0], [0], [1], [0, 0, 1, 1], [], []>} : vector<2x1024xbf16>, vector<1024x512xbf16>, vector<2x512xf32> -> vector<2x512xf32>
    %8 = arith.addf %5, %7 : vector<2x512xf32>
    %c0_6 = arith.constant 0 : index
    %c0_7 = arith.constant 0 : index
    %9 = vector.load %arg12[%c0_6, %c0_7] : memref<2x512xf32, #tpu.memory_space<vmem>>, vector<2x512xf32>
    tpu.vector_store %arg12[%c0_6, %c0_7], %8 {strides = array<i32>} : memref<2x512xf32, #tpu.memory_space<vmem>>, vector<2x512xf32>,
    %c0_i32_8 = arith.constant 0 : i32
    %10 = arith.cmpi eq, %arg1, %c0_i32_8 : i32
    %11 = arith.extui %10 : i1 to i32
    %c0_i32_9 = arith.constant 0 : i32
    %12 = arith.cmpi ne, %11, %c0_i32_9 : i32
    scf.if %12 {
      %c0_10 = arith.constant 0 : index
      %c0_11 = arith.constant 0 : index
      %13 = vector.load %arg12[%c0_10, %c0_11] : memref<2x512xf32, #tpu.memory_space<vmem>>, vector<2x512xf32>
      %c0_12 = arith.constant 0 : index
      %c0_13 = arith.constant 0 : index
      %14 = vector.load %arg4[%c0_12, %c0_13] : memref<1x512xf32, #tpu.memory_space<vmem>>, vector<1x512xf32>
      %15 = vector.broadcast %14 : vector<1x512xf32> to vector<2x512xf32>
      %16 = arith.addf %13, %15 : vector<2x512xf32>
      %cst_14 = arith.constant 0.000000e+00 : f32
      %17 = vector.broadcast %cst_14 : f32 to vector<2x512xf32>
      %18 = arith.maximumf %16, %17 : vector<2x512xf32>
      %19 = arith.truncf %18 : vector<2x512xf32> to vector<2x512xbf16>
      %c0_15 = arith.constant 0 : index
      %c0_16 = arith.constant 0 : index
      %20 = vector.load %arg5[%c0_15, %c0_16] : memref<512x512xbf16, #tpu.memory_space<vmem>>, vector<512x512xbf16>
      %cst_17 = arith.constant dense<0.000000e+00> : vector<2x512xf32>
      %21 = tpu.matmul %19, %20, %cst_17 {dimension_numbers = #tpu.dot_dimension_numbers<[1], [0], [0], [1], [0, 0, 1, 1], [], []>} : vector<2x512xbf16>, vector<512x512xbf16>, vector<2x512xf32> -> vector<2x512xf32>
      %c0_18 = arith.constant 0 : index
      %c0_19 = arith.constant 0 : index
      %22 = vector.load %arg6[%c0_18, %c0_19] : memref<1x512xf32, #tpu.memory_space<vmem>>, vector<1x512xf32>
      %23 = vector.broadcast %22 : vector<1x512xf32> to vector<2x512xf32>
      %24 = arith.addf %21, %23 : vector<2x512xf32>
      %cst_20 = arith.constant 0.000000e+00 : f32
      %25 = vector.broadcast %cst_20 : f32 to vector<2x512xf32>
      %26 = arith.maximumf %24, %25 : vector<2x512xf32>
      %27 = arith.truncf %26 : vector<2x512xf32> to vector<2x512xbf16>
      %c0_21 = arith.constant 0 : index
      %c0_22 = arith.constant 0 : index
      %28 = vector.load %arg7[%c0_21, %c0_22] : memref<512x128xbf16, #tpu.memory_space<vmem>>, vector<512x128xbf16>
      %cst_23 = arith.constant dense<0.000000e+00> : vector<2x128xf32>
      %29 = tpu.matmul %27, %28, %cst_23 {dimension_numbers = #tpu.dot_dimension_numbers<[1], [0], [0], [1], [0, 0, 1, 1], [], []>} : vector<2x512xbf16>, vector<512x128xbf16>, vector<2x128xf32> -> vector<2x128xf32>
      %c0_24 = arith.constant 0 : index
      %c0_25 = arith.constant 0 : index
      %30 = vector.load %arg8[%c0_24, %c0_25] : memref<1x128xf32, #tpu.memory_space<vmem>>, vector<1x128xf32>
      %31 = vector.broadcast %30 : vector<1x128xf32> to vector<2x128xf32>
      %32 = arith.addf %29, %31 : vector<2x128xf32>
      %cst_26 = arith.constant 0.000000e+00 : f32
      %33 = vector.broadcast %cst_26 : f32 to vector<2x128xf32>
      %34 = arith.maximumf %32, %33 : vector<2x128xf32>
      %35 = arith.truncf %34 : vector<2x128xf32> to vector<2x128xbf16>
      %c0_27 = arith.constant 0 : index
      %c0_28 = arith.constant 0 : index
      %36 = vector.load %arg9[%c0_27, %c0_28] : memref<128x128xbf16, #tpu.memory_space<vmem>>, vector<128x128xbf16>
      %cst_29 = arith.constant dense<0.000000e+00> : vector<2x128xf32>
      %37 = tpu.matmul %35, %36, %cst_29 {dimension_numbers = #tpu.dot_dimension_numbers<[1], [0], [0], [1], [0, 0, 1, 1], [], []>} : vector<2x128xbf16>, vector<128x128xbf16>, vector<2x128xf32> -> vector<2x128xf32>
      %c0_30 = arith.constant 0 : index
      %c0_31 = arith.constant 0 : index
      %38 = vector.load %arg10[%c0_30, %c0_31] : memref<1x128xf32, #tpu.memory_space<vmem>>, vector<1x128xf32>
      %39 = vector.broadcast %38 : vector<1x128xf32> to vector<2x128xf32>
      %40 = arith.addf %37, %39 : vector<2x128xf32>
      %c0_32 = arith.constant 0 : index
      %c0_33 = arith.constant 0 : index
      %41 = vector.load %arg11[%c0_32, %c0_33] : memref<2x128xf32, #tpu.memory_space<vmem>>, vector<2x128xf32>
      tpu.vector_store %arg11[%c0_32, %c0_33], %40 {strides = array<i32>} : memref<2x128xf32, #tpu.memory_space<vmem>>, vector<2x128xf32>,
    } else {
    }
    return
  }
  func.func @transform_0(%arg0: i32, %arg1: i32) -> (i32, i32) {
    %c0_i32 = arith.constant 0 : i32
    return %arg0, %arg1 : i32, i32
  }
  func.func @transform_1(%arg0: i32, %arg1: i32) -> (i32, i32) {
    %c0_i32 = arith.constant 0 : i32
    %c0_i32_0 = arith.constant 0 : i32
    %c0_i32_1 = arith.constant 0 : i32
    return %c0_i32, %c0_i32_0 : i32, i32
  }
  func.func @transform_2(%arg0: i32, %arg1: i32) -> (i32, i32) {
    %c0_i32 = arith.constant 0 : i32
    %c0_i32_0 = arith.constant 0 : i32
    %c0_i32_1 = arith.constant 0 : i32
    return %c0_i32, %c0_i32_0 : i32, i32
  }
  func.func @transform_3(%arg0: i32, %arg1: i32) -> (i32, i32) {
    %c0_i32 = arith.constant 0 : i32
    %c0_i32_0 = arith.constant 0 : i32
    %c0_i32_1 = arith.constant 0 : i32
    return %c0_i32, %c0_i32_0 : i32, i32
  }
  func.func @transform_4(%arg0: i32, %arg1: i32) -> (i32, i32) {
    %c0_i32 = arith.constant 0 : i32
    %c0_i32_0 = arith.constant 0 : i32
    %c0_i32_1 = arith.constant 0 : i32
    return %c0_i32, %c0_i32_0 : i32, i32
  }
  func.func @transform_5(%arg0: i32, %arg1: i32) -> (i32, i32) {
    %c0_i32 = arith.constant 0 : i32
    %c0_i32_0 = arith.constant 0 : i32
    %c0_i32_1 = arith.constant 0 : i32
    return %c0_i32, %c0_i32_0 : i32, i32
  }
  func.func @transform_6(%arg0: i32, %arg1: i32) -> (i32, i32) {
    %c0_i32 = arith.constant 0 : i32
    %c0_i32_0 = arith.constant 0 : i32
    %c0_i32_1 = arith.constant 0 : i32
    return %c0_i32, %c0_i32_0 : i32, i32
  }
  func.func @transform_7(%arg0: i32, %arg1: i32) -> (i32, i32) {
    %c0_i32 = arith.constant 0 : i32
    %c0_i32_0 = arith.constant 0 : i32
    %c0_i32_1 = arith.constant 0 : i32
    return %c0_i32, %c0_i32_0 : i32, i32
  }
  func.func @transform_8(%arg0: i32, %arg1: i32) -> (i32, i32) {
    %c0_i32 = arith.constant 0 : i32
    %c0_i32_0 = arith.constant 0 : i32
    %c0_i32_1 = arith.constant 0 : i32
    return %c0_i32, %c0_i32_0 : i32, i32
  }
  func.func @transform_9(%arg0: i32, %arg1: i32) -> (i32, i32) {
    %c0_i32 = arith.constant 0 : i32
    %c0_i32_0 = arith.constant 0 : i32
    return %arg0, %c0_i32 : i32, i32
  }
}

module attributes {stable_mosaic.version = 11 : i64} {
  func.func @_mlp_kernel(%arg0: i32, %arg1: i32, %arg2: memref<2x1024xf32, #tpu.memory_space<vmem>>, %arg3: memref<1024x512xbf16, #tpu.memory_space<vmem>>, %arg4: memref<1x512xf32, #tpu.memory_space<vmem>>, %arg5: memref<512x512xbf16, #tpu.memory_space<vmem>>, %arg6: memref<1x512xf32, #tpu.memory_space<vmem>>, %arg7: memref<512x128xbf16, #tpu.memory_space<vmem>>, %arg8: memref<1x128xf32, #tpu.memory_space<vmem>>, %arg9: memref<128x128xbf16, #tpu.memory_space<vmem>>, %arg10: memref<1x128xf32, #tpu.memory_space<vmem>>, %arg11: memref<2x128xf32, #tpu.memory_space<vmem>>, %arg12: memref<2x512xf32, #tpu.memory_space<vmem>>) attributes {dimension_semantics = [#tpu.dimension_semantics<arbitrary>, #tpu.dimension_semantics<arbitrary>], iteration_bounds = array<i64: 1, 1>, scalar_prefetch = 0 : i64, scratch_operands = 1 : i64, tpu.core_type = #tpu.core_type<tc>, window_params = [{transform_indices = @transform_0, window_bounds = array<i64: 2, 1024>}, {pipeline_mode = #tpu.pipeline_mode<synchronous>, transform_indices = @transform_1, window_bounds = array<i64: 1024, 512>}, {pipeline_mode = #tpu.pipeline_mode<synchronous>, transform_indices = @transform_2, window_bounds = array<i64: 1, 512>}, {pipeline_mode = #tpu.pipeline_mode<synchronous>, transform_indices = @transform_3, window_bounds = array<i64: 512, 512>}, {pipeline_mode = #tpu.pipeline_mode<synchronous>, transform_indices = @transform_4, window_bounds = array<i64: 1, 512>}, {pipeline_mode = #tpu.pipeline_mode<synchronous>, transform_indices = @transform_5, window_bounds = array<i64: 512, 128>}, {pipeline_mode = #tpu.pipeline_mode<synchronous>, transform_indices = @transform_6, window_bounds = array<i64: 1, 128>}, {pipeline_mode = #tpu.pipeline_mode<synchronous>, transform_indices = @transform_7, window_bounds = array<i64: 128, 128>}, {pipeline_mode = #tpu.pipeline_mode<synchronous>, transform_indices = @transform_8, window_bounds = array<i64: 1, 128>}, {transform_indices = @transform_9, window_bounds = array<i64: 2, 128>}]} {
    %c0_i32 = arith.constant 0 : i32
    %0 = arith.cmpi eq, %arg1, %c0_i32 : i32
    %1 = arith.extui %0 : i1 to i32
    %c0_i32_0 = arith.constant 0 : i32
    %2 = arith.cmpi ne, %1, %c0_i32_0 : i32
    scf.if %2 {
      %cst_10 = arith.constant 0.000000e+00 : f32
      %13 = vector.broadcast %cst_10 : f32 to vector<2x512xf32>
      %c0_11 = arith.constant 0 : index
      %c0_12 = arith.constant 0 : index
      %14 = vector.load %arg12[%c0_11, %c0_12] : memref<2x512xf32, #tpu.memory_space<vmem>>, vector<2x512xf32>
      tpu.vector_store %arg12[%c0_11, %c0_12], %13 {strides = array<i32>} : memref<2x512xf32, #tpu.memory_space<vmem>>, vector<2x512xf32>,
    } else {
    }
    %c0 = arith.constant 0 : index
    %c0_1 = arith.constant 0 : index
    %3 = vector.load %arg2[%c0, %c0_1] : memref<2x1024xf32, #tpu.memory_space<vmem>>, vector<2x1024xf32>
    %4 = arith.truncf %3 : vector<2x1024xf32> to vector<2x1024xbf16>
    %c0_2 = arith.constant 0 : index
    %c0_3 = arith.constant 0 : index
    %5 = vector.load %arg12[%c0_2, %c0_3] : memref<2x512xf32, #tpu.memory_space<vmem>>, vector<2x512xf32>
    %c0_4 = arith.constant 0 : index
    %c0_5 = arith.constant 0 : index
    %6 = vector.load %arg3[%c0_4, %c0_5] : memref<1024x512xbf16, #tpu.memory_space<vmem>>, vector<1024x512xbf16>
    %cst = arith.constant dense<0.000000e+00> : vector<2x512xf32>
    %7 = tpu.matmul %4, %6, %cst {dimension_numbers = #tpu.dot_dimension_numbers<[1], [0], [0], [1], [0, 0, 1, 1], [], []>} : vector<2x1024xbf16>, vector<1024x512xbf16>, vector<2x512xf32> -> vector<2x512xf32>
    %8 = arith.addf %5, %7 : vector<2x512xf32>
    %c0_6 = arith.constant 0 : index
    %c0_7 = arith.constant 0 : index
    %9 = vector.load %arg12[%c0_6, %c0_7] : memref<2x512xf32, #tpu.memory_space<vmem>>, vector<2x512xf32>
    tpu.vector_store %arg12[%c0_6, %c0_7], %8 {strides = array<i32>} : memref<2x512xf32, #tpu.memory_space<vmem>>, vector<2x512xf32>,
    %c0_i32_8 = arith.constant 0 : i32
    %10 = arith.cmpi eq, %arg1, %c0_i32_8 : i32
    %11 = arith.extui %10 : i1 to i32
    %c0_i32_9 = arith.constant 0 : i32
    %12 = arith.cmpi ne, %11, %c0_i32_9 : i32
    scf.if %12 {
      %c0_10 = arith.constant 0 : index
      %c0_11 = arith.constant 0 : index
      %13 = vector.load %arg12[%c0_10, %c0_11] : memref<2x512xf32, #tpu.memory_space<vmem>>, vector<2x512xf32>
      %c0_12 = arith.constant 0 : index
      %c0_13 = arith.constant 0 : index
      %14 = vector.load %arg4[%c0_12, %c0_13] : memref<1x512xf32, #tpu.memory_space<vmem>>, vector<1x512xf32>
      %15 = vector.broadcast %14 : vector<1x512xf32> to vector<2x512xf32>
      %16 = arith.addf %13, %15 : vector<2x512xf32>
      %cst_14 = arith.constant 0.000000e+00 : f32
      %17 = vector.broadcast %cst_14 : f32 to vector<2x512xf32>
      %18 = arith.maximumf %16, %17 : vector<2x512xf32>
      %19 = arith.truncf %18 : vector<2x512xf32> to vector<2x512xbf16>
      %c0_15 = arith.constant 0 : index
      %c0_16 = arith.constant 0 : index
      %20 = vector.load %arg5[%c0_15, %c0_16] : memref<512x512xbf16, #tpu.memory_space<vmem>>, vector<512x512xbf16>
      %cst_17 = arith.constant dense<0.000000e+00> : vector<2x512xf32>
      %21 = tpu.matmul %19, %20, %cst_17 {dimension_numbers = #tpu.dot_dimension_numbers<[1], [0], [0], [1], [0, 0, 1, 1], [], []>} : vector<2x512xbf16>, vector<512x512xbf16>, vector<2x512xf32> -> vector<2x512xf32>
      %c0_18 = arith.constant 0 : index
      %c0_19 = arith.constant 0 : index
      %22 = vector.load %arg6[%c0_18, %c0_19] : memref<1x512xf32, #tpu.memory_space<vmem>>, vector<1x512xf32>
      %23 = vector.broadcast %22 : vector<1x512xf32> to vector<2x512xf32>
      %24 = arith.addf %21, %23 : vector<2x512xf32>
      %cst_20 = arith.constant 0.000000e+00 : f32
      %25 = vector.broadcast %cst_20 : f32 to vector<2x512xf32>
      %26 = arith.maximumf %24, %25 : vector<2x512xf32>
      %27 = arith.truncf %26 : vector<2x512xf32> to vector<2x512xbf16>
      %c0_21 = arith.constant 0 : index
      %c0_22 = arith.constant 0 : index
      %28 = vector.load %arg7[%c0_21, %c0_22] : memref<512x128xbf16, #tpu.memory_space<vmem>>, vector<512x128xbf16>
      %cst_23 = arith.constant dense<0.000000e+00> : vector<2x128xf32>
      %29 = tpu.matmul %27, %28, %cst_23 {dimension_numbers = #tpu.dot_dimension_numbers<[1], [0], [0], [1], [0, 0, 1, 1], [], []>} : vector<2x512xbf16>, vector<512x128xbf16>, vector<2x128xf32> -> vector<2x128xf32>
      %c0_24 = arith.constant 0 : index
      %c0_25 = arith.constant 0 : index
      %30 = vector.load %arg8[%c0_24, %c0_25] : memref<1x128xf32, #tpu.memory_space<vmem>>, vector<1x128xf32>
      %31 = vector.broadcast %30 : vector<1x128xf32> to vector<2x128xf32>
      %32 = arith.addf %29, %31 : vector<2x128xf32>
      %cst_26 = arith.constant 0.000000e+00 : f32
      %33 = vector.broadcast %cst_26 : f32 to vector<2x128xf32>
      %34 = arith.maximumf %32, %33 : vector<2x128xf32>
      %35 = arith.truncf %34 : vector<2x128xf32> to vector<2x128xbf16>
      %c0_27 = arith.constant 0 : index
      %c0_28 = arith.constant 0 : index
      %36 = vector.load %arg9[%c0_27, %c0_28] : memref<128x128xbf16, #tpu.memory_space<vmem>>, vector<128x128xbf16>
      %cst_29 = arith.constant dense<0.000000e+00> : vector<2x128xf32>
      %37 = tpu.matmul %35, %36, %cst_29 {dimension_numbers = #tpu.dot_dimension_numbers<[1], [0], [0], [1], [0, 0, 1, 1], [], []>} : vector<2x128xbf16>, vector<128x128xbf16>, vector<2x128xf32> -> vector<2x128xf32>
      %c0_30 = arith.constant 0 : index
      %c0_31 = arith.constant 0 : index
      %38 = vector.load %arg10[%c0_30, %c0_31] : memref<1x128xf32, #tpu.memory_space<vmem>>, vector<1x128xf32>
      %39 = vector.broadcast %38 : vector<1x128xf32> to vector<2x128xf32>
      %40 = arith.addf %37, %39 : vector<2x128xf32>
      %c0_32 = arith.constant 0 : index
      %c0_33 = arith.constant 0 : index
      %41 = vector.load %arg11[%c0_32, %c0_33] : memref<2x128xf32, #tpu.memory_space<vmem>>, vector<2x128xf32>
      tpu.vector_store %arg11[%c0_32, %c0_33], %40 {strides = array<i32>} : memref<2x128xf32, #tpu.memory_space<vmem>>, vector<2x128xf32>,
    } else {
    }
    return
  }
  func.func @transform_0(%arg0: i32, %arg1: i32) -> (i32, i32) {
    %c0_i32 = arith.constant 0 : i32
    return %arg0, %arg1 : i32, i32
  }
  func.func @transform_1(%arg0: i32, %arg1: i32) -> (i32, i32) {
    %c0_i32 = arith.constant 0 : i32
    %c0_i32_0 = arith.constant 0 : i32
    %c0_i32_1 = arith.constant 0 : i32
    return %c0_i32, %c0_i32_0 : i32, i32
  }
  func.func @transform_2(%arg0: i32, %arg1: i32) -> (i32, i32) {
    %c0_i32 = arith.constant 0 : i32
    %c0_i32_0 = arith.constant 0 : i32
    %c0_i32_1 = arith.constant 0 : i32
    return %c0_i32, %c0_i32_0 : i32, i32
  }
  func.func @transform_3(%arg0: i32, %arg1: i32) -> (i32, i32) {
    %c0_i32 = arith.constant 0 : i32
    %c0_i32_0 = arith.constant 0 : i32
    %c0_i32_1 = arith.constant 0 : i32
    return %c0_i32, %c0_i32_0 : i32, i32
  }
  func.func @transform_4(%arg0: i32, %arg1: i32) -> (i32, i32) {
    %c0_i32 = arith.constant 0 : i32
    %c0_i32_0 = arith.constant 0 : i32
    %c0_i32_1 = arith.constant 0 : i32
    return %c0_i32, %c0_i32_0 : i32, i32
  }
  func.func @transform_5(%arg0: i32, %arg1: i32) -> (i32, i32) {
    %c0_i32 = arith.constant 0 : i32
    %c0_i32_0 = arith.constant 0 : i32
    %c0_i32_1 = arith.constant 0 : i32
    return %c0_i32, %c0_i32_0 : i32, i32
  }
  func.func @transform_6(%arg0: i32, %arg1: i32) -> (i32, i32) {
    %c0_i32 = arith.constant 0 : i32
    %c0_i32_0 = arith.constant 0 : i32
    %c0_i32_1 = arith.constant 0 : i32
    return %c0_i32, %c0_i32_0 : i32, i32
  }
  func.func @transform_7(%arg0: i32, %arg1: i32) -> (i32, i32) {
    %c0_i32 = arith.constant 0 : i32
    %c0_i32_0 = arith.constant 0 : i32
    %c0_i32_1 = arith.constant 0 : i32
    return %c0_i32, %c0_i32_0 : i32, i32
  }
  func.func @transform_8(%arg0: i32, %arg1: i32) -> (i32, i32) {
    %c0_i32 = arith.constant 0 : i32
    %c0_i32_0 = arith.constant 0 : i32
    %c0_i32_1 = arith.constant 0 : i32
    return %c0_i32, %c0_i32_0 : i32, i32
  }
  func.func @transform_9(%arg0: i32, %arg1: i32) -> (i32, i32) {
    %c0_i32 = arith.constant 0 : i32
    %c0_i32_0 = arith.constant 0 : i32
    return %arg0, %c0_i32 : i32, i32
  }
}

</mosaic_0001>

<llo_original>
// kernel: simple_ff_forward.1
$region0: #{simple_ff_forward.1}
  #allocation0 [shape = 'u32[]', space=smem, size = 0x4, offset = 0x4, fixed_abs, tag = 'smem constant byte address 0x4 - core index']
  #allocation1 [shape = 'u32[144,128]{1,0:T(1,128)}', space=vmem, size = 0x12000, scoped, tag = 'internal scratch']
  #allocation2 [shape = 'f32[2,512]{1,0:T(2,128)}', space=vmem, size = 0x1000, scoped, tag = 'scratch operand']
  %s0 = inlined_call_operand.vmem [shape: f32[2,1024], index: 0, kind: input, shape index: {}]
  %s1 = inlined_call_operand.hbm [shape: bf16[1024,512], index: 1, kind: input, shape index: {}]
  %s2 = inlined_call_operand.vmem [shape: f32[1,512], index: 2, kind: input, shape index: {}]
  %s3 = inlined_call_operand.hbm [shape: bf16[512,512], index: 3, kind: input, shape index: {}]
  %s4 = inlined_call_operand.vmem [shape: f32[1,512], index: 4, kind: input, shape index: {}]
  %s5 = inlined_call_operand.hbm [shape: bf16[512,128], index: 5, kind: input, shape index: {}]
  %s6 = inlined_call_operand.vmem [shape: f32[1,128], index: 6, kind: input, shape index: {}]
  %s7 = inlined_call_operand.vmem [shape: bf16[128,128], index: 7, kind: input, shape index: {}]
  %s8 = inlined_call_operand.vmem [shape: f32[1,128], index: 8, kind: input, shape index: {}]
  %s9 = inlined_call_operand.hbm [shape: f32[2,128], index: 9, kind: output, shape index: {}]
  %s10 = sld [smem:[#allocation0]]
  $region66: #{simple_ff_forward.1} parent=0
    _
  %s12 = ssub.s32 1, %s10
  %s13 = scalar_select 0, %s12, %s10
  $region1: #{simple_ff_forward.1} parent=0
    #allocation3 [shape = 'u8[1048576]{0}', space=vmem, size = 0x100000, scoped, tag = 'input window, operand 1, single buffered']
    #allocation4 [shape = 's32[1]{0}', space=sflag, size = 0x4, scoped, tag = 'scoped memory for simple_ff_forward.1']
    #allocation5 [shape = 's32[1]{0}', space=sflag, size = 0x4, scoped, tag = 'scoped memory for simple_ff_forward.1']
    #allocation6 [shape = 'u8[524288]{0}', space=vmem, size = 0x80000, scoped, tag = 'input window, operand 3, single buffered']
    #allocation7 [shape = 's32[1]{0}', space=sflag, size = 0x4, scoped, tag = 'scoped memory for simple_ff_forward.1']
    #allocation8 [shape = 'u8[131072]{0}', space=vmem, size = 0x20000, scoped, tag = 'input window, operand 5, single buffered']
    #allocation9 [shape = 'u8[1024]{0}', space=vmem, size = 0x400, scoped, tag = 'output window, operand 0, single buffered']
    %14 = vsyncpa [#allocation4], 0
    %15 = vsyncpa [#allocation7], 0
    %16 = vsyncpa [#allocation5], 0
    // Predicated region
    $region2: #{simple_ff_forward.1} parent=1 // pred_check
      _
    $region3: #{simple_ff_forward.1} parent=1 // pred_check_branch
      %18 = sbr.rel (0) target = $region5
    $region4: #{simple_ff_forward.1} parent=1 // pred_region
      _
    $region5: #{simple_ff_forward.1} parent=1 // pred_fallthru
      _
    // Predicated region
    $region6: #{simple_ff_forward.1} parent=1 // pred_check
      _
    $region7: #{simple_ff_forward.1} parent=1 // pred_check_branch
      %20 = sbr.rel (0) target = $region9
    $region8: #{simple_ff_forward.1} parent=1 // pred_region
      %s22 = ssub.s32 32768, 32768
      %23 = vsyncadd [#allocation4], %s22
      %s24 = sshll.u32 [#allocation3], 4
      %s25 = int_to_ptr.vmem [resolvable:$true] %s24
      %30 = dma.hbm_to_vmem [thread:$0]  %s1, 32768, %s25, [#allocation4], 256, 256, 16
    $region9: #{simple_ff_forward.1} parent=1 // pred_fallthru
      _
    // Predicated region
    $region10: #{simple_ff_forward.1} parent=1 // pred_check
      _
    $region11: #{simple_ff_forward.1} parent=1 // pred_check_branch
      %32 = sbr.rel (0) target = $region13
    $region12: #{simple_ff_forward.1} parent=1 // pred_region
      _
    $region13: #{simple_ff_forward.1} parent=1 // pred_fallthru
      _
    // Predicated region
    $region14: #{simple_ff_forward.1} parent=1 // pred_check
      _
    $region15: #{simple_ff_forward.1} parent=1 // pred_check_branch
      %34 = sbr.rel (0) target = $region17
    $region16: #{simple_ff_forward.1} parent=1 // pred_region
      %s36 = ssub.s32 16384, 16384
      %37 = vsyncadd [#allocation7], %s36
      %s38 = sshll.u32 [#allocation6], 4
      %s39 = int_to_ptr.vmem [resolvable:$true] %s38
      %44 = dma.hbm_to_vmem [thread:$0]  %s3, 16384, %s39, [#allocation7], 256, 256, 16
    $region17: #{simple_ff_forward.1} parent=1 // pred_fallthru
      _
    // Predicated region
    $region18: #{simple_ff_forward.1} parent=1 // pred_check
      _
    $region19: #{simple_ff_forward.1} parent=1 // pred_check_branch
      %46 = sbr.rel (0) target = $region21
    $region20: #{simple_ff_forward.1} parent=1 // pred_region
      _
    $region21: #{simple_ff_forward.1} parent=1 // pred_fallthru
      _
    // Predicated region
    $region22: #{simple_ff_forward.1} parent=1 // pred_check
      _
    $region23: #{simple_ff_forward.1} parent=1 // pred_check_branch
      %48 = sbr.rel (0) target = $region25
    $region24: #{simple_ff_forward.1} parent=1 // pred_region
      %s50 = ssub.s32 4096, 4096
      %51 = vsyncadd [#allocation7], %s50
      %s52 = sshll.u32 [#allocation8], 4
      %s53 = int_to_ptr.vmem [resolvable:$true] %s52
      %58 = dma.hbm_to_vmem [thread:$0]  %s5, 4096, %s53, [#allocation7], 64, 64, 4
    $region25: #{simple_ff_forward.1} parent=1 // pred_fallthru
      _
    // Predicated region
    $region26: #{simple_ff_forward.1} parent=1 // pred_check
      _
    $region27: #{simple_ff_forward.1} parent=1 // pred_check_branch
      %60 = sbr.rel (0) target = $region29
    $region28: #{simple_ff_forward.1} parent=1 // pred_region
      _
    $region29: #{simple_ff_forward.1} parent=1 // pred_fallthru
      _
    // Predicated region
    $region30: #{simple_ff_forward.1} parent=1 // pred_check
      _
    $region31: #{simple_ff_forward.1} parent=1 // pred_check_branch
      %62 = sbr.rel (0) target = $region33
    $region32: #{simple_ff_forward.1} parent=1 // pred_region
      _
    $region33: #{simple_ff_forward.1} parent=1 // pred_fallthru
      _
    // Predicated region
    $region34: #{simple_ff_forward.1} parent=1 // pred_check
      _
    $region35: #{simple_ff_forward.1} parent=1 // pred_check_branch
      %64 = sbr.rel (0) target = $region37
    $region36: #{simple_ff_forward.1} parent=1 // pred_region
      _
    $region37: #{simple_ff_forward.1} parent=1 // pred_fallthru
      _
    // Predicated region
    $region38: #{simple_ff_forward.1} parent=1 // pred_check
      _
    $region39: #{simple_ff_forward.1} parent=1 // pred_check_branch
      %66 = sbr.rel (0) target = $region41
    $region40: #{simple_ff_forward.1} parent=1 // pred_region
      %67 = dma.done [#allocation4], 32768
    $region41: #{simple_ff_forward.1} parent=1 // pred_fallthru
      _
    // Predicated region
    $region42: #{simple_ff_forward.1} parent=1 // pred_check
      _
    $region43: #{simple_ff_forward.1} parent=1 // pred_check_branch
      %69 = sbr.rel (0) target = $region45
    $region44: #{simple_ff_forward.1} parent=1 // pred_region
      %70 = dma.done [#allocation7], 16384
    $region45: #{simple_ff_forward.1} parent=1 // pred_fallthru
      _
    // Predicated region
    $region46: #{simple_ff_forward.1} parent=1 // pred_check
      _
    $region47: #{simple_ff_forward.1} parent=1 // pred_check_branch
      %72 = sbr.rel (0) target = $region49
    $region48: #{simple_ff_forward.1} parent=1 // pred_region
      %73 = dma.done [#allocation7], 4096
    $region49: #{simple_ff_forward.1} parent=1 // pred_fallthru
      _
    %p75 = scmp.eq.s32.totalorder 0, 0
    // Predicated region
    $region50: #{simple_ff_forward.1} parent=1 // pred_check
      %p76 = pneg %p75
    $region51: #{simple_ff_forward.1} parent=1 // pred_check_branch
      %78 = sbr.rel (%p76) target = $region53
    $region52: #{simple_ff_forward.1} parent=1 // pred_region
      %79 = vst [vmem:[#allocation2] sm:$0xff] 0.0
    $region53: #{simple_ff_forward.1} parent=1 // pred_fallthru
      _
    %v80 = vld [vmem:[%s0] sm:$0xff]
    %v81 = vld [vmem:[%s0 + $0x8] sm:$0xff]
    %v84 = vcombine.high %v80, %v80
    %v86 = vunpack.c.l.s4 1983009808
    %v87 = vunpack.c.0.s8 %v86
    %v88 = vlaneseq
    %v89 = vshrl.u32 %v88, 7
    %v90 = vsub.s32 %v87, %v89
    %v91 = vrot.slane %v80, %v90
    %v93 = vunpack.c.l.s4 1983009808
    %v94 = vunpack.c.0.s8 %v93
    %v95 = vlaneseq
    %v96 = vshrl.u32 %v95, 7
    %v97 = vsub.s32 %v94, %v96
    %v98 = vrot.slane %v84, %v97
    %v99 = vcombine.high %v91, %v91
    %v100 = vcombine.high %v98, %v98
    %v101 = vcombine.high %v81, %v81
    %v103 = vunpack.c.l.s4 1983009808
    %v104 = vunpack.c.0.s8 %v103
    %v105 = vlaneseq
    %v106 = vshrl.u32 %v105, 7
    %v107 = vsub.s32 %v104, %v106
    %v108 = vrot.slane %v81, %v107
    %v110 = vunpack.c.l.s4 1983009808
    %v111 = vunpack.c.0.s8 %v110
    %v112 = vlaneseq
    %v113 = vshrl.u32 %v112, 7
    %v114 = vsub.s32 %v111, %v113
    %v115 = vrot.slane %v101, %v114
    %v116 = vcombine.high %v108, %v108
    %v117 = vcombine.high %v115, %v115
    %v126 = vpack.c.bf16 %v91, %v91
    %v127 = vpack.c.bf16 %v99, %v99
    %v128 = vpack.c.bf16 %v98, %v98
    %v129 = vpack.c.bf16 %v100, %v100
    %v130 = vpack.c.bf16 %v108, %v108
    %v131 = vpack.c.bf16 %v116, %v116
    %v132 = vpack.c.bf16 %v115, %v115
    %v133 = vpack.c.bf16 %v117, %v117
    %v134 = vld [vmem:[#allocation2] sm:$0xff]
    %v135 = vld [vmem:[#allocation3] sm:$0xff]
    %v136 = vld [vmem:[#allocation3 + $0x8] sm:$0xff]
    %v137 = vld [vmem:[#allocation3 + $0x10] sm:$0xff]
    %v138 = vld [vmem:[#allocation3 + $0x18] sm:$0xff]
    %v139 = vld [vmem:[#allocation3 + $0x20] sm:$0xff]
    %v140 = vld [vmem:[#allocation3 + $0x28] sm:$0xff]
    %v141 = vld [vmem:[#allocation3 + $0x30] sm:$0xff]
    %v142 = vld [vmem:[#allocation3 + $0x38] sm:$0xff]
    %v143 = vld [vmem:[#allocation3 + $0x40] sm:$0xff]
    %v144 = vld [vmem:[#allocation3 + $0x48] sm:$0xff]
    %v145 = vld [vmem:[#allocation3 + $0x50] sm:$0xff]
    %v146 = vld [vmem:[#allocation3 + $0x58] sm:$0xff]
    %v147 = vld [vmem:[#allocation3 + $0x60] sm:$0xff]
    %v148 = vld [vmem:[#allocation3 + $0x68] sm:$0xff]
    %v149 = vld [vmem:[#allocation3 + $0x70] sm:$0xff]
    %v150 = vld [vmem:[#allocation3 + $0x78] sm:$0xff]
    %v151 = vld [vmem:[#allocation3 + $0x80] sm:$0xff]
    %v152 = vld [vmem:[#allocation3 + $0x88] sm:$0xff]
    %v153 = vld [vmem:[#allocation3 + $0x90] sm:$0xff]
    %v154 = vld [vmem:[#allocation3 + $0x98] sm:$0xff]
    %v155 = vld [vmem:[#allocation3 + $0xa0] sm:$0xff]
    %v156 = vld [vmem:[#allocation3 + $0xa8] sm:$0xff]
    %v157 = vld [vmem:[#allocation3 + $0xb0] sm:$0xff]
    %v158 = vld [vmem:[#allocation3 + $0xb8] sm:$0xff]
    %v159 = vld [vmem:[#allocation3 + $0xc0] sm:$0xff]
    %v160 = vld [vmem:[#allocation3 + $0xc8] sm:$0xff]
    %v161 = vld [vmem:[#allocation3 + $0xd0] sm:$0xff]
    %v162 = vld [vmem:[#allocation3 + $0xd8] sm:$0xff]
    %v163 = vld [vmem:[#allocation3 + $0xe0] sm:$0xff]
    %v164 = vld [vmem:[#allocation3 + $0xe8] sm:$0xff]
    %v165 = vld [vmem:[#allocation3 + $0xf0] sm:$0xff]
    %v166 = vld [vmem:[#allocation3 + $0xf8] sm:$0xff]
    %v167 = vld [vmem:[#allocation3 + $0x100] sm:$0xff]
    %v168 = vld [vmem:[#allocation3 + $0x108] sm:$0xff]
    %v169 = vld [vmem:[#allocation3 + $0x110] sm:$0xff]
    %v170 = vld [vmem:[#allocation3 + $0x118] sm:$0xff]
    %v171 = vld [vmem:[#allocation3 + $0x120] sm:$0xff]
    %v172 = vld [vmem:[#allocation3 + $0x128] sm:$0xff]
    %v173 = vld [vmem:[#allocation3 + $0x130] sm:$0xff]
    %v174 = vld [vmem:[#allocation3 + $0x138] sm:$0xff]
    %v175 = vld [vmem:[#allocation3 + $0x140] sm:$0xff]
    %v176 = vld [vmem:[#allocation3 + $0x148] sm:$0xff]
    %v177 = vld [vmem:[#allocation3 + $0x150] sm:$0xff]
    %v178 = vld [vmem:[#allocation3 + $0x158] sm:$0xff]
    %v179 = vld [vmem:[#allocation3 + $0x160] sm:$0xff]
    %v180 = vld [vmem:[#allocation3 + $0x168] sm:$0xff]
    %v181 = vld [vmem:[#allocation3 + $0x170] sm:$0xff]
    %v182 = vld [vmem:[#allocation3 + $0x178] sm:$0xff]
    %v183 = vld [vmem:[#allocation3 + $0x180] sm:$0xff]
    %v184 = vld [vmem:[#allocation3 + $0x188] sm:$0xff]
    %v185 = vld [vmem:[#allocation3 + $0x190] sm:$0xff]
    %v186 = vld [vmem:[#allocation3 + $0x198] sm:$0xff]
    %v187 = vld [vmem:[#allocation3 + $0x1a0] sm:$0xff]
    %v188 = vld [vmem:[#allocation3 + $0x1a8] sm:$0xff]
    %v189 = vld [vmem:[#allocation3 + $0x1b0] sm:$0xff]
    %v190 = vld [vmem:[#allocation3 + $0x1b8] sm:$0xff]
    %v191 = vld [vmem:[#allocation3 + $0x1c0] sm:$0xff]
    %v192 = vld [vmem:[#allocation3 + $0x1c8] sm:$0xff]
    %v193 = vld [vmem:[#allocation3 + $0x1d0] sm:$0xff]
    %v194 = vld [vmem:[#allocation3 + $0x1d8] sm:$0xff]
    %v195 = vld [vmem:[#allocation3 + $0x1e0] sm:$0xff]
    %v196 = vld [vmem:[#allocation3 + $0x1e8] sm:$0xff]
    %v197 = vld [vmem:[#allocation3 + $0x1f0] sm:$0xff]
    %v198 = vld [vmem:[#allocation3 + $0x1f8] sm:$0xff]
    %v199 = vld [vmem:[#allocation3 + $0x200] sm:$0xff]
    %v200 = vld [vmem:[#allocation3 + $0x208] sm:$0xff]
    %v201 = vld [vmem:[#allocation3 + $0x210] sm:$0xff]
    %v202 = vld [vmem:[#allocation3 + $0x218] sm:$0xff]
    %v203 = vld [vmem:[#allocation3 + $0x220] sm:$0xff]
    %v204 = vld [vmem:[#allocation3 + $0x228] sm:$0xff]
    %v205 = vld [vmem:[#allocation3 + $0x230] sm:$0xff]
    %v206 = vld [vmem:[#allocation3 + $0x238] sm:$0xff]
    %v207 = vld [vmem:[#allocation3 + $0x240] sm:$0xff]
    %v208 = vld [vmem:[#allocation3 + $0x248] sm:$0xff]
    %v209 = vld [vmem:[#allocation3 + $0x250] sm:$0xff]
    %v210 = vld [vmem:[#allocation3 + $0x258] sm:$0xff]
    %v211 = vld [vmem:[#allocation3 + $0x260] sm:$0xff]
    %v212 = vld [vmem:[#allocation3 + $0x268] sm:$0xff]
    %v213 = vld [vmem:[#allocation3 + $0x270] sm:$0xff]
    %v214 = vld [vmem:[#allocation3 + $0x278] sm:$0xff]
    %v215 = vld [vmem:[#allocation3 + $0x280] sm:$0xff]
    %v216 = vld [vmem:[#allocation3 + $0x288] sm:$0xff]
    %v217 = vld [vmem:[#allocation3 + $0x290] sm:$0xff]
    %v218 = vld [vmem:[#allocation3 + $0x298] sm:$0xff]
    %v219 = vld [vmem:[#allocation3 + $0x2a0] sm:$0xff]
    %v220 = vld [vmem:[#allocation3 + $0x2a8] sm:$0xff]
    %v221 = vld [vmem:[#allocation3 + $0x2b0] sm:$0xff]
    %v222 = vld [vmem:[#allocation3 + $0x2b8] sm:$0xff]
    %v223 = vld [vmem:[#allocation3 + $0x2c0] sm:$0xff]
    %v224 = vld [vmem:[#allocation3 + $0x2c8] sm:$0xff]
    %v225 = vld [vmem:[#allocation3 + $0x2d0] sm:$0xff]
    %v226 = vld [vmem:[#allocation3 + $0x2d8] sm:$0xff]
    %v227 = vld [vmem:[#allocation3 + $0x2e0] sm:$0xff]
    %v228 = vld [vmem:[#allocation3 + $0x2e8] sm:$0xff]
    %v229 = vld [vmem:[#allocation3 + $0x2f0] sm:$0xff]
    %v230 = vld [vmem:[#allocation3 + $0x2f8] sm:$0xff]
    %v231 = vld [vmem:[#allocation3 + $0x300] sm:$0xff]
    %v232 = vld [vmem:[#allocation3 + $0x308] sm:$0xff]
    %v233 = vld [vmem:[#allocation3 + $0x310] sm:$0xff]
    %v234 = vld [vmem:[#allocation3 + $0x318] sm:$0xff]
    %v235 = vld [vmem:[#allocation3 + $0x320] sm:$0xff]
    %v236 = vld [vmem:[#allocation3 + $0x328] sm:$0xff]
    %v237 = vld [vmem:[#allocation3 + $0x330] sm:$0xff]
    %v238 = vld [vmem:[#allocation3 + $0x338] sm:$0xff]
    %v239 = vld [vmem:[#allocation3 + $0x340] sm:$0xff]
    %v240 = vld [vmem:[#allocation3 + $0x348] sm:$0xff]
    %v241 = vld [vmem:[#allocation3 + $0x350] sm:$0xff]
    %v242 = vld [vmem:[#allocation3 + $0x358] sm:$0xff]
    %v243 = vld [vmem:[#allocation3 + $0x360] sm:$0xff]
    %v244 = vld [vmem:[#allocation3 + $0x368] sm:$0xff]
    %v245 = vld [vmem:[#allocation3 + $0x370] sm:$0xff]
    %v246 = vld [vmem:[#allocation3 + $0x378] sm:$0xff]
    %v247 = vld [vmem:[#allocation3 + $0x380] sm:$0xff]
    %v248 = vld [vmem:[#allocation3 + $0x388] sm:$0xff]
    %v249 = vld [vmem:[#allocation3 + $0x390] sm:$0xff]
    %v250 = vld [vmem:[#allocation3 + $0x398] sm:$0xff]
    %v251 = vld [vmem:[#allocation3 + $0x3a0] sm:$0xff]
    %v252 = vld [vmem:[#allocation3 + $0x3a8] sm:$0xff]
    %v253 = vld [vmem:[#allocation3 + $0x3b0] sm:$0xff]
    %v254 = vld [vmem:[#allocation3 + $0x3b8] sm:$0xff]
    %v255 = vld [vmem:[#allocation3 + $0x3c0] sm:$0xff]
    %v256 = vld [vmem:[#allocation3 + $0x3c8] sm:$0xff]
    %v257 = vld [vmem:[#allocation3 + $0x3d0] sm:$0xff]
    %v258 = vld [vmem:[#allocation3 + $0x3d8] sm:$0xff]
    %v259 = vld [vmem:[#allocation3 + $0x3e0] sm:$0xff]
    %v260 = vld [vmem:[#allocation3 + $0x3e8] sm:$0xff]
    %v261 = vld [vmem:[#allocation3 + $0x3f0] sm:$0xff]
    %v262 = vld [vmem:[#allocation3 + $0x3f8] sm:$0xff]
    %v263 = vld [vmem:[#allocation3 + $0x400] sm:$0xff]
    %v264 = vld [vmem:[#allocation3 + $0x408] sm:$0xff]
    %v265 = vld [vmem:[#allocation3 + $0x410] sm:$0xff]
    %v266 = vld [vmem:[#allocation3 + $0x418] sm:$0xff]
    %v267 = vld [vmem:[#allocation3 + $0x420] sm:$0xff]
    %v268 = vld [vmem:[#allocation3 + $0x428] sm:$0xff]
    %v269 = vld [vmem:[#allocation3 + $0x430] sm:$0xff]
    %v270 = vld [vmem:[#allocation3 + $0x438] sm:$0xff]
    %v271 = vld [vmem:[#allocation3 + $0x440] sm:$0xff]
    %v272 = vld [vmem:[#allocation3 + $0x448] sm:$0xff]
    %v273 = vld [vmem:[#allocation3 + $0x450] sm:$0xff]
    %v274 = vld [vmem:[#allocation3 + $0x458] sm:$0xff]
    %v275 = vld [vmem:[#allocation3 + $0x460] sm:$0xff]
    %v276 = vld [vmem:[#allocation3 + $0x468] sm:$0xff]
    %v277 = vld [vmem:[#allocation3 + $0x470] sm:$0xff]
    %v278 = vld [vmem:[#allocation3 + $0x478] sm:$0xff]
    %v279 = vld [vmem:[#allocation3 + $0x480] sm:$0xff]
    %v280 = vld [vmem:[#allocation3 + $0x488] sm:$0xff]
    %v281 = vld [vmem:[#allocation3 + $0x490] sm:$0xff]
    %v282 = vld [vmem:[#allocation3 + $0x498] sm:$0xff]
    %v283 = vld [vmem:[#allocation3 + $0x4a0] sm:$0xff]
    %v284 = vld [vmem:[#allocation3 + $0x4a8] sm:$0xff]
    %v285 = vld [vmem:[#allocation3 + $0x4b0] sm:$0xff]
    %v286 = vld [vmem:[#allocation3 + $0x4b8] sm:$0xff]
    %v287 = vld [vmem:[#allocation3 + $0x4c0] sm:$0xff]
    %v288 = vld [vmem:[#allocation3 + $0x4c8] sm:$0xff]
    %v289 = vld [vmem:[#allocation3 + $0x4d0] sm:$0xff]
    %v290 = vld [vmem:[#allocation3 + $0x4d8] sm:$0xff]
    %v291 = vld [vmem:[#allocation3 + $0x4e0] sm:$0xff]
    %v292 = vld [vmem:[#allocation3 + $0x4e8] sm:$0xff]
    %v293 = vld [vmem:[#allocation3 + $0x4f0] sm:$0xff]
    %v294 = vld [vmem:[#allocation3 + $0x4f8] sm:$0xff]
    %v295 = vld [vmem:[#allocation3 + $0x500] sm:$0xff]
    %v296 = vld [vmem:[#allocation3 + $0x508] sm:$0xff]
    %v297 = vld [vmem:[#allocation3 + $0x510] sm:$0xff]
    %v298 = vld [vmem:[#allocation3 + $0x518] sm:$0xff]
    %v299 = vld [vmem:[#allocation3 + $0x520] sm:$0xff]
    %v300 = vld [vmem:[#allocation3 + $0x528] sm:$0xff]
    %v301 = vld [vmem:[#allocation3 + $0x530] sm:$0xff]
    %v302 = vld [vmem:[#allocation3 + $0x538] sm:$0xff]
    %v303 = vld [vmem:[#allocation3 + $0x540] sm:$0xff]
    %v304 = vld [vmem:[#allocation3 + $0x548] sm:$0xff]
    %v305 = vld [vmem:[#allocation3 + $0x550] sm:$0xff]
    %v306 = vld [vmem:[#allocation3 + $0x558] sm:$0xff]
    %v307 = vld [vmem:[#allocation3 + $0x560] sm:$0xff]
    %v308 = vld [vmem:[#allocation3 + $0x568] sm:$0xff]
    %v309 = vld [vmem:[#allocation3 + $0x570] sm:$0xff]
    %v310 = vld [vmem:[#allocation3 + $0x578] sm:$0xff]
    %v311 = vld [vmem:[#allocation3 + $0x580] sm:$0xff]
    %v312 = vld [vmem:[#allocation3 + $0x588] sm:$0xff]
    %v313 = vld [vmem:[#allocation3 + $0x590] sm:$0xff]
    %v314 = vld [vmem:[#allocation3 + $0x598] sm:$0xff]
    %v315 = vld [vmem:[#allocation3 + $0x5a0] sm:$0xff]
    %v316 = vld [vmem:[#allocation3 + $0x5a8] sm:$0xff]
    %v317 = vld [vmem:[#allocation3 + $0x5b0] sm:$0xff]
    %v318 = vld [vmem:[#allocation3 + $0x5b8] sm:$0xff]
    %v319 = vld [vmem:[#allocation3 + $0x5c0] sm:$0xff]
    %v320 = vld [vmem:[#allocation3 + $0x5c8] sm:$0xff]
    %v321 = vld [vmem:[#allocation3 + $0x5d0] sm:$0xff]
    %v322 = vld [vmem:[#allocation3 + $0x5d8] sm:$0xff]
    %v323 = vld [vmem:[#allocation3 + $0x5e0] sm:$0xff]
    %v324 = vld [vmem:[#allocation3 + $0x5e8] sm:$0xff]
    %v325 = vld [vmem:[#allocation3 + $0x5f0] sm:$0xff]
    %v326 = vld [vmem:[#allocation3 + $0x5f8] sm:$0xff]
    %v327 = vld [vmem:[#allocation3 + $0x600] sm:$0xff]
    %v328 = vld [vmem:[#allocation3 + $0x608] sm:$0xff]
    %v329 = vld [vmem:[#allocation3 + $0x610] sm:$0xff]
    %v330 = vld [vmem:[#allocation3 + $0x618] sm:$0xff]
    %v331 = vld [vmem:[#allocation3 + $0x620] sm:$0xff]
    %v332 = vld [vmem:[#allocation3 + $0x628] sm:$0xff]
    %v333 = vld [vmem:[#allocation3 + $0x630] sm:$0xff]
    %v334 = vld [vmem:[#allocation3 + $0x638] sm:$0xff]
    %v335 = vld [vmem:[#allocation3 + $0x640] sm:$0xff]
    %v336 = vld [vmem:[#allocation3 + $0x648] sm:$0xff]
    %v337 = vld [vmem:[#allocation3 + $0x650] sm:$0xff]
    %v338 = vld [vmem:[#allocation3 + $0x658] sm:$0xff]
    %v339 = vld [vmem:[#allocation3 + $0x660] sm:$0xff]
    %v340 = vld [vmem:[#allocation3 + $0x668] sm:$0xff]
    %v341 = vld [vmem:[#allocation3 + $0x670] sm:$0xff]
    %v342 = vld [vmem:[#allocation3 + $0x678] sm:$0xff]
    %v343 = vld [vmem:[#allocation3 + $0x680] sm:$0xff]
    %v344 = vld [vmem:[#allocation3 + $0x688] sm:$0xff]
    %v345 = vld [vmem:[#allocation3 + $0x690] sm:$0xff]
    %v346 = vld [vmem:[#allocation3 + $0x698] sm:$0xff]
    %v347 = vld [vmem:[#allocation3 + $0x6a0] sm:$0xff]
    %v348 = vld [vmem:[#allocation3 + $0x6a8] sm:$0xff]
    %v349 = vld [vmem:[#allocation3 + $0x6b0] sm:$0xff]
    %v350 = vld [vmem:[#allocation3 + $0x6b8] sm:$0xff]
    %v351 = vld [vmem:[#allocation3 + $0x6c0] sm:$0xff]
    %v352 = vld [vmem:[#allocation3 + $0x6c8] sm:$0xff]
    %v353 = vld [vmem:[#allocation3 + $0x6d0] sm:$0xff]
    %v354 = vld [vmem:[#allocation3 + $0x6d8] sm:$0xff]
    %v355 = vld [vmem:[#allocation3 + $0x6e0] sm:$0xff]
    %v356 = vld [vmem:[#allocation3 + $0x6e8] sm:$0xff]
    %v357 = vld [vmem:[#allocation3 + $0x6f0] sm:$0xff]
    %v358 = vld [vmem:[#allocation3 + $0x6f8] sm:$0xff]
    %v359 = vld [vmem:[#allocation3 + $0x700] sm:$0xff]
    %v360 = vld [vmem:[#allocation3 + $0x708] sm:$0xff]
    %v361 = vld [vmem:[#allocation3 + $0x710] sm:$0xff]
    %v362 = vld [vmem:[#allocation3 + $0x718] sm:$0xff]
    %v363 = vld [vmem:[#allocation3 + $0x720] sm:$0xff]
    %v364 = vld [vmem:[#allocation3 + $0x728] sm:$0xff]
    %v365 = vld [vmem:[#allocation3 + $0x730] sm:$0xff]
    %v366 = vld [vmem:[#allocation3 + $0x738] sm:$0xff]
    %v367 = vld [vmem:[#allocation3 + $0x740] sm:$0xff]
    %v368 = vld [vmem:[#allocation3 + $0x748] sm:$0xff]
    %v369 = vld [vmem:[#allocation3 + $0x750] sm:$0xff]
    %v370 = vld [vmem:[#allocation3 + $0x758] sm:$0xff]
    %v371 = vld [vmem:[#allocation3 + $0x760] sm:$0xff]
    %v372 = vld [vmem:[#allocation3 + $0x768] sm:$0xff]
    %v373 = vld [vmem:[#allocation3 + $0x770] sm:$0xff]
    %v374 = vld [vmem:[#allocation3 + $0x778] sm:$0xff]
    %v375 = vld [vmem:[#allocation3 + $0x780] sm:$0xff]
    %v376 = vld [vmem:[#allocation3 + $0x788] sm:$0xff]
    %v377 = vld [vmem:[#allocation3 + $0x790] sm:$0xff]
    %v378 = vld [vmem:[#allocation3 + $0x798] sm:$0xff]
    %v379 = vld [vmem:[#allocation3 + $0x7a0] sm:$0xff]
    %v380 = vld [vmem:[#allocation3 + $0x7a8] sm:$0xff]
    %v381 = vld [vmem:[#allocation3 + $0x7b0] sm:$0xff]
    %v382 = vld [vmem:[#allocation3 + $0x7b8] sm:$0xff]
    %v383 = vld [vmem:[#allocation3 + $0x7c0] sm:$0xff]
    %v384 = vld [vmem:[#allocation3 + $0x7c8] sm:$0xff]
    %v385 = vld [vmem:[#allocation3 + $0x7d0] sm:$0xff]
    %v386 = vld [vmem:[#allocation3 + $0x7d8] sm:$0xff]
    %v387 = vld [vmem:[#allocation3 + $0x7e0] sm:$0xff]
    %v388 = vld [vmem:[#allocation3 + $0x7e8] sm:$0xff]
    %v389 = vld [vmem:[#allocation3 + $0x7f0] sm:$0xff]
    %v390 = vld [vmem:[#allocation3 + $0x7f8] sm:$0xff]
    %v647 = vunpack.c.l.b16 %v135
    %v648 = vunpack.c.h.b16 %v135
    %v649 = vunpack.c.l.b16 %v136
    %v650 = vunpack.c.h.b16 %v136
    %v651 = vunpack.c.l.b16 %v137
    %v652 = vunpack.c.h.b16 %v137
    %v653 = vunpack.c.l.b16 %v138
    %v654 = vunpack.c.h.b16 %v138
    %v655 = vunpack.c.l.b16 %v139
    %v656 = vunpack.c.h.b16 %v139
    %v657 = vunpack.c.l.b16 %v140
    %v658 = vunpack.c.h.b16 %v140
    %v659 = vunpack.c.l.b16 %v141
    %v660 = vunpack.c.h.b16 %v141
    %v661 = vunpack.c.l.b16 %v142
    %v662 = vunpack.c.h.b16 %v142
    %v663 = vunpack.c.l.b16 %v143
    %v664 = vunpack.c.h.b16 %v143
    %v665 = vunpack.c.l.b16 %v144
    %v666 = vunpack.c.h.b16 %v144
    %v667 = vunpack.c.l.b16 %v145
    %v668 = vunpack.c.h.b16 %v145
    %v669 = vunpack.c.l.b16 %v146
    %v670 = vunpack.c.h.b16 %v146
    %v671 = vunpack.c.l.b16 %v147
    %v672 = vunpack.c.h.b16 %v147
    %v673 = vunpack.c.l.b16 %v148
    %v674 = vunpack.c.h.b16 %v148
    %v675 = vunpack.c.l.b16 %v149
    %v676 = vunpack.c.h.b16 %v149
    %v677 = vunpack.c.l.b16 %v150
    %v678 = vunpack.c.h.b16 %v150
    %v679 = vunpack.c.l.b16 %v151
    %v680 = vunpack.c.h.b16 %v151
    %v681 = vunpack.c.l.b16 %v152
    %v682 = vunpack.c.h.b16 %v152
    %v683 = vunpack.c.l.b16 %v153
    %v684 = vunpack.c.h.b16 %v153
    %v685 = vunpack.c.l.b16 %v154
    %v686 = vunpack.c.h.b16 %v154
    %v687 = vunpack.c.l.b16 %v155
    %v688 = vunpack.c.h.b16 %v155
    %v689 = vunpack.c.l.b16 %v156
    %v690 = vunpack.c.h.b16 %v156
    %v691 = vunpack.c.l.b16 %v157
    %v692 = vunpack.c.h.b16 %v157
    %v693 = vunpack.c.l.b16 %v158
    %v694 = vunpack.c.h.b16 %v158
    %v695 = vunpack.c.l.b16 %v159
    %v696 = vunpack.c.h.b16 %v159
    %v697 = vunpack.c.l.b16 %v160
    %v698 = vunpack.c.h.b16 %v160
    %v699 = vunpack.c.l.b16 %v161
    %v700 = vunpack.c.h.b16 %v161
    %v701 = vunpack.c.l.b16 %v162
    %v702 = vunpack.c.h.b16 %v162
    %v703 = vunpack.c.l.b16 %v163
    %v704 = vunpack.c.h.b16 %v163
    %v705 = vunpack.c.l.b16 %v164
    %v706 = vunpack.c.h.b16 %v164
    %v707 = vunpack.c.l.b16 %v165
    %v708 = vunpack.c.h.b16 %v165
    %v709 = vunpack.c.l.b16 %v166
    %v710 = vunpack.c.h.b16 %v166
    %v711 = vunpack.c.l.b16 %v167
    %v712 = vunpack.c.h.b16 %v167
    %v713 = vunpack.c.l.b16 %v168
    %v714 = vunpack.c.h.b16 %v168
    %v715 = vunpack.c.l.b16 %v169
    %v716 = vunpack.c.h.b16 %v169
    %v717 = vunpack.c.l.b16 %v170
    %v718 = vunpack.c.h.b16 %v170
    %v719 = vunpack.c.l.b16 %v171
    %v720 = vunpack.c.h.b16 %v171
    %v721 = vunpack.c.l.b16 %v172
    %v722 = vunpack.c.h.b16 %v172
    %v723 = vunpack.c.l.b16 %v173
    %v724 = vunpack.c.h.b16 %v173
    %v725 = vunpack.c.l.b16 %v174
    %v726 = vunpack.c.h.b16 %v174
    %v727 = vunpack.c.l.b16 %v175
    %v728 = vunpack.c.h.b16 %v175
    %v729 = vunpack.c.l.b16 %v176
    %v730 = vunpack.c.h.b16 %v176
    %v731 = vunpack.c.l.b16 %v177
    %v732 = vunpack.c.h.b16 %v177
    %v733 = vunpack.c.l.b16 %v178
    %v734 = vunpack.c.h.b16 %v178
    %v735 = vunpack.c.l.b16 %v179
    %v736 = vunpack.c.h.b16 %v179
    %v737 = vunpack.c.l.b16 %v180
    %v738 = vunpack.c.h.b16 %v180
    %v739 = vunpack.c.l.b16 %v181
    %v740 = vunpack.c.h.b16 %v181
    %v741 = vunpack.c.l.b16 %v182
    %v742 = vunpack.c.h.b16 %v182
    %v743 = vunpack.c.l.b16 %v183
    %v744 = vunpack.c.h.b16 %v183
    %v745 = vunpack.c.l.b16 %v184
    %v746 = vunpack.c.h.b16 %v184
    %v747 = vunpack.c.l.b16 %v185
    %v748 = vunpack.c.h.b16 %v185
    %v749 = vunpack.c.l.b16 %v186
    %v750 = vunpack.c.h.b16 %v186
    %v751 = vunpack.c.l.b16 %v187
    %v752 = vunpack.c.h.b16 %v187
    %v753 = vunpack.c.l.b16 %v188
    %v754 = vunpack.c.h.b16 %v188
    %v755 = vunpack.c.l.b16 %v189
    %v756 = vunpack.c.h.b16 %v189
    %v757 = vunpack.c.l.b16 %v190
    %v758 = vunpack.c.h.b16 %v190
    %v759 = vunpack.c.l.b16 %v191
    %v760 = vunpack.c.h.b16 %v191
    %v761 = vunpack.c.l.b16 %v192
    %v762 = vunpack.c.h.b16 %v192
    %v763 = vunpack.c.l.b16 %v193
    %v764 = vunpack.c.h.b16 %v193
    %v765 = vunpack.c.l.b16 %v194
    %v766 = vunpack.c.h.b16 %v194
    %v767 = vunpack.c.l.b16 %v195
    %v768 = vunpack.c.h.b16 %v195
    %v769 = vunpack.c.l.b16 %v196
    %v770 = vunpack.c.h.b16 %v196
    %v771 = vunpack.c.l.b16 %v197
    %v772 = vunpack.c.h.b16 %v197
    %v773 = vunpack.c.l.b16 %v198
    %v774 = vunpack.c.h.b16 %v198
    %v775 = vunpack.c.l.b16 %v199
    %v776 = vunpack.c.h.b16 %v199
    %v777 = vunpack.c.l.b16 %v200
    %v778 = vunpack.c.h.b16 %v200
    %v779 = vunpack.c.l.b16 %v201
    %v780 = vunpack.c.h.b16 %v201
    %v781 = vunpack.c.l.b16 %v202
    %v782 = vunpack.c.h.b16 %v202
    %v783 = vunpack.c.l.b16 %v203
    %v784 = vunpack.c.h.b16 %v203
    %v785 = vunpack.c.l.b16 %v204
    %v786 = vunpack.c.h.b16 %v204
    %v787 = vunpack.c.l.b16 %v205
    %v788 = vunpack.c.h.b16 %v205
    %v789 = vunpack.c.l.b16 %v206
    %v790 = vunpack.c.h.b16 %v206
    %v791 = vunpack.c.l.b16 %v207
    %v792 = vunpack.c.h.b16 %v207
    %v793 = vunpack.c.l.b16 %v208
    %v794 = vunpack.c.h.b16 %v208
    %v795 = vunpack.c.l.b16 %v209
    %v796 = vunpack.c.h.b16 %v209
    %v797 = vunpack.c.l.b16 %v210
    %v798 = vunpack.c.h.b16 %v210
    %v799 = vunpack.c.l.b16 %v211
    %v800 = vunpack.c.h.b16 %v211
    %v801 = vunpack.c.l.b16 %v212
    %v802 = vunpack.c.h.b16 %v212
    %v803 = vunpack.c.l.b16 %v213
    %v804 = vunpack.c.h.b16 %v213
    %v805 = vunpack.c.l.b16 %v214
    %v806 = vunpack.c.h.b16 %v214
    %v807 = vunpack.c.l.b16 %v215
    %v808 = vunpack.c.h.b16 %v215
    %v809 = vunpack.c.l.b16 %v216
    %v810 = vunpack.c.h.b16 %v216
    %v811 = vunpack.c.l.b16 %v217
    %v812 = vunpack.c.h.b16 %v217
    %v813 = vunpack.c.l.b16 %v218
    %v814 = vunpack.c.h.b16 %v218
    %v815 = vunpack.c.l.b16 %v219
    %v816 = vunpack.c.h.b16 %v219
    %v817 = vunpack.c.l.b16 %v220
    %v818 = vunpack.c.h.b16 %v220
    %v819 = vunpack.c.l.b16 %v221
    %v820 = vunpack.c.h.b16 %v221
    %v821 = vunpack.c.l.b16 %v222
    %v822 = vunpack.c.h.b16 %v222
    %v823 = vunpack.c.l.b16 %v223
    %v824 = vunpack.c.h.b16 %v223
    %v825 = vunpack.c.l.b16 %v224
    %v826 = vunpack.c.h.b16 %v224
    %v827 = vunpack.c.l.b16 %v225
    %v828 = vunpack.c.h.b16 %v225
    %v829 = vunpack.c.l.b16 %v226
    %v830 = vunpack.c.h.b16 %v226
    %v831 = vunpack.c.l.b16 %v227
    %v832 = vunpack.c.h.b16 %v227
    %v833 = vunpack.c.l.b16 %v228
    %v834 = vunpack.c.h.b16 %v228
    %v835 = vunpack.c.l.b16 %v229
    %v836 = vunpack.c.h.b16 %v229
    %v837 = vunpack.c.l.b16 %v230
    %v838 = vunpack.c.h.b16 %v230
    %v839 = vunpack.c.l.b16 %v231
    %v840 = vunpack.c.h.b16 %v231
    %v841 = vunpack.c.l.b16 %v232
    %v842 = vunpack.c.h.b16 %v232
    %v843 = vunpack.c.l.b16 %v233
    %v844 = vunpack.c.h.b16 %v233
    %v845 = vunpack.c.l.b16 %v234
    %v846 = vunpack.c.h.b16 %v234
    %v847 = vunpack.c.l.b16 %v235
    %v848 = vunpack.c.h.b16 %v235
    %v849 = vunpack.c.l.b16 %v236
    %v850 = vunpack.c.h.b16 %v236
    %v851 = vunpack.c.l.b16 %v237
    %v852 = vunpack.c.h.b16 %v237
    %v853 = vunpack.c.l.b16 %v238
    %v854 = vunpack.c.h.b16 %v238
    %v855 = vunpack.c.l.b16 %v239
    %v856 = vunpack.c.h.b16 %v239
    %v857 = vunpack.c.l.b16 %v240
    %v858 = vunpack.c.h.b16 %v240
    %v859 = vunpack.c.l.b16 %v241
    %v860 = vunpack.c.h.b16 %v241
    %v861 = vunpack.c.l.b16 %v242
    %v862 = vunpack.c.h.b16 %v242
    %v863 = vunpack.c.l.b16 %v243
    %v864 = vunpack.c.h.b16 %v243
    %v865 = vunpack.c.l.b16 %v244
    %v866 = vunpack.c.h.b16 %v244
    %v867 = vunpack.c.l.b16 %v245
    %v868 = vunpack.c.h.b16 %v245
    %v869 = vunpack.c.l.b16 %v246
    %v870 = vunpack.c.h.b16 %v246
    %v871 = vunpack.c.l.b16 %v247
    %v872 = vunpack.c.h.b16 %v247
    %v873 = vunpack.c.l.b16 %v248
    %v874 = vunpack.c.h.b16 %v248
    %v875 = vunpack.c.l.b16 %v249
    %v876 = vunpack.c.h.b16 %v249
    %v877 = vunpack.c.l.b16 %v250
    %v878 = vunpack.c.h.b16 %v250
    %v879 = vunpack.c.l.b16 %v251
    %v880 = vunpack.c.h.b16 %v251
    %v881 = vunpack.c.l.b16 %v252
    %v882 = vunpack.c.h.b16 %v252
    %v883 = vunpack.c.l.b16 %v253
    %v884 = vunpack.c.h.b16 %v253
    %v885 = vunpack.c.l.b16 %v254
    %v886 = vunpack.c.h.b16 %v254
    %v887 = vunpack.c.l.b16 %v255
    %v888 = vunpack.c.h.b16 %v255
    %v889 = vunpack.c.l.b16 %v256
    %v890 = vunpack.c.h.b16 %v256
    %v891 = vunpack.c.l.b16 %v257
    %v892 = vunpack.c.h.b16 %v257
    %v893 = vunpack.c.l.b16 %v258
    %v894 = vunpack.c.h.b16 %v258
    %v895 = vunpack.c.l.b16 %v259
    %v896 = vunpack.c.h.b16 %v259
    %v897 = vunpack.c.l.b16 %v260
    %v898 = vunpack.c.h.b16 %v260
    %v899 = vunpack.c.l.b16 %v261
    %v900 = vunpack.c.h.b16 %v261
    %v901 = vunpack.c.l.b16 %v262
    %v902 = vunpack.c.h.b16 %v262
    %v903 = vunpack.c.l.b16 %v263
    %v904 = vunpack.c.h.b16 %v263
    %v905 = vunpack.c.l.b16 %v264
    %v906 = vunpack.c.h.b16 %v264
    %v907 = vunpack.c.l.b16 %v265
    %v908 = vunpack.c.h.b16 %v265
    %v909 = vunpack.c.l.b16 %v266
    %v910 = vunpack.c.h.b16 %v266
    %v911 = vunpack.c.l.b16 %v267
    %v912 = vunpack.c.h.b16 %v267
    %v913 = vunpack.c.l.b16 %v268
    %v914 = vunpack.c.h.b16 %v268
    %v915 = vunpack.c.l.b16 %v269
    %v916 = vunpack.c.h.b16 %v269
    %v917 = vunpack.c.l.b16 %v270
    %v918 = vunpack.c.h.b16 %v270
    %v919 = vunpack.c.l.b16 %v271
    %v920 = vunpack.c.h.b16 %v271
    %v921 = vunpack.c.l.b16 %v272
    %v922 = vunpack.c.h.b16 %v272
    %v923 = vunpack.c.l.b16 %v273
    %v924 = vunpack.c.h.b16 %v273
    %v925 = vunpack.c.l.b16 %v274
    %v926 = vunpack.c.h.b16 %v274
    %v927 = vunpack.c.l.b16 %v275
    %v928 = vunpack.c.h.b16 %v275
    %v929 = vunpack.c.l.b16 %v276
    %v930 = vunpack.c.h.b16 %v276
    %v931 = vunpack.c.l.b16 %v277
    %v932 = vunpack.c.h.b16 %v277
    %v933 = vunpack.c.l.b16 %v278
    %v934 = vunpack.c.h.b16 %v278
    %v935 = vunpack.c.l.b16 %v279
    %v936 = vunpack.c.h.b16 %v279
    %v937 = vunpack.c.l.b16 %v280
    %v938 = vunpack.c.h.b16 %v280
    %v939 = vunpack.c.l.b16 %v281
    %v940 = vunpack.c.h.b16 %v281
    %v941 = vunpack.c.l.b16 %v282
    %v942 = vunpack.c.h.b16 %v282
    %v943 = vunpack.c.l.b16 %v283
    %v944 = vunpack.c.h.b16 %v283
    %v945 = vunpack.c.l.b16 %v284
    %v946 = vunpack.c.h.b16 %v284
    %v947 = vunpack.c.l.b16 %v285
    %v948 = vunpack.c.h.b16 %v285
    %v949 = vunpack.c.l.b16 %v286
    %v950 = vunpack.c.h.b16 %v286
    %v951 = vunpack.c.l.b16 %v287
    %v952 = vunpack.c.h.b16 %v287
    %v953 = vunpack.c.l.b16 %v288
    %v954 = vunpack.c.h.b16 %v288
    %v955 = vunpack.c.l.b16 %v289
    %v956 = vunpack.c.h.b16 %v289
    %v957 = vunpack.c.l.b16 %v290
    %v958 = vunpack.c.h.b16 %v290
    %v959 = vunpack.c.l.b16 %v291
    %v960 = vunpack.c.h.b16 %v291
    %v961 = vunpack.c.l.b16 %v292
    %v962 = vunpack.c.h.b16 %v292
    %v963 = vunpack.c.l.b16 %v293
    %v964 = vunpack.c.h.b16 %v293
    %v965 = vunpack.c.l.b16 %v294
    %v966 = vunpack.c.h.b16 %v294
    %v967 = vunpack.c.l.b16 %v295
    %v968 = vunpack.c.h.b16 %v295
    %v969 = vunpack.c.l.b16 %v296
    %v970 = vunpack.c.h.b16 %v296
    %v971 = vunpack.c.l.b16 %v297
    %v972 = vunpack.c.h.b16 %v297
    %v973 = vunpack.c.l.b16 %v298
    %v974 = vunpack.c.h.b16 %v298
    %v975 = vunpack.c.l.b16 %v299
    %v976 = vunpack.c.h.b16 %v299
    %v977 = vunpack.c.l.b16 %v300
    %v978 = vunpack.c.h.b16 %v300
    %v979 = vunpack.c.l.b16 %v301
    %v980 = vunpack.c.h.b16 %v301
    %v981 = vunpack.c.l.b16 %v302
    %v982 = vunpack.c.h.b16 %v302
    %v983 = vunpack.c.l.b16 %v303
    %v984 = vunpack.c.h.b16 %v303
    %v985 = vunpack.c.l.b16 %v304
    %v986 = vunpack.c.h.b16 %v304
    %v987 = vunpack.c.l.b16 %v305
    %v988 = vunpack.c.h.b16 %v305
    %v989 = vunpack.c.l.b16 %v306
    %v990 = vunpack.c.h.b16 %v306
    %v991 = vunpack.c.l.b16 %v307
    %v992 = vunpack.c.h.b16 %v307
    %v993 = vunpack.c.l.b16 %v308
    %v994 = vunpack.c.h.b16 %v308
    %v995 = vunpack.c.l.b16 %v309
    %v996 = vunpack.c.h.b16 %v309
    %v997 = vunpack.c.l.b16 %v310
    %v998 = vunpack.c.h.b16 %v310
    %v999 = vunpack.c.l.b16 %v311
    %v1000 = vunpack.c.h.b16 %v311
    %v1001 = vunpack.c.l.b16 %v312
    %v1002 = vunpack.c.h.b16 %v312
    %v1003 = vunpack.c.l.b16 %v313
    %v1004 = vunpack.c.h.b16 %v313
    %v1005 = vunpack.c.l.b16 %v314
    %v1006 = vunpack.c.h.b16 %v314
    %v1007 = vunpack.c.l.b16 %v315
    %v1008 = vunpack.c.h.b16 %v315
    %v1009 = vunpack.c.l.b16 %v316
    %v1010 = vunpack.c.h.b16 %v316
    %v1011 = vunpack.c.l.b16 %v317
    %v1012 = vunpack.c.h.b16 %v317
    %v1013 = vunpack.c.l.b16 %v318
    %v1014 = vunpack.c.h.b16 %v318
    %v1015 = vunpack.c.l.b16 %v319
    %v1016 = vunpack.c.h.b16 %v319
    %v1017 = vunpack.c.l.b16 %v320
    %v1018 = vunpack.c.h.b16 %v320
    %v1019 = vunpack.c.l.b16 %v321
    %v1020 = vunpack.c.h.b16 %v321
    %v1021 = vunpack.c.l.b16 %v322
    %v1022 = vunpack.c.h.b16 %v322
    %v1023 = vunpack.c.l.b16 %v323
    %v1024 = vunpack.c.h.b16 %v323
    %v1025 = vunpack.c.l.b16 %v324
    %v1026 = vunpack.c.h.b16 %v324
    %v1027 = vunpack.c.l.b16 %v325
    %v1028 = vunpack.c.h.b16 %v325
    %v1029 = vunpack.c.l.b16 %v326
    %v1030 = vunpack.c.h.b16 %v326
    %v1031 = vunpack.c.l.b16 %v327
    %v1032 = vunpack.c.h.b16 %v327
    %v1033 = vunpack.c.l.b16 %v328
    %v1034 = vunpack.c.h.b16 %v328
    %v1035 = vunpack.c.l.b16 %v329
    %v1036 = vunpack.c.h.b16 %v329
    %v1037 = vunpack.c.l.b16 %v330
    %v1038 = vunpack.c.h.b16 %v330
    %v1039 = vunpack.c.l.b16 %v331
    %v1040 = vunpack.c.h.b16 %v331
    %v1041 = vunpack.c.l.b16 %v332
    %v1042 = vunpack.c.h.b16 %v332
    %v1043 = vunpack.c.l.b16 %v333
    %v1044 = vunpack.c.h.b16 %v333
    %v1045 = vunpack.c.l.b16 %v334
    %v1046 = vunpack.c.h.b16 %v334
    %v1047 = vunpack.c.l.b16 %v335
    %v1048 = vunpack.c.h.b16 %v335
    %v1049 = vunpack.c.l.b16 %v336
    %v1050 = vunpack.c.h.b16 %v336
    %v1051 = vunpack.c.l.b16 %v337
    %v1052 = vunpack.c.h.b16 %v337
    %v1053 = vunpack.c.l.b16 %v338
    %v1054 = vunpack.c.h.b16 %v338
    %v1055 = vunpack.c.l.b16 %v339
    %v1056 = vunpack.c.h.b16 %v339
    %v1057 = vunpack.c.l.b16 %v340
    %v1058 = vunpack.c.h.b16 %v340
    %v1059 = vunpack.c.l.b16 %v341
    %v1060 = vunpack.c.h.b16 %v341
    %v1061 = vunpack.c.l.b16 %v342
    %v1062 = vunpack.c.h.b16 %v342
    %v1063 = vunpack.c.l.b16 %v343
    %v1064 = vunpack.c.h.b16 %v343
    %v1065 = vunpack.c.l.b16 %v344
    %v1066 = vunpack.c.h.b16 %v344
    %v1067 = vunpack.c.l.b16 %v345
    %v1068 = vunpack.c.h.b16 %v345
    %v1069 = vunpack.c.l.b16 %v346
    %v1070 = vunpack.c.h.b16 %v346
    %v1071 = vunpack.c.l.b16 %v347
    %v1072 = vunpack.c.h.b16 %v347
    %v1073 = vunpack.c.l.b16 %v348
    %v1074 = vunpack.c.h.b16 %v348
    %v1075 = vunpack.c.l.b16 %v349
    %v1076 = vunpack.c.h.b16 %v349
    %v1077 = vunpack.c.l.b16 %v350
    %v1078 = vunpack.c.h.b16 %v350
    %v1079 = vunpack.c.l.b16 %v351
    %v1080 = vunpack.c.h.b16 %v351
    %v1081 = vunpack.c.l.b16 %v352
    %v1082 = vunpack.c.h.b16 %v352
    %v1083 = vunpack.c.l.b16 %v353
    %v1084 = vunpack.c.h.b16 %v353
    %v1085 = vunpack.c.l.b16 %v354
    %v1086 = vunpack.c.h.b16 %v354
    %v1087 = vunpack.c.l.b16 %v355
    %v1088 = vunpack.c.h.b16 %v355
    %v1089 = vunpack.c.l.b16 %v356
    %v1090 = vunpack.c.h.b16 %v356
    %v1091 = vunpack.c.l.b16 %v357
    %v1092 = vunpack.c.h.b16 %v357
    %v1093 = vunpack.c.l.b16 %v358
    %v1094 = vunpack.c.h.b16 %v358
    %v1095 = vunpack.c.l.b16 %v359
    %v1096 = vunpack.c.h.b16 %v359
    %v1097 = vunpack.c.l.b16 %v360
    %v1098 = vunpack.c.h.b16 %v360
    %v1099 = vunpack.c.l.b16 %v361
    %v1100 = vunpack.c.h.b16 %v361
    %v1101 = vunpack.c.l.b16 %v362
    %v1102 = vunpack.c.h.b16 %v362
    %v1103 = vunpack.c.l.b16 %v363
    %v1104 = vunpack.c.h.b16 %v363
    %v1105 = vunpack.c.l.b16 %v364
    %v1106 = vunpack.c.h.b16 %v364
    %v1107 = vunpack.c.l.b16 %v365
    %v1108 = vunpack.c.h.b16 %v365
    %v1109 = vunpack.c.l.b16 %v366
    %v1110 = vunpack.c.h.b16 %v366
    %v1111 = vunpack.c.l.b16 %v367
    %v1112 = vunpack.c.h.b16 %v367
    %v1113 = vunpack.c.l.b16 %v368
    %v1114 = vunpack.c.h.b16 %v368
    %v1115 = vunpack.c.l.b16 %v369
    %v1116 = vunpack.c.h.b16 %v369
    %v1117 = vunpack.c.l.b16 %v370
    %v1118 = vunpack.c.h.b16 %v370
    %v1119 = vunpack.c.l.b16 %v371
    %v1120 = vunpack.c.h.b16 %v371
    %v1121 = vunpack.c.l.b16 %v372
    %v1122 = vunpack.c.h.b16 %v372
    %v1123 = vunpack.c.l.b16 %v373
    %v1124 = vunpack.c.h.b16 %v373
    %v1125 = vunpack.c.l.b16 %v374
    %v1126 = vunpack.c.h.b16 %v374
    %v1127 = vunpack.c.l.b16 %v375
    %v1128 = vunpack.c.h.b16 %v375
    %v1129 = vunpack.c.l.b16 %v376
    %v1130 = vunpack.c.h.b16 %v376
    %v1131 = vunpack.c.l.b16 %v377
    %v1132 = vunpack.c.h.b16 %v377
    %v1133 = vunpack.c.l.b16 %v378
    %v1134 = vunpack.c.h.b16 %v378
    %v1135 = vunpack.c.l.b16 %v379
    %v1136 = vunpack.c.h.b16 %v379
    %v1137 = vunpack.c.l.b16 %v380
    %v1138 = vunpack.c.h.b16 %v380
    %v1139 = vunpack.c.l.b16 %v381
    %v1140 = vunpack.c.h.b16 %v381
    %v1141 = vunpack.c.l.b16 %v382
    %v1142 = vunpack.c.h.b16 %v382
    %v1143 = vunpack.c.l.b16 %v383
    %v1144 = vunpack.c.h.b16 %v383
    %v1145 = vunpack.c.l.b16 %v384
    %v1146 = vunpack.c.h.b16 %v384
    %v1147 = vunpack.c.l.b16 %v385
    %v1148 = vunpack.c.h.b16 %v385
    %v1149 = vunpack.c.l.b16 %v386
    %v1150 = vunpack.c.h.b16 %v386
    %v1151 = vunpack.c.l.b16 %v387
    %v1152 = vunpack.c.h.b16 %v387
    %v1153 = vunpack.c.l.b16 %v388
    %v1154 = vunpack.c.h.b16 %v388
    %v1155 = vunpack.c.l.b16 %v389
    %v1156 = vunpack.c.h.b16 %v389
    %v1157 = vunpack.c.l.b16 %v390
    %v1158 = vunpack.c.h.b16 %v390
    %v1159 = vpack.c.b16 %v651, %v647
    %v1160 = vpack.c.b16 %v652, %v648
    %v1161 = vpack.c.b16 %v653, %v649
    %v1162 = vpack.c.b16 %v654, %v650
    %v1163 = vpack.c.b16 %v659, %v655
    %v1164 = vpack.c.b16 %v660, %v656
    %v1165 = vpack.c.b16 %v661, %v657
    %v1166 = vpack.c.b16 %v662, %v658
    %v1167 = vpack.c.b16 %v667, %v663
    %v1168 = vpack.c.b16 %v668, %v664
    %v1169 = vpack.c.b16 %v669, %v665
    %v1170 = vpack.c.b16 %v670, %v666
    %v1171 = vpack.c.b16 %v675, %v671
    %v1172 = vpack.c.b16 %v676, %v672
    %v1173 = vpack.c.b16 %v677, %v673
    %v1174 = vpack.c.b16 %v678, %v674
    %v1175 = vpack.c.b16 %v683, %v679
    %v1176 = vpack.c.b16 %v684, %v680
    %v1177 = vpack.c.b16 %v685, %v681
    %v1178 = vpack.c.b16 %v686, %v682
    %v1179 = vpack.c.b16 %v691, %v687
    %v1180 = vpack.c.b16 %v692, %v688
    %v1181 = vpack.c.b16 %v693, %v689
    %v1182 = vpack.c.b16 %v694, %v690
    %v1183 = vpack.c.b16 %v699, %v695
    %v1184 = vpack.c.b16 %v700, %v696
    %v1185 = vpack.c.b16 %v701, %v697
    %v1186 = vpack.c.b16 %v702, %v698
    %v1187 = vpack.c.b16 %v707, %v703
    %v1188 = vpack.c.b16 %v708, %v704
    %v1189 = vpack.c.b16 %v709, %v705
    %v1190 = vpack.c.b16 %v710, %v706
    %v1191 = vpack.c.b16 %v715, %v711
    %v1192 = vpack.c.b16 %v716, %v712
    %v1193 = vpack.c.b16 %v717, %v713
    %v1194 = vpack.c.b16 %v718, %v714
    %v1195 = vpack.c.b16 %v723, %v719
    %v1196 = vpack.c.b16 %v724, %v720
    %v1197 = vpack.c.b16 %v725, %v721
    %v1198 = vpack.c.b16 %v726, %v722
    %v1199 = vpack.c.b16 %v731, %v727
    %v1200 = vpack.c.b16 %v732, %v728
    %v1201 = vpack.c.b16 %v733, %v729
    %v1202 = vpack.c.b16 %v734, %v730
    %v1203 = vpack.c.b16 %v739, %v735
    %v1204 = vpack.c.b16 %v740, %v736
    %v1205 = vpack.c.b16 %v741, %v737
    %v1206 = vpack.c.b16 %v742, %v738
    %v1207 = vpack.c.b16 %v747, %v743
    %v1208 = vpack.c.b16 %v748, %v744
    %v1209 = vpack.c.b16 %v749, %v745
    %v1210 = vpack.c.b16 %v750, %v746
    %v1211 = vpack.c.b16 %v755, %v751
    %v1212 = vpack.c.b16 %v756, %v752
    %v1213 = vpack.c.b16 %v757, %v753
    %v1214 = vpack.c.b16 %v758, %v754
    %v1215 = vpack.c.b16 %v763, %v759
    %v1216 = vpack.c.b16 %v764, %v760
    %v1217 = vpack.c.b16 %v765, %v761
    %v1218 = vpack.c.b16 %v766, %v762
    %v1219 = vpack.c.b16 %v771, %v767
    %v1220 = vpack.c.b16 %v772, %v768
    %v1221 = vpack.c.b16 %v773, %v769
    %v1222 = vpack.c.b16 %v774, %v770
    %v1223 = vpack.c.b16 %v779, %v775
    %v1224 = vpack.c.b16 %v780, %v776
    %v1225 = vpack.c.b16 %v781, %v777
    %v1226 = vpack.c.b16 %v782, %v778
    %v1227 = vpack.c.b16 %v787, %v783
    %v1228 = vpack.c.b16 %v788, %v784
    %v1229 = vpack.c.b16 %v789, %v785
    %v1230 = vpack.c.b16 %v790, %v786
    %v1231 = vpack.c.b16 %v795, %v791
    %v1232 = vpack.c.b16 %v796, %v792
    %v1233 = vpack.c.b16 %v797, %v793
    %v1234 = vpack.c.b16 %v798, %v794
    %v1235 = vpack.c.b16 %v803, %v799
    %v1236 = vpack.c.b16 %v804, %v800
    %v1237 = vpack.c.b16 %v805, %v801
    %v1238 = vpack.c.b16 %v806, %v802
    %v1239 = vpack.c.b16 %v811, %v807
    %v1240 = vpack.c.b16 %v812, %v808
    %v1241 = vpack.c.b16 %v813, %v809
    %v1242 = vpack.c.b16 %v814, %v810
    %v1243 = vpack.c.b16 %v819, %v815
    %v1244 = vpack.c.b16 %v820, %v816
    %v1245 = vpack.c.b16 %v821, %v817
    %v1246 = vpack.c.b16 %v822, %v818
    %v1247 = vpack.c.b16 %v827, %v823
    %v1248 = vpack.c.b16 %v828, %v824
    %v1249 = vpack.c.b16 %v829, %v825
    %v1250 = vpack.c.b16 %v830, %v826
    %v1251 = vpack.c.b16 %v835, %v831
    %v1252 = vpack.c.b16 %v836, %v832
    %v1253 = vpack.c.b16 %v837, %v833
    %v1254 = vpack.c.b16 %v838, %v834
    %v1255 = vpack.c.b16 %v843, %v839
    %v1256 = vpack.c.b16 %v844, %v840
    %v1257 = vpack.c.b16 %v845, %v841
    %v1258 = vpack.c.b16 %v846, %v842
    %v1259 = vpack.c.b16 %v851, %v847
    %v1260 = vpack.c.b16 %v852, %v848
    %v1261 = vpack.c.b16 %v853, %v849
    %v1262 = vpack.c.b16 %v854, %v850
    %v1263 = vpack.c.b16 %v859, %v855
    %v1264 = vpack.c.b16 %v860, %v856
    %v1265 = vpack.c.b16 %v861, %v857
    %v1266 = vpack.c.b16 %v862, %v858
    %v1267 = vpack.c.b16 %v867, %v863
    %v1268 = vpack.c.b16 %v868, %v864
    %v1269 = vpack.c.b16 %v869, %v865
    %v1270 = vpack.c.b16 %v870, %v866
    %v1271 = vpack.c.b16 %v875, %v871
    %v1272 = vpack.c.b16 %v876, %v872
    %v1273 = vpack.c.b16 %v877, %v873
    %v1274 = vpack.c.b16 %v878, %v874
    %v1275 = vpack.c.b16 %v883, %v879
    %v1276 = vpack.c.b16 %v884, %v880
    %v1277 = vpack.c.b16 %v885, %v881
    %v1278 = vpack.c.b16 %v886, %v882
    %v1279 = vpack.c.b16 %v891, %v887
    %v1280 = vpack.c.b16 %v892, %v888
    %v1281 = vpack.c.b16 %v893, %v889
    %v1282 = vpack.c.b16 %v894, %v890
    %v1283 = vpack.c.b16 %v899, %v895
    %v1284 = vpack.c.b16 %v900, %v896
    %v1285 = vpack.c.b16 %v901, %v897
    %v1286 = vpack.c.b16 %v902, %v898
    %v1287 = vpack.c.b16 %v907, %v903
    %v1288 = vpack.c.b16 %v908, %v904
    %v1289 = vpack.c.b16 %v909, %v905
    %v1290 = vpack.c.b16 %v910, %v906
    %v1291 = vpack.c.b16 %v915, %v911
    %v1292 = vpack.c.b16 %v916, %v912
    %v1293 = vpack.c.b16 %v917, %v913
    %v1294 = vpack.c.b16 %v918, %v914
    %v1295 = vpack.c.b16 %v923, %v919
    %v1296 = vpack.c.b16 %v924, %v920
    %v1297 = vpack.c.b16 %v925, %v921
    %v1298 = vpack.c.b16 %v926, %v922
    %v1299 = vpack.c.b16 %v931, %v927
    %v1300 = vpack.c.b16 %v932, %v928
    %v1301 = vpack.c.b16 %v933, %v929
    %v1302 = vpack.c.b16 %v934, %v930
    %v1303 = vpack.c.b16 %v939, %v935
    %v1304 = vpack.c.b16 %v940, %v936
    %v1305 = vpack.c.b16 %v941, %v937
    %v1306 = vpack.c.b16 %v942, %v938
    %v1307 = vpack.c.b16 %v947, %v943
    %v1308 = vpack.c.b16 %v948, %v944
    %v1309 = vpack.c.b16 %v949, %v945
    %v1310 = vpack.c.b16 %v950, %v946
    %v1311 = vpack.c.b16 %v955, %v951
    %v1312 = vpack.c.b16 %v956, %v952
    %v1313 = vpack.c.b16 %v957, %v953
    %v1314 = vpack.c.b16 %v958, %v954
    %v1315 = vpack.c.b16 %v963, %v959
    %v1316 = vpack.c.b16 %v964, %v960
    %v1317 = vpack.c.b16 %v965, %v961
    %v1318 = vpack.c.b16 %v966, %v962
    %v1319 = vpack.c.b16 %v971, %v967
    %v1320 = vpack.c.b16 %v972, %v968
    %v1321 = vpack.c.b16 %v973, %v969
    %v1322 = vpack.c.b16 %v974, %v970
    %v1323 = vpack.c.b16 %v979, %v975
    %v1324 = vpack.c.b16 %v980, %v976
    %v1325 = vpack.c.b16 %v981, %v977
    %v1326 = vpack.c.b16 %v982, %v978
    %v1327 = vpack.c.b16 %v987, %v983
    %v1328 = vpack.c.b16 %v988, %v984
    %v1329 = vpack.c.b16 %v989, %v985
    %v1330 = vpack.c.b16 %v990, %v986
    %v1331 = vpack.c.b16 %v995, %v991
    %v1332 = vpack.c.b16 %v996, %v992
    %v1333 = vpack.c.b16 %v997, %v993
    %v1334 = vpack.c.b16 %v998, %v994
    %v1335 = vpack.c.b16 %v1003, %v999
    %v1336 = vpack.c.b16 %v1004, %v1000
    %v1337 = vpack.c.b16 %v1005, %v1001
    %v1338 = vpack.c.b16 %v1006, %v1002
    %v1339 = vpack.c.b16 %v1011, %v1007
    %v1340 = vpack.c.b16 %v1012, %v1008
    %v1341 = vpack.c.b16 %v1013, %v1009
    %v1342 = vpack.c.b16 %v1014, %v1010
    %v1343 = vpack.c.b16 %v1019, %v1015
    %v1344 = vpack.c.b16 %v1020, %v1016
    %v1345 = vpack.c.b16 %v1021, %v1017
    %v1346 = vpack.c.b16 %v1022, %v1018
    %v1347 = vpack.c.b16 %v1027, %v1023
    %v1348 = vpack.c.b16 %v1028, %v1024
    %v1349 = vpack.c.b16 %v1029, %v1025
    %v1350 = vpack.c.b16 %v1030, %v1026
    %v1351 = vpack.c.b16 %v1035, %v1031
    %v1352 = vpack.c.b16 %v1036, %v1032
    %v1353 = vpack.c.b16 %v1037, %v1033
    %v1354 = vpack.c.b16 %v1038, %v1034
    %v1355 = vpack.c.b16 %v1043, %v1039
    %v1356 = vpack.c.b16 %v1044, %v1040
    %v1357 = vpack.c.b16 %v1045, %v1041
    %v1358 = vpack.c.b16 %v1046, %v1042
    %v1359 = vpack.c.b16 %v1051, %v1047
    %v1360 = vpack.c.b16 %v1052, %v1048
    %v1361 = vpack.c.b16 %v1053, %v1049
    %v1362 = vpack.c.b16 %v1054, %v1050
    %v1363 = vpack.c.b16 %v1059, %v1055
    %v1364 = vpack.c.b16 %v1060, %v1056
    %v1365 = vpack.c.b16 %v1061, %v1057
    %v1366 = vpack.c.b16 %v1062, %v1058
    %v1367 = vpack.c.b16 %v1067, %v1063
    %v1368 = vpack.c.b16 %v1068, %v1064
    %v1369 = vpack.c.b16 %v1069, %v1065
    %v1370 = vpack.c.b16 %v1070, %v1066
    %v1371 = vpack.c.b16 %v1075, %v1071
    %v1372 = vpack.c.b16 %v1076, %v1072
    %v1373 = vpack.c.b16 %v1077, %v1073
    %v1374 = vpack.c.b16 %v1078, %v1074
    %v1375 = vpack.c.b16 %v1083, %v1079
    %v1376 = vpack.c.b16 %v1084, %v1080
    %v1377 = vpack.c.b16 %v1085, %v1081
    %v1378 = vpack.c.b16 %v1086, %v1082
    %v1379 = vpack.c.b16 %v1091, %v1087
    %v1380 = vpack.c.b16 %v1092, %v1088
    %v1381 = vpack.c.b16 %v1093, %v1089
    %v1382 = vpack.c.b16 %v1094, %v1090
    %v1383 = vpack.c.b16 %v1099, %v1095
    %v1384 = vpack.c.b16 %v1100, %v1096
    %v1385 = vpack.c.b16 %v1101, %v1097
    %v1386 = vpack.c.b16 %v1102, %v1098
    %v1387 = vpack.c.b16 %v1107, %v1103
    %v1388 = vpack.c.b16 %v1108, %v1104
    %v1389 = vpack.c.b16 %v1109, %v1105
    %v1390 = vpack.c.b16 %v1110, %v1106
    %v1391 = vpack.c.b16 %v1115, %v1111
    %v1392 = vpack.c.b16 %v1116, %v1112
    %v1393 = vpack.c.b16 %v1117, %v1113
    %v1394 = vpack.c.b16 %v1118, %v1114
    %v1395 = vpack.c.b16 %v1123, %v1119
    %v1396 = vpack.c.b16 %v1124, %v1120
    %v1397 = vpack.c.b16 %v1125, %v1121
    %v1398 = vpack.c.b16 %v1126, %v1122
    %v1399 = vpack.c.b16 %v1131, %v1127
    %v1400 = vpack.c.b16 %v1132, %v1128
    %v1401 = vpack.c.b16 %v1133, %v1129
    %v1402 = vpack.c.b16 %v1134, %v1130
    %v1403 = vpack.c.b16 %v1139, %v1135
    %v1404 = vpack.c.b16 %v1140, %v1136
    %v1405 = vpack.c.b16 %v1141, %v1137
    %v1406 = vpack.c.b16 %v1142, %v1138
    %v1407 = vpack.c.b16 %v1147, %v1143
    %v1408 = vpack.c.b16 %v1148, %v1144
    %v1409 = vpack.c.b16 %v1149, %v1145
    %v1410 = vpack.c.b16 %v1150, %v1146
    %v1411 = vpack.c.b16 %v1155, %v1151
    %v1412 = vpack.c.b16 %v1156, %v1152
    %v1413 = vpack.c.b16 %v1157, %v1153
    %v1414 = vpack.c.b16 %v1158, %v1154
    %1671 = vmatprep.subr.bf16.mxu0 %v1160
    %1672 = vmatpush1.bf16.msra.mxu0 %v1159
    %1673 = vmatprep.subr.bf16.mxu0 %v1164
    %1674 = vmatpush1.bf16.msra.mxu0 %v1163
    %1675 = vmatprep.subr.bf16.mxu0 %v1168
    %1676 = vmatpush1.bf16.msra.mxu0 %v1167
    %1677 = vmatprep.subr.bf16.mxu0 %v1172
    %1678 = vmatpush1.bf16.msra.mxu0 %v1171
    %1679 = vmatprep.subr.bf16.mxu0 %v1176
    %1680 = vmatpush1.bf16.msra.mxu0 %v1175
    %1681 = vmatprep.subr.bf16.mxu0 %v1180
    %1682 = vmatpush1.bf16.msra.mxu0 %v1179
    %1683 = vmatprep.subr.bf16.mxu0 %v1184
    %1684 = vmatpush1.bf16.msra.mxu0 %v1183
    %1685 = vmatprep.subr.bf16.mxu0 %v1188
    %1686 = vmatpush1.bf16.msra.mxu0 %v1187
    %1687 = vmatprep.subr.bf16.mxu0 %v1192
    %1688 = vmatpush1.bf16.msra.mxu0 %v1191
    %1689 = vmatprep.subr.bf16.mxu0 %v1196
    %1690 = vmatpush1.bf16.msra.mxu0 %v1195
    %1691 = vmatprep.subr.bf16.mxu0 %v1200
    %1692 = vmatpush1.bf16.msra.mxu0 %v1199
    %1693 = vmatprep.subr.bf16.mxu0 %v1204
    %1694 = vmatpush1.bf16.msra.mxu0 %v1203
    %1695 = vmatprep.subr.bf16.mxu0 %v1208
    %1696 = vmatpush1.bf16.msra.mxu0 %v1207
    %1697 = vmatprep.subr.bf16.mxu0 %v1212
    %1698 = vmatpush1.bf16.msra.mxu0 %v1211
    %1699 = vmatprep.subr.bf16.mxu0 %v1216
    %1700 = vmatpush1.bf16.msra.mxu0 %v1215
    %1701 = vmatprep.subr.bf16.mxu0 %v1220
    %1702 = vmatpush1.bf16.msra.mxu0 %v1219
    %1703 = vmatprep.mubr.bf16.mxu0 %v127
    %1704 = vmatmul.mubr.bf16.gmra.mrb[0].mxu0 %v126
    %v1705 = vpop.f32.mrb[0].mxu0
    %v1706 = vadd.f32 0.0, %v1705
    %v1707 = vpop.f32.mrb[0].mxu0
    %v1708 = vadd.f32 0.0, %v1707
    %v1709 = vpop.f32.mrb[0].mxu0
    %v1710 = vpop.f32.mrb[0].mxu0
    %1711 = vdwg.mxu0
    %1712 = vmatprep.subr.bf16.mxu0 %v1224
    %1713 = vmatpush1.bf16.msra.mxu0 %v1223
    %1714 = vmatprep.subr.bf16.mxu0 %v1228
    %1715 = vmatpush1.bf16.msra.mxu0 %v1227
    %1716 = vmatprep.subr.bf16.mxu0 %v1232
    %1717 = vmatpush1.bf16.msra.mxu0 %v1231
    %1718 = vmatprep.subr.bf16.mxu0 %v1236
    %1719 = vmatpush1.bf16.msra.mxu0 %v1235
    %1720 = vmatprep.subr.bf16.mxu0 %v1240
    %1721 = vmatpush1.bf16.msra.mxu0 %v1239
    %1722 = vmatprep.subr.bf16.mxu0 %v1244
    %1723 = vmatpush1.bf16.msra.mxu0 %v1243
    %1724 = vmatprep.subr.bf16.mxu0 %v1248
    %1725 = vmatpush1.bf16.msra.mxu0 %v1247
    %1726 = vmatprep.subr.bf16.mxu0 %v1252
    %1727 = vmatpush1.bf16.msra.mxu0 %v1251
    %1728 = vmatprep.subr.bf16.mxu0 %v1256
    %1729 = vmatpush1.bf16.msra.mxu0 %v1255
    %1730 = vmatprep.subr.bf16.mxu0 %v1260
    %1731 = vmatpush1.bf16.msra.mxu0 %v1259
    %1732 = vmatprep.subr.bf16.mxu0 %v1264
    %1733 = vmatpush1.bf16.msra.mxu0 %v1263
    %1734 = vmatprep.subr.bf16.mxu0 %v1268
    %1735 = vmatpush1.bf16.msra.mxu0 %v1267
    %1736 = vmatprep.subr.bf16.mxu0 %v1272
    %1737 = vmatpush1.bf16.msra.mxu0 %v1271
    %1738 = vmatprep.subr.bf16.mxu0 %v1276
    %1739 = vmatpush1.bf16.msra.mxu0 %v1275
    %1740 = vmatprep.subr.bf16.mxu0 %v1280
    %1741 = vmatpush1.bf16.msra.mxu0 %v1279
    %1742 = vmatprep.subr.bf16.mxu0 %v1284
    %1743 = vmatpush1.bf16.msra.mxu0 %v1283
    %1744 = vmatprep.mubr.bf16.mxu0 %v129
    %1745 = vmatmul.mubr.bf16.gmra.mrb[0].mxu0 %v128
    %v1746 = vpop.f32.mrb[0].mxu0
    %v1747 = vadd.f32 %v1706, %v1746
    %v1748 = vpop.f32.mrb[0].mxu0
    %v1749 = vadd.f32 %v1708, %v1748
    %v1750 = vpop.f32.mrb[0].mxu0
    %v1751 = vpop.f32.mrb[0].mxu0
    %1752 = vdwg.mxu0
    %1753 = vmatprep.subr.bf16.mxu0 %v1288
    %1754 = vmatpush1.bf16.msra.mxu0 %v1287
    %1755 = vmatprep.subr.bf16.mxu0 %v1292
    %1756 = vmatpush1.bf16.msra.mxu0 %v1291
    %1757 = vmatprep.subr.bf16.mxu0 %v1296
    %1758 = vmatpush1.bf16.msra.mxu0 %v1295
    %1759 = vmatprep.subr.bf16.mxu0 %v1300
    %1760 = vmatpush1.bf16.msra.mxu0 %v1299
    %1761 = vmatprep.subr.bf16.mxu0 %v1304
    %1762 = vmatpush1.bf16.msra.mxu0 %v1303
    %1763 = vmatprep.subr.bf16.mxu0 %v1308
    %1764 = vmatpush1.bf16.msra.mxu0 %v1307
    %1765 = vmatprep.subr.bf16.mxu0 %v1312
    %1766 = vmatpush1.bf16.msra.mxu0 %v1311
    %1767 = vmatprep.subr.bf16.mxu0 %v1316
    %1768 = vmatpush1.bf16.msra.mxu0 %v1315
    %1769 = vmatprep.subr.bf16.mxu0 %v1320
    %1770 = vmatpush1.bf16.msra.mxu0 %v1319
    %1771 = vmatprep.subr.bf16.mxu0 %v1324
    %1772 = vmatpush1.bf16.msra.mxu0 %v1323
    %1773 = vmatprep.subr.bf16.mxu0 %v1328
    %1774 = vmatpush1.bf16.msra.mxu0 %v1327
    %1775 = vmatprep.subr.bf16.mxu0 %v1332
    %1776 = vmatpush1.bf16.msra.mxu0 %v1331
    %1777 = vmatprep.subr.bf16.mxu0 %v1336
    %1778 = vmatpush1.bf16.msra.mxu0 %v1335
    %1779 = vmatprep.subr.bf16.mxu0 %v1340
    %1780 = vmatpush1.bf16.msra.mxu0 %v1339
    %1781 = vmatprep.subr.bf16.mxu0 %v1344
    %1782 = vmatpush1.bf16.msra.mxu0 %v1343
    %1783 = vmatprep.subr.bf16.mxu0 %v1348
    %1784 = vmatpush1.bf16.msra.mxu0 %v1347
    %1785 = vmatprep.mubr.bf16.mxu0 %v131
    %1786 = vmatmul.mubr.bf16.gmra.mrb[0].mxu0 %v130
    %v1787 = vpop.f32.mrb[0].mxu0
    %v1788 = vadd.f32 %v1747, %v1787
    %v1789 = vpop.f32.mrb[0].mxu0
    %v1790 = vadd.f32 %v1749, %v1789
    %v1791 = vpop.f32.mrb[0].mxu0
    %v1792 = vpop.f32.mrb[0].mxu0
    %1793 = vdwg.mxu0
    %1794 = vmatprep.subr.bf16.mxu0 %v1352
    %1795 = vmatpush1.bf16.msra.mxu0 %v1351
    %1796 = vmatprep.subr.bf16.mxu0 %v1356
    %1797 = vmatpush1.bf16.msra.mxu0 %v1355
    %1798 = vmatprep.subr.bf16.mxu0 %v1360
    %1799 = vmatpush1.bf16.msra.mxu0 %v1359
    %1800 = vmatprep.subr.bf16.mxu0 %v1364
    %1801 = vmatpush1.bf16.msra.mxu0 %v1363
    %1802 = vmatprep.subr.bf16.mxu0 %v1368
    %1803 = vmatpush1.bf16.msra.mxu0 %v1367
    %1804 = vmatprep.subr.bf16.mxu0 %v1372
    %1805 = vmatpush1.bf16.msra.mxu0 %v1371
    %1806 = vmatprep.subr.bf16.mxu0 %v1376
    %1807 = vmatpush1.bf16.msra.mxu0 %v1375
    %1808 = vmatprep.subr.bf16.mxu0 %v1380
    %1809 = vmatpush1.bf16.msra.mxu0 %v1379
    %1810 = vmatprep.subr.bf16.mxu0 %v1384
    %1811 = vmatpush1.bf16.msra.mxu0 %v1383
    %1812 = vmatprep.subr.bf16.mxu0 %v1388
    %1813 = vmatpush1.bf16.msra.mxu0 %v1387
    %1814 = vmatprep.subr.bf16.mxu0 %v1392
    %1815 = vmatpush1.bf16.msra.mxu0 %v1391
    %1816 = vmatprep.subr.bf16.mxu0 %v1396
    %1817 = vmatpush1.bf16.msra.mxu0 %v1395
    %1818 = vmatprep.subr.bf16.mxu0 %v1400
    %1819 = vmatpush1.bf16.msra.mxu0 %v1399
    %1820 = vmatprep.subr.bf16.mxu0 %v1404
    %1821 = vmatpush1.bf16.msra.mxu0 %v1403
    %1822 = vmatprep.subr.bf16.mxu0 %v1408
    %1823 = vmatpush1.bf16.msra.mxu0 %v1407
    %1824 = vmatprep.subr.bf16.mxu0 %v1412
    %1825 = vmatpush1.bf16.msra.mxu0 %v1411
    %1826 = vmatprep.mubr.bf16.mxu0 %v133
    %1827 = vmatmul.mubr.bf16.gmra.mrb[0].mxu0 %v132
    %v1828 = vpop.f32.mrb[0].mxu0
    %v1829 = vadd.f32 %v1788, %v1828
    %v1830 = vpop.f32.mrb[0].mxu0
    %v1831 = vadd.f32 %v1790, %v1830
    %v1832 = vpop.f32.mrb[0].mxu0
    %v1833 = vpop.f32.mrb[0].mxu0
    %1834 = vdwg.mxu0
    %1835 = vmatprep.subr.bf16.mxu0 %v1162
    %1836 = vmatpush1.bf16.msra.mxu0 %v1161
    %1837 = vmatprep.subr.bf16.mxu0 %v1166
    %1838 = vmatpush1.bf16.msra.mxu0 %v1165
    %1839 = vmatprep.subr.bf16.mxu0 %v1170
    %1840 = vmatpush1.bf16.msra.mxu0 %v1169
    %1841 = vmatprep.subr.bf16.mxu0 %v1174
    %1842 = vmatpush1.bf16.msra.mxu0 %v1173
    %1843 = vmatprep.subr.bf16.mxu0 %v1178
    %1844 = vmatpush1.bf16.msra.mxu0 %v1177
    %1845 = vmatprep.subr.bf16.mxu0 %v1182
    %1846 = vmatpush1.bf16.msra.mxu0 %v1181
    %1847 = vmatprep.subr.bf16.mxu0 %v1186
    %1848 = vmatpush1.bf16.msra.mxu0 %v1185
    %1849 = vmatprep.subr.bf16.mxu0 %v1190
    %1850 = vmatpush1.bf16.msra.mxu0 %v1189
    %1851 = vmatprep.subr.bf16.mxu0 %v1194
    %1852 = vmatpush1.bf16.msra.mxu0 %v1193
    %1853 = vmatprep.subr.bf16.mxu0 %v1198
    %1854 = vmatpush1.bf16.msra.mxu0 %v1197
    %1855 = vmatprep.subr.bf16.mxu0 %v1202
    %1856 = vmatpush1.bf16.msra.mxu0 %v1201
    %1857 = vmatprep.subr.bf16.mxu0 %v1206
    %1858 = vmatpush1.bf16.msra.mxu0 %v1205
    %1859 = vmatprep.subr.bf16.mxu0 %v1210
    %1860 = vmatpush1.bf16.msra.mxu0 %v1209
    %1861 = vmatprep.subr.bf16.mxu0 %v1214
    %1862 = vmatpush1.bf16.msra.mxu0 %v1213
    %1863 = vmatprep.subr.bf16.mxu0 %v1218
    %1864 = vmatpush1.bf16.msra.mxu0 %v1217
    %1865 = vmatprep.subr.bf16.mxu0 %v1222
    %1866 = vmatpush1.bf16.msra.mxu0 %v1221
    %1867 = vmatprep.mubr.bf16.mxu0 %v127
    %1868 = vmatmul.mubr.bf16.gmra.mrb[0].mxu0 %v126
    %v1869 = vpop.f32.mrb[0].mxu0
    %v1870 = vadd.f32 0.0, %v1869
    %v1871 = vpop.f32.mrb[0].mxu0
    %v1872 = vadd.f32 0.0, %v1871
    %v1873 = vpop.f32.mrb[0].mxu0
    %v1874 = vpop.f32.mrb[0].mxu0
    %1875 = vdwg.mxu0
    %1876 = vmatprep.subr.bf16.mxu0 %v1226
    %1877 = vmatpush1.bf16.msra.mxu0 %v1225
    %1878 = vmatprep.subr.bf16.mxu0 %v1230
    %1879 = vmatpush1.bf16.msra.mxu0 %v1229
    %1880 = vmatprep.subr.bf16.mxu0 %v1234
    %1881 = vmatpush1.bf16.msra.mxu0 %v1233
    %1882 = vmatprep.subr.bf16.mxu0 %v1238
    %1883 = vmatpush1.bf16.msra.mxu0 %v1237
    %1884 = vmatprep.subr.bf16.mxu0 %v1242
    %1885 = vmatpush1.bf16.msra.mxu0 %v1241
    %1886 = vmatprep.subr.bf16.mxu0 %v1246
    %1887 = vmatpush1.bf16.msra.mxu0 %v1245
    %1888 = vmatprep.subr.bf16.mxu0 %v1250
    %1889 = vmatpush1.bf16.msra.mxu0 %v1249
    %1890 = vmatprep.subr.bf16.mxu0 %v1254
    %1891 = vmatpush1.bf16.msra.mxu0 %v1253
    %1892 = vmatprep.subr.bf16.mxu0 %v1258
    %1893 = vmatpush1.bf16.msra.mxu0 %v1257
    %1894 = vmatprep.subr.bf16.mxu0 %v1262
    %1895 = vmatpush1.bf16.msra.mxu0 %v1261
    %1896 = vmatprep.subr.bf16.mxu0 %v1266
    %1897 = vmatpush1.bf16.msra.mxu0 %v1265
    %1898 = vmatprep.subr.bf16.mxu0 %v1270
    %1899 = vmatpush1.bf16.msra.mxu0 %v1269
    %1900 = vmatprep.subr.bf16.mxu0 %v1274
    %1901 = vmatpush1.bf16.msra.mxu0 %v1273
    %1902 = vmatprep.subr.bf16.mxu0 %v1278
    %1903 = vmatpush1.bf16.msra.mxu0 %v1277
    %1904 = vmatprep.subr.bf16.mxu0 %v1282
    %1905 = vmatpush1.bf16.msra.mxu0 %v1281
    %1906 = vmatprep.subr.bf16.mxu0 %v1286
    %1907 = vmatpush1.bf16.msra.mxu0 %v1285
    %1908 = vmatprep.mubr.bf16.mxu0 %v129
    %1909 = vmatmul.mubr.bf16.gmra.mrb[0].mxu0 %v128
    %v1910 = vpop.f32.mrb[0].mxu0
    %v1911 = vadd.f32 %v1870, %v1910
    %v1912 = vpop.f32.mrb[0].mxu0
    %v1913 = vadd.f32 %v1872, %v1912
    %v1914 = vpop.f32.mrb[0].mxu0
    %v1915 = vpop.f32.mrb[0].mxu0
    %1916 = vdwg.mxu0
    %1917 = vmatprep.subr.bf16.mxu0 %v1290
    %1918 = vmatpush1.bf16.msra.mxu0 %v1289
    %1919 = vmatprep.subr.bf16.mxu0 %v1294
    %1920 = vmatpush1.bf16.msra.mxu0 %v1293
    %1921 = vmatprep.subr.bf16.mxu0 %v1298
    %1922 = vmatpush1.bf16.msra.mxu0 %v1297
    %1923 = vmatprep.subr.bf16.mxu0 %v1302
    %1924 = vmatpush1.bf16.msra.mxu0 %v1301
    %1925 = vmatprep.subr.bf16.mxu0 %v1306
    %1926 = vmatpush1.bf16.msra.mxu0 %v1305
    %1927 = vmatprep.subr.bf16.mxu0 %v1310
    %1928 = vmatpush1.bf16.msra.mxu0 %v1309
    %1929 = vmatprep.subr.bf16.mxu0 %v1314
    %1930 = vmatpush1.bf16.msra.mxu0 %v1313
    %1931 = vmatprep.subr.bf16.mxu0 %v1318
    %1932 = vmatpush1.bf16.msra.mxu0 %v1317
    %1933 = vmatprep.subr.bf16.mxu0 %v1322
    %1934 = vmatpush1.bf16.msra.mxu0 %v1321
    %1935 = vmatprep.subr.bf16.mxu0 %v1326
    %1936 = vmatpush1.bf16.msra.mxu0 %v1325
    %1937 = vmatprep.subr.bf16.mxu0 %v1330
    %1938 = vmatpush1.bf16.msra.mxu0 %v1329
    %1939 = vmatprep.subr.bf16.mxu0 %v1334
    %1940 = vmatpush1.bf16.msra.mxu0 %v1333
    %1941 = vmatprep.subr.bf16.mxu0 %v1338
    %1942 = vmatpush1.bf16.msra.mxu0 %v1337
    %1943 = vmatprep.subr.bf16.mxu0 %v1342
    %1944 = vmatpush1.bf16.msra.mxu0 %v1341
    %1945 = vmatprep.subr.bf16.mxu0 %v1346
    %1946 = vmatpush1.bf16.msra.mxu0 %v1345
    %1947 = vmatprep.subr.bf16.mxu0 %v1350
    %1948 = vmatpush1.bf16.msra.mxu0 %v1349
    %1949 = vmatprep.mubr.bf16.mxu0 %v131
    %1950 = vmatmul.mubr.bf16.gmra.mrb[0].mxu0 %v130
    %v1951 = vpop.f32.mrb[0].mxu0
    %v1952 = vadd.f32 %v1911, %v1951
    %v1953 = vpop.f32.mrb[0].mxu0
    %v1954 = vadd.f32 %v1913, %v1953
    %v1955 = vpop.f32.mrb[0].mxu0
    %v1956 = vpop.f32.mrb[0].mxu0
    %1957 = vdwg.mxu0
    %1958 = vmatprep.subr.bf16.mxu0 %v1354
    %1959 = vmatpush1.bf16.msra.mxu0 %v1353
    %1960 = vmatprep.subr.bf16.mxu0 %v1358
    %1961 = vmatpush1.bf16.msra.mxu0 %v1357
    %1962 = vmatprep.subr.bf16.mxu0 %v1362
    %1963 = vmatpush1.bf16.msra.mxu0 %v1361
    %1964 = vmatprep.subr.bf16.mxu0 %v1366
    %1965 = vmatpush1.bf16.msra.mxu0 %v1365
    %1966 = vmatprep.subr.bf16.mxu0 %v1370
    %1967 = vmatpush1.bf16.msra.mxu0 %v1369
    %1968 = vmatprep.subr.bf16.mxu0 %v1374
    %1969 = vmatpush1.bf16.msra.mxu0 %v1373
    %1970 = vmatprep.subr.bf16.mxu0 %v1378
    %1971 = vmatpush1.bf16.msra.mxu0 %v1377
    %1972 = vmatprep.subr.bf16.mxu0 %v1382
    %1973 = vmatpush1.bf16.msra.mxu0 %v1381
    %1974 = vmatprep.subr.bf16.mxu0 %v1386
    %1975 = vmatpush1.bf16.msra.mxu0 %v1385
    %1976 = vmatprep.subr.bf16.mxu0 %v1390
    %1977 = vmatpush1.bf16.msra.mxu0 %v1389
    %1978 = vmatprep.subr.bf16.mxu0 %v1394
    %1979 = vmatpush1.bf16.msra.mxu0 %v1393
    %1980 = vmatprep.subr.bf16.mxu0 %v1398
    %1981 = vmatpush1.bf16.msra.mxu0 %v1397
    %1982 = vmatprep.subr.bf16.mxu0 %v1402
    %1983 = vmatpush1.bf16.msra.mxu0 %v1401
    %1984 = vmatprep.subr.bf16.mxu0 %v1406
    %1985 = vmatpush1.bf16.msra.mxu0 %v1405
    %1986 = vmatprep.subr.bf16.mxu0 %v1410
    %1987 = vmatpush1.bf16.msra.mxu0 %v1409
    %1988 = vmatprep.subr.bf16.mxu0 %v1414
    %1989 = vmatpush1.bf16.msra.mxu0 %v1413
    %1990 = vmatprep.mubr.bf16.mxu0 %v133
    %1991 = vmatmul.mubr.bf16.gmra.mrb[0].mxu0 %v132
    %v1992 = vpop.f32.mrb[0].mxu0
    %v1993 = vadd.f32 %v1952, %v1992
    %v1994 = vpop.f32.mrb[0].mxu0
    %v1995 = vadd.f32 %v1954, %v1994
    %v1996 = vpop.f32.mrb[0].mxu0
    %v1997 = vpop.f32.mrb[0].mxu0
    %1998 = vdwg.mxu0
    %v2003 = vcombine.low %v1829, %v1831
    %v2004 = vcombine.low %v1993, %v1995
    %v2006 = vunpack.c.l.s4 1983009808
    %v2007 = vunpack.c.0.s8 %v2006
    %v2008 = vlaneseq
    %v2009 = vshrl.u32 %v2008, 7
    %v2010 = vsub.s32 %v2007, %v2009
    %v2011 = vrot.slane %v2003, %v2010
    %v2013 = vunpack.c.l.s4 1983009808
    %v2014 = vunpack.c.0.s8 %v2013
    %v2015 = vlaneseq
    %v2016 = vshrl.u32 %v2015, 7
    %v2017 = vsub.s32 %v2014, %v2016
    %v2018 = vrot.slane %v2004, %v2017
    %v2019 = vcombine.low %v2011, %v2018
    %v2021 = vadd.f32 %v134, %v2019
    %2022 = vst [vmem:[#allocation2] sm:$0xff] %v2021
    // Predicated region
    $region54: #{simple_ff_forward.1} parent=1 // pred_check
      %p2023 = pneg %p75
    $region55: #{simple_ff_forward.1} parent=1 // pred_check_branch
      %2025 = sbr.rel (%p2023) target = $region57
    $region56: #{simple_ff_forward.1} parent=1 // pred_region
      %v2026 = vld [vmem:[#allocation2] sm:$0xff]
      %v2027 = vld [vmem:[%s2] sm:$0xf]
      %v2029 = vlaneseq
      %v2030 = vshrl.u32 %v2029, 7
      %v2031 = vsub.s32 0, %v2030
      %v2032 = vrot.slane %v2027, %v2031
      %v2033 = vlaneseq
      %v2034 = vshrl.u32 %v2033, 7
      %v2035 = vsub.s32 1, %v2034
      %v2036 = vrot.slane %v2027, %v2035
      %v2037 = vlaneseq
      %v2038 = vshrl.u32 %v2037, 7
      %v2039 = vsub.s32 2, %v2038
      %v2040 = vrot.slane %v2027, %v2039
      %v2041 = vlaneseq
      %v2042 = vshrl.u32 %v2041, 7
      %v2043 = vsub.s32 3, %v2042
      %v2044 = vrot.slane %v2027, %v2043
      %v2045 = vcombine.low %v2032, %v2036
      %v2046 = vcombine.low %v2040, %v2044
      %v2048 = vunpack.c.l.s4 1983009808
      %v2049 = vunpack.c.0.s8 %v2048
      %v2050 = vlaneseq
      %v2051 = vshrl.u32 %v2050, 7
      %v2052 = vsub.s32 %v2049, %v2051
      %v2053 = vrot.slane %v2045, %v2052
      %v2055 = vunpack.c.l.s4 1983009808
      %v2056 = vunpack.c.0.s8 %v2055
      %v2057 = vlaneseq
      %v2058 = vshrl.u32 %v2057, 7
      %v2059 = vsub.s32 %v2056, %v2058
      %v2060 = vrot.slane %v2046, %v2059
      %v2061 = vcombine.low %v2053, %v2060
      %v2063 = vadd.f32 %v2026, %v2061
      %v2064 = vmax.f32 %v2063, 0.0
      %v2066 = vcombine.high %v2064, %v2064
      %v2068 = vunpack.c.l.s4 1983009808
      %v2069 = vunpack.c.0.s8 %v2068
      %v2070 = vlaneseq
      %v2071 = vshrl.u32 %v2070, 7
      %v2072 = vsub.s32 %v2069, %v2071
      %v2073 = vrot.slane %v2064, %v2072
      %v2075 = vunpack.c.l.s4 1983009808
      %v2076 = vunpack.c.0.s8 %v2075
      %v2077 = vlaneseq
      %v2078 = vshrl.u32 %v2077, 7
      %v2079 = vsub.s32 %v2076, %v2078
      %v2080 = vrot.slane %v2066, %v2079
      %v2081 = vcombine.high %v2073, %v2073
      %v2082 = vcombine.high %v2080, %v2080
      %v2087 = vpack.c.bf16 %v2073, %v2073
      %v2088 = vpack.c.bf16 %v2081, %v2081
      %v2089 = vpack.c.bf16 %v2080, %v2080
      %v2090 = vpack.c.bf16 %v2082, %v2082
      %v2091 = vld [vmem:[#allocation6] sm:$0xff]
      %v2092 = vld [vmem:[#allocation6 + $0x8] sm:$0xff]
      %v2093 = vld [vmem:[#allocation6 + $0x10] sm:$0xff]
      %v2094 = vld [vmem:[#allocation6 + $0x18] sm:$0xff]
      %v2095 = vld [vmem:[#allocation6 + $0x20] sm:$0xff]
      %v2096 = vld [vmem:[#allocation6 + $0x28] sm:$0xff]
      %v2097 = vld [vmem:[#allocation6 + $0x30] sm:$0xff]
      %v2098 = vld [vmem:[#allocation6 + $0x38] sm:$0xff]
      %v2099 = vld [vmem:[#allocation6 + $0x40] sm:$0xff]
      %v2100 = vld [vmem:[#allocation6 + $0x48] sm:$0xff]
      %v2101 = vld [vmem:[#allocation6 + $0x50] sm:$0xff]
      %v2102 = vld [vmem:[#allocation6 + $0x58] sm:$0xff]
      %v2103 = vld [vmem:[#allocation6 + $0x60] sm:$0xff]
      %v2104 = vld [vmem:[#allocation6 + $0x68] sm:$0xff]
      %v2105 = vld [vmem:[#allocation6 + $0x70] sm:$0xff]
      %v2106 = vld [vmem:[#allocation6 + $0x78] sm:$0xff]
      %v2107 = vld [vmem:[#allocation6 + $0x80] sm:$0xff]
      %v2108 = vld [vmem:[#allocation6 + $0x88] sm:$0xff]
      %v2109 = vld [vmem:[#allocation6 + $0x90] sm:$0xff]
      %v2110 = vld [vmem:[#allocation6 + $0x98] sm:$0xff]
      %v2111 = vld [vmem:[#allocation6 + $0xa0] sm:$0xff]
      %v2112 = vld [vmem:[#allocation6 + $0xa8] sm:$0xff]
      %v2113 = vld [vmem:[#allocation6 + $0xb0] sm:$0xff]
      %v2114 = vld [vmem:[#allocation6 + $0xb8] sm:$0xff]
      %v2115 = vld [vmem:[#allocation6 + $0xc0] sm:$0xff]
      %v2116 = vld [vmem:[#allocation6 + $0xc8] sm:$0xff]
      %v2117 = vld [vmem:[#allocation6 + $0xd0] sm:$0xff]
      %v2118 = vld [vmem:[#allocation6 + $0xd8] sm:$0xff]
      %v2119 = vld [vmem:[#allocation6 + $0xe0] sm:$0xff]
      %v2120 = vld [vmem:[#allocation6 + $0xe8] sm:$0xff]
      %v2121 = vld [vmem:[#allocation6 + $0xf0] sm:$0xff]
      %v2122 = vld [vmem:[#allocation6 + $0xf8] sm:$0xff]
      %v2123 = vld [vmem:[#allocation6 + $0x100] sm:$0xff]
      %v2124 = vld [vmem:[#allocation6 + $0x108] sm:$0xff]
      %v2125 = vld [vmem:[#allocation6 + $0x110] sm:$0xff]
      %v2126 = vld [vmem:[#allocation6 + $0x118] sm:$0xff]
      %v2127 = vld [vmem:[#allocation6 + $0x120] sm:$0xff]
      %v2128 = vld [vmem:[#allocation6 + $0x128] sm:$0xff]
      %v2129 = vld [vmem:[#allocation6 + $0x130] sm:$0xff]
      %v2130 = vld [vmem:[#allocation6 + $0x138] sm:$0xff]
      %v2131 = vld [vmem:[#allocation6 + $0x140] sm:$0xff]
      %v2132 = vld [vmem:[#allocation6 + $0x148] sm:$0xff]
      %v2133 = vld [vmem:[#allocation6 + $0x150] sm:$0xff]
      %v2134 = vld [vmem:[#allocation6 + $0x158] sm:$0xff]
      %v2135 = vld [vmem:[#allocation6 + $0x160] sm:$0xff]
      %v2136 = vld [vmem:[#allocation6 + $0x168] sm:$0xff]
      %v2137 = vld [vmem:[#allocation6 + $0x170] sm:$0xff]
      %v2138 = vld [vmem:[#allocation6 + $0x178] sm:$0xff]
      %v2139 = vld [vmem:[#allocation6 + $0x180] sm:$0xff]
      %v2140 = vld [vmem:[#allocation6 + $0x188] sm:$0xff]
      %v2141 = vld [vmem:[#allocation6 + $0x190] sm:$0xff]
      %v2142 = vld [vmem:[#allocation6 + $0x198] sm:$0xff]
      %v2143 = vld [vmem:[#allocation6 + $0x1a0] sm:$0xff]
      %v2144 = vld [vmem:[#allocation6 + $0x1a8] sm:$0xff]
      %v2145 = vld [vmem:[#allocation6 + $0x1b0] sm:$0xff]
      %v2146 = vld [vmem:[#allocation6 + $0x1b8] sm:$0xff]
      %v2147 = vld [vmem:[#allocation6 + $0x1c0] sm:$0xff]
      %v2148 = vld [vmem:[#allocation6 + $0x1c8] sm:$0xff]
      %v2149 = vld [vmem:[#allocation6 + $0x1d0] sm:$0xff]
      %v2150 = vld [vmem:[#allocation6 + $0x1d8] sm:$0xff]
      %v2151 = vld [vmem:[#allocation6 + $0x1e0] sm:$0xff]
      %v2152 = vld [vmem:[#allocation6 + $0x1e8] sm:$0xff]
      %v2153 = vld [vmem:[#allocation6 + $0x1f0] sm:$0xff]
      %v2154 = vld [vmem:[#allocation6 + $0x1f8] sm:$0xff]
      %v2155 = vld [vmem:[#allocation6 + $0x200] sm:$0xff]
      %v2156 = vld [vmem:[#allocation6 + $0x208] sm:$0xff]
      %v2157 = vld [vmem:[#allocation6 + $0x210] sm:$0xff]
      %v2158 = vld [vmem:[#allocation6 + $0x218] sm:$0xff]
      %v2159 = vld [vmem:[#allocation6 + $0x220] sm:$0xff]
      %v2160 = vld [vmem:[#allocation6 + $0x228] sm:$0xff]
      %v2161 = vld [vmem:[#allocation6 + $0x230] sm:$0xff]
      %v2162 = vld [vmem:[#allocation6 + $0x238] sm:$0xff]
      %v2163 = vld [vmem:[#allocation6 + $0x240] sm:$0xff]
      %v2164 = vld [vmem:[#allocation6 + $0x248] sm:$0xff]
      %v2165 = vld [vmem:[#allocation6 + $0x250] sm:$0xff]
      %v2166 = vld [vmem:[#allocation6 + $0x258] sm:$0xff]
      %v2167 = vld [vmem:[#allocation6 + $0x260] sm:$0xff]
      %v2168 = vld [vmem:[#allocation6 + $0x268] sm:$0xff]
      %v2169 = vld [vmem:[#allocation6 + $0x270] sm:$0xff]
      %v2170 = vld [vmem:[#allocation6 + $0x278] sm:$0xff]
      %v2171 = vld [vmem:[#allocation6 + $0x280] sm:$0xff]
      %v2172 = vld [vmem:[#allocation6 + $0x288] sm:$0xff]
      %v2173 = vld [vmem:[#allocation6 + $0x290] sm:$0xff]
      %v2174 = vld [vmem:[#allocation6 + $0x298] sm:$0xff]
      %v2175 = vld [vmem:[#allocation6 + $0x2a0] sm:$0xff]
      %v2176 = vld [vmem:[#allocation6 + $0x2a8] sm:$0xff]
      %v2177 = vld [vmem:[#allocation6 + $0x2b0] sm:$0xff]
      %v2178 = vld [vmem:[#allocation6 + $0x2b8] sm:$0xff]
      %v2179 = vld [vmem:[#allocation6 + $0x2c0] sm:$0xff]
      %v2180 = vld [vmem:[#allocation6 + $0x2c8] sm:$0xff]
      %v2181 = vld [vmem:[#allocation6 + $0x2d0] sm:$0xff]
      %v2182 = vld [vmem:[#allocation6 + $0x2d8] sm:$0xff]
      %v2183 = vld [vmem:[#allocation6 + $0x2e0] sm:$0xff]
      %v2184 = vld [vmem:[#allocation6 + $0x2e8] sm:$0xff]
      %v2185 = vld [vmem:[#allocation6 + $0x2f0] sm:$0xff]
      %v2186 = vld [vmem:[#allocation6 + $0x2f8] sm:$0xff]
      %v2187 = vld [vmem:[#allocation6 + $0x300] sm:$0xff]
      %v2188 = vld [vmem:[#allocation6 + $0x308] sm:$0xff]
      %v2189 = vld [vmem:[#allocation6 + $0x310] sm:$0xff]
      %v2190 = vld [vmem:[#allocation6 + $0x318] sm:$0xff]
      %v2191 = vld [vmem:[#allocation6 + $0x320] sm:$0xff]
      %v2192 = vld [vmem:[#allocation6 + $0x328] sm:$0xff]
      %v2193 = vld [vmem:[#allocation6 + $0x330] sm:$0xff]
      %v2194 = vld [vmem:[#allocation6 + $0x338] sm:$0xff]
      %v2195 = vld [vmem:[#allocation6 + $0x340] sm:$0xff]
      %v2196 = vld [vmem:[#allocation6 + $0x348] sm:$0xff]
      %v2197 = vld [vmem:[#allocation6 + $0x350] sm:$0xff]
      %v2198 = vld [vmem:[#allocation6 + $0x358] sm:$0xff]
      %v2199 = vld [vmem:[#allocation6 + $0x360] sm:$0xff]
      %v2200 = vld [vmem:[#allocation6 + $0x368] sm:$0xff]
      %v2201 = vld [vmem:[#allocation6 + $0x370] sm:$0xff]
      %v2202 = vld [vmem:[#allocation6 + $0x378] sm:$0xff]
      %v2203 = vld [vmem:[#allocation6 + $0x380] sm:$0xff]
      %v2204 = vld [vmem:[#allocation6 + $0x388] sm:$0xff]
      %v2205 = vld [vmem:[#allocation6 + $0x390] sm:$0xff]
      %v2206 = vld [vmem:[#allocation6 + $0x398] sm:$0xff]
      %v2207 = vld [vmem:[#allocation6 + $0x3a0] sm:$0xff]
      %v2208 = vld [vmem:[#allocation6 + $0x3a8] sm:$0xff]
      %v2209 = vld [vmem:[#allocation6 + $0x3b0] sm:$0xff]
      %v2210 = vld [vmem:[#allocation6 + $0x3b8] sm:$0xff]
      %v2211 = vld [vmem:[#allocation6 + $0x3c0] sm:$0xff]
      %v2212 = vld [vmem:[#allocation6 + $0x3c8] sm:$0xff]
      %v2213 = vld [vmem:[#allocation6 + $0x3d0] sm:$0xff]
      %v2214 = vld [vmem:[#allocation6 + $0x3d8] sm:$0xff]
      %v2215 = vld [vmem:[#allocation6 + $0x3e0] sm:$0xff]
      %v2216 = vld [vmem:[#allocation6 + $0x3e8] sm:$0xff]
      %v2217 = vld [vmem:[#allocation6 + $0x3f0] sm:$0xff]
      %v2218 = vld [vmem:[#allocation6 + $0x3f8] sm:$0xff]
      %v2219 = vld [vmem:[%s4] sm:$0xf]
      %v2221 = vlaneseq
      %v2222 = vshrl.u32 %v2221, 7
      %v2223 = vsub.s32 0, %v2222
      %v2224 = vrot.slane %v2219, %v2223
      %v2225 = vlaneseq
      %v2226 = vshrl.u32 %v2225, 7
      %v2227 = vsub.s32 1, %v2226
      %v2228 = vrot.slane %v2219, %v2227
      %v2229 = vlaneseq
      %v2230 = vshrl.u32 %v2229, 7
      %v2231 = vsub.s32 2, %v2230
      %v2232 = vrot.slane %v2219, %v2231
      %v2233 = vlaneseq
      %v2234 = vshrl.u32 %v2233, 7
      %v2235 = vsub.s32 3, %v2234
      %v2236 = vrot.slane %v2219, %v2235
      %v2369 = vunpack.c.l.b16 %v2091
      %v2370 = vunpack.c.h.b16 %v2091
      %v2371 = vunpack.c.l.b16 %v2092
      %v2372 = vunpack.c.h.b16 %v2092
      %v2373 = vunpack.c.l.b16 %v2093
      %v2374 = vunpack.c.h.b16 %v2093
      %v2375 = vunpack.c.l.b16 %v2094
      %v2376 = vunpack.c.h.b16 %v2094
      %v2377 = vunpack.c.l.b16 %v2095
      %v2378 = vunpack.c.h.b16 %v2095
      %v2379 = vunpack.c.l.b16 %v2096
      %v2380 = vunpack.c.h.b16 %v2096
      %v2381 = vunpack.c.l.b16 %v2097
      %v2382 = vunpack.c.h.b16 %v2097
      %v2383 = vunpack.c.l.b16 %v2098
      %v2384 = vunpack.c.h.b16 %v2098
      %v2385 = vunpack.c.l.b16 %v2099
      %v2386 = vunpack.c.h.b16 %v2099
      %v2387 = vunpack.c.l.b16 %v2100
      %v2388 = vunpack.c.h.b16 %v2100
      %v2389 = vunpack.c.l.b16 %v2101
      %v2390 = vunpack.c.h.b16 %v2101
      %v2391 = vunpack.c.l.b16 %v2102
      %v2392 = vunpack.c.h.b16 %v2102
      %v2393 = vunpack.c.l.b16 %v2103
      %v2394 = vunpack.c.h.b16 %v2103
      %v2395 = vunpack.c.l.b16 %v2104
      %v2396 = vunpack.c.h.b16 %v2104
      %v2397 = vunpack.c.l.b16 %v2105
      %v2398 = vunpack.c.h.b16 %v2105
      %v2399 = vunpack.c.l.b16 %v2106
      %v2400 = vunpack.c.h.b16 %v2106
      %v2401 = vunpack.c.l.b16 %v2107
      %v2402 = vunpack.c.h.b16 %v2107
      %v2403 = vunpack.c.l.b16 %v2108
      %v2404 = vunpack.c.h.b16 %v2108
      %v2405 = vunpack.c.l.b16 %v2109
      %v2406 = vunpack.c.h.b16 %v2109
      %v2407 = vunpack.c.l.b16 %v2110
      %v2408 = vunpack.c.h.b16 %v2110
      %v2409 = vunpack.c.l.b16 %v2111
      %v2410 = vunpack.c.h.b16 %v2111
      %v2411 = vunpack.c.l.b16 %v2112
      %v2412 = vunpack.c.h.b16 %v2112
      %v2413 = vunpack.c.l.b16 %v2113
      %v2414 = vunpack.c.h.b16 %v2113
      %v2415 = vunpack.c.l.b16 %v2114
      %v2416 = vunpack.c.h.b16 %v2114
      %v2417 = vunpack.c.l.b16 %v2115
      %v2418 = vunpack.c.h.b16 %v2115
      %v2419 = vunpack.c.l.b16 %v2116
      %v2420 = vunpack.c.h.b16 %v2116
      %v2421 = vunpack.c.l.b16 %v2117
      %v2422 = vunpack.c.h.b16 %v2117
      %v2423 = vunpack.c.l.b16 %v2118
      %v2424 = vunpack.c.h.b16 %v2118
      %v2425 = vunpack.c.l.b16 %v2119
      %v2426 = vunpack.c.h.b16 %v2119
      %v2427 = vunpack.c.l.b16 %v2120
      %v2428 = vunpack.c.h.b16 %v2120
      %v2429 = vunpack.c.l.b16 %v2121
      %v2430 = vunpack.c.h.b16 %v2121
      %v2431 = vunpack.c.l.b16 %v2122
      %v2432 = vunpack.c.h.b16 %v2122
      %v2433 = vunpack.c.l.b16 %v2123
      %v2434 = vunpack.c.h.b16 %v2123
      %v2435 = vunpack.c.l.b16 %v2124
      %v2436 = vunpack.c.h.b16 %v2124
      %v2437 = vunpack.c.l.b16 %v2125
      %v2438 = vunpack.c.h.b16 %v2125
      %v2439 = vunpack.c.l.b16 %v2126
      %v2440 = vunpack.c.h.b16 %v2126
      %v2441 = vunpack.c.l.b16 %v2127
      %v2442 = vunpack.c.h.b16 %v2127
      %v2443 = vunpack.c.l.b16 %v2128
      %v2444 = vunpack.c.h.b16 %v2128
      %v2445 = vunpack.c.l.b16 %v2129
      %v2446 = vunpack.c.h.b16 %v2129
      %v2447 = vunpack.c.l.b16 %v2130
      %v2448 = vunpack.c.h.b16 %v2130
      %v2449 = vunpack.c.l.b16 %v2131
      %v2450 = vunpack.c.h.b16 %v2131
      %v2451 = vunpack.c.l.b16 %v2132
      %v2452 = vunpack.c.h.b16 %v2132
      %v2453 = vunpack.c.l.b16 %v2133
      %v2454 = vunpack.c.h.b16 %v2133
      %v2455 = vunpack.c.l.b16 %v2134
      %v2456 = vunpack.c.h.b16 %v2134
      %v2457 = vunpack.c.l.b16 %v2135
      %v2458 = vunpack.c.h.b16 %v2135
      %v2459 = vunpack.c.l.b16 %v2136
      %v2460 = vunpack.c.h.b16 %v2136
      %v2461 = vunpack.c.l.b16 %v2137
      %v2462 = vunpack.c.h.b16 %v2137
      %v2463 = vunpack.c.l.b16 %v2138
      %v2464 = vunpack.c.h.b16 %v2138
      %v2465 = vunpack.c.l.b16 %v2139
      %v2466 = vunpack.c.h.b16 %v2139
      %v2467 = vunpack.c.l.b16 %v2140
      %v2468 = vunpack.c.h.b16 %v2140
      %v2469 = vunpack.c.l.b16 %v2141
      %v2470 = vunpack.c.h.b16 %v2141
      %v2471 = vunpack.c.l.b16 %v2142
      %v2472 = vunpack.c.h.b16 %v2142
      %v2473 = vunpack.c.l.b16 %v2143
      %v2474 = vunpack.c.h.b16 %v2143
      %v2475 = vunpack.c.l.b16 %v2144
      %v2476 = vunpack.c.h.b16 %v2144
      %v2477 = vunpack.c.l.b16 %v2145
      %v2478 = vunpack.c.h.b16 %v2145
      %v2479 = vunpack.c.l.b16 %v2146
      %v2480 = vunpack.c.h.b16 %v2146
      %v2481 = vunpack.c.l.b16 %v2147
      %v2482 = vunpack.c.h.b16 %v2147
      %v2483 = vunpack.c.l.b16 %v2148
      %v2484 = vunpack.c.h.b16 %v2148
      %v2485 = vunpack.c.l.b16 %v2149
      %v2486 = vunpack.c.h.b16 %v2149
      %v2487 = vunpack.c.l.b16 %v2150
      %v2488 = vunpack.c.h.b16 %v2150
      %v2489 = vunpack.c.l.b16 %v2151
      %v2490 = vunpack.c.h.b16 %v2151
      %v2491 = vunpack.c.l.b16 %v2152
      %v2492 = vunpack.c.h.b16 %v2152
      %v2493 = vunpack.c.l.b16 %v2153
      %v2494 = vunpack.c.h.b16 %v2153
      %v2495 = vunpack.c.l.b16 %v2154
      %v2496 = vunpack.c.h.b16 %v2154
      %v2497 = vunpack.c.l.b16 %v2155
      %v2498 = vunpack.c.h.b16 %v2155
      %v2499 = vunpack.c.l.b16 %v2156
      %v2500 = vunpack.c.h.b16 %v2156
      %v2501 = vunpack.c.l.b16 %v2157
      %v2502 = vunpack.c.h.b16 %v2157
      %v2503 = vunpack.c.l.b16 %v2158
      %v2504 = vunpack.c.h.b16 %v2158
      %v2505 = vunpack.c.l.b16 %v2159
      %v2506 = vunpack.c.h.b16 %v2159
      %v2507 = vunpack.c.l.b16 %v2160
      %v2508 = vunpack.c.h.b16 %v2160
      %v2509 = vunpack.c.l.b16 %v2161
      %v2510 = vunpack.c.h.b16 %v2161
      %v2511 = vunpack.c.l.b16 %v2162
      %v2512 = vunpack.c.h.b16 %v2162
      %v2513 = vunpack.c.l.b16 %v2163
      %v2514 = vunpack.c.h.b16 %v2163
      %v2515 = vunpack.c.l.b16 %v2164
      %v2516 = vunpack.c.h.b16 %v2164
      %v2517 = vunpack.c.l.b16 %v2165
      %v2518 = vunpack.c.h.b16 %v2165
      %v2519 = vunpack.c.l.b16 %v2166
      %v2520 = vunpack.c.h.b16 %v2166
      %v2521 = vunpack.c.l.b16 %v2167
      %v2522 = vunpack.c.h.b16 %v2167
      %v2523 = vunpack.c.l.b16 %v2168
      %v2524 = vunpack.c.h.b16 %v2168
      %v2525 = vunpack.c.l.b16 %v2169
      %v2526 = vunpack.c.h.b16 %v2169
      %v2527 = vunpack.c.l.b16 %v2170
      %v2528 = vunpack.c.h.b16 %v2170
      %v2529 = vunpack.c.l.b16 %v2171
      %v2530 = vunpack.c.h.b16 %v2171
      %v2531 = vunpack.c.l.b16 %v2172
      %v2532 = vunpack.c.h.b16 %v2172
      %v2533 = vunpack.c.l.b16 %v2173
      %v2534 = vunpack.c.h.b16 %v2173
      %v2535 = vunpack.c.l.b16 %v2174
      %v2536 = vunpack.c.h.b16 %v2174
      %v2537 = vunpack.c.l.b16 %v2175
      %v2538 = vunpack.c.h.b16 %v2175
      %v2539 = vunpack.c.l.b16 %v2176
      %v2540 = vunpack.c.h.b16 %v2176
      %v2541 = vunpack.c.l.b16 %v2177
      %v2542 = vunpack.c.h.b16 %v2177
      %v2543 = vunpack.c.l.b16 %v2178
      %v2544 = vunpack.c.h.b16 %v2178
      %v2545 = vunpack.c.l.b16 %v2179
      %v2546 = vunpack.c.h.b16 %v2179
      %v2547 = vunpack.c.l.b16 %v2180
      %v2548 = vunpack.c.h.b16 %v2180
      %v2549 = vunpack.c.l.b16 %v2181
      %v2550 = vunpack.c.h.b16 %v2181
      %v2551 = vunpack.c.l.b16 %v2182
      %v2552 = vunpack.c.h.b16 %v2182
      %v2553 = vunpack.c.l.b16 %v2183
      %v2554 = vunpack.c.h.b16 %v2183
      %v2555 = vunpack.c.l.b16 %v2184
      %v2556 = vunpack.c.h.b16 %v2184
      %v2557 = vunpack.c.l.b16 %v2185
      %v2558 = vunpack.c.h.b16 %v2185
      %v2559 = vunpack.c.l.b16 %v2186
      %v2560 = vunpack.c.h.b16 %v2186
      %v2561 = vunpack.c.l.b16 %v2187
      %v2562 = vunpack.c.h.b16 %v2187
      %v2563 = vunpack.c.l.b16 %v2188
      %v2564 = vunpack.c.h.b16 %v2188
      %v2565 = vunpack.c.l.b16 %v2189
      %v2566 = vunpack.c.h.b16 %v2189
      %v2567 = vunpack.c.l.b16 %v2190
      %v2568 = vunpack.c.h.b16 %v2190
      %v2569 = vunpack.c.l.b16 %v2191
      %v2570 = vunpack.c.h.b16 %v2191
      %v2571 = vunpack.c.l.b16 %v2192
      %v2572 = vunpack.c.h.b16 %v2192
      %v2573 = vunpack.c.l.b16 %v2193
      %v2574 = vunpack.c.h.b16 %v2193
      %v2575 = vunpack.c.l.b16 %v2194
      %v2576 = vunpack.c.h.b16 %v2194
      %v2577 = vunpack.c.l.b16 %v2195
      %v2578 = vunpack.c.h.b16 %v2195
      %v2579 = vunpack.c.l.b16 %v2196
      %v2580 = vunpack.c.h.b16 %v2196
      %v2581 = vunpack.c.l.b16 %v2197
      %v2582 = vunpack.c.h.b16 %v2197
      %v2583 = vunpack.c.l.b16 %v2198
      %v2584 = vunpack.c.h.b16 %v2198
      %v2585 = vunpack.c.l.b16 %v2199
      %v2586 = vunpack.c.h.b16 %v2199
      %v2587 = vunpack.c.l.b16 %v2200
      %v2588 = vunpack.c.h.b16 %v2200
      %v2589 = vunpack.c.l.b16 %v2201
      %v2590 = vunpack.c.h.b16 %v2201
      %v2591 = vunpack.c.l.b16 %v2202
      %v2592 = vunpack.c.h.b16 %v2202
      %v2593 = vunpack.c.l.b16 %v2203
      %v2594 = vunpack.c.h.b16 %v2203
      %v2595 = vunpack.c.l.b16 %v2204
      %v2596 = vunpack.c.h.b16 %v2204
      %v2597 = vunpack.c.l.b16 %v2205
      %v2598 = vunpack.c.h.b16 %v2205
      %v2599 = vunpack.c.l.b16 %v2206
      %v2600 = vunpack.c.h.b16 %v2206
      %v2601 = vunpack.c.l.b16 %v2207
      %v2602 = vunpack.c.h.b16 %v2207
      %v2603 = vunpack.c.l.b16 %v2208
      %v2604 = vunpack.c.h.b16 %v2208
      %v2605 = vunpack.c.l.b16 %v2209
      %v2606 = vunpack.c.h.b16 %v2209
      %v2607 = vunpack.c.l.b16 %v2210
      %v2608 = vunpack.c.h.b16 %v2210
      %v2609 = vunpack.c.l.b16 %v2211
      %v2610 = vunpack.c.h.b16 %v2211
      %v2611 = vunpack.c.l.b16 %v2212
      %v2612 = vunpack.c.h.b16 %v2212
      %v2613 = vunpack.c.l.b16 %v2213
      %v2614 = vunpack.c.h.b16 %v2213
      %v2615 = vunpack.c.l.b16 %v2214
      %v2616 = vunpack.c.h.b16 %v2214
      %v2617 = vunpack.c.l.b16 %v2215
      %v2618 = vunpack.c.h.b16 %v2215
      %v2619 = vunpack.c.l.b16 %v2216
      %v2620 = vunpack.c.h.b16 %v2216
      %v2621 = vunpack.c.l.b16 %v2217
      %v2622 = vunpack.c.h.b16 %v2217
      %v2623 = vunpack.c.l.b16 %v2218
      %v2624 = vunpack.c.h.b16 %v2218
      %v2625 = vpack.c.b16 %v2373, %v2369
      %v2626 = vpack.c.b16 %v2374, %v2370
      %v2627 = vpack.c.b16 %v2375, %v2371
      %v2628 = vpack.c.b16 %v2376, %v2372
      %v2629 = vpack.c.b16 %v2381, %v2377
      %v2630 = vpack.c.b16 %v2382, %v2378
      %v2631 = vpack.c.b16 %v2383, %v2379
      %v2632 = vpack.c.b16 %v2384, %v2380
      %v2633 = vpack.c.b16 %v2389, %v2385
      %v2634 = vpack.c.b16 %v2390, %v2386
      %v2635 = vpack.c.b16 %v2391, %v2387
      %v2636 = vpack.c.b16 %v2392, %v2388
      %v2637 = vpack.c.b16 %v2397, %v2393
      %v2638 = vpack.c.b16 %v2398, %v2394
      %v2639 = vpack.c.b16 %v2399, %v2395
      %v2640 = vpack.c.b16 %v2400, %v2396
      %v2641 = vpack.c.b16 %v2405, %v2401
      %v2642 = vpack.c.b16 %v2406, %v2402
      %v2643 = vpack.c.b16 %v2407, %v2403
      %v2644 = vpack.c.b16 %v2408, %v2404
      %v2645 = vpack.c.b16 %v2413, %v2409
      %v2646 = vpack.c.b16 %v2414, %v2410
      %v2647 = vpack.c.b16 %v2415, %v2411
      %v2648 = vpack.c.b16 %v2416, %v2412
      %v2649 = vpack.c.b16 %v2421, %v2417
      %v2650 = vpack.c.b16 %v2422, %v2418
      %v2651 = vpack.c.b16 %v2423, %v2419
      %v2652 = vpack.c.b16 %v2424, %v2420
      %v2653 = vpack.c.b16 %v2429, %v2425
      %v2654 = vpack.c.b16 %v2430, %v2426
      %v2655 = vpack.c.b16 %v2431, %v2427
      %v2656 = vpack.c.b16 %v2432, %v2428
      %v2657 = vpack.c.b16 %v2437, %v2433
      %v2658 = vpack.c.b16 %v2438, %v2434
      %v2659 = vpack.c.b16 %v2439, %v2435
      %v2660 = vpack.c.b16 %v2440, %v2436
      %v2661 = vpack.c.b16 %v2445, %v2441
      %v2662 = vpack.c.b16 %v2446, %v2442
      %v2663 = vpack.c.b16 %v2447, %v2443
      %v2664 = vpack.c.b16 %v2448, %v2444
      %v2665 = vpack.c.b16 %v2453, %v2449
      %v2666 = vpack.c.b16 %v2454, %v2450
      %v2667 = vpack.c.b16 %v2455, %v2451
      %v2668 = vpack.c.b16 %v2456, %v2452
      %v2669 = vpack.c.b16 %v2461, %v2457
      %v2670 = vpack.c.b16 %v2462, %v2458
      %v2671 = vpack.c.b16 %v2463, %v2459
      %v2672 = vpack.c.b16 %v2464, %v2460
      %v2673 = vpack.c.b16 %v2469, %v2465
      %v2674 = vpack.c.b16 %v2470, %v2466
      %v2675 = vpack.c.b16 %v2471, %v2467
      %v2676 = vpack.c.b16 %v2472, %v2468
      %v2677 = vpack.c.b16 %v2477, %v2473
      %v2678 = vpack.c.b16 %v2478, %v2474
      %v2679 = vpack.c.b16 %v2479, %v2475
      %v2680 = vpack.c.b16 %v2480, %v2476
      %v2681 = vpack.c.b16 %v2485, %v2481
      %v2682 = vpack.c.b16 %v2486, %v2482
      %v2683 = vpack.c.b16 %v2487, %v2483
      %v2684 = vpack.c.b16 %v2488, %v2484
      %v2685 = vpack.c.b16 %v2493, %v2489
      %v2686 = vpack.c.b16 %v2494, %v2490
      %v2687 = vpack.c.b16 %v2495, %v2491
      %v2688 = vpack.c.b16 %v2496, %v2492
      %v2689 = vpack.c.b16 %v2501, %v2497
      %v2690 = vpack.c.b16 %v2502, %v2498
      %v2691 = vpack.c.b16 %v2503, %v2499
      %v2692 = vpack.c.b16 %v2504, %v2500
      %v2693 = vpack.c.b16 %v2509, %v2505
      %v2694 = vpack.c.b16 %v2510, %v2506
      %v2695 = vpack.c.b16 %v2511, %v2507
      %v2696 = vpack.c.b16 %v2512, %v2508
      %v2697 = vpack.c.b16 %v2517, %v2513
      %v2698 = vpack.c.b16 %v2518, %v2514
      %v2699 = vpack.c.b16 %v2519, %v2515
      %v2700 = vpack.c.b16 %v2520, %v2516
      %v2701 = vpack.c.b16 %v2525, %v2521
      %v2702 = vpack.c.b16 %v2526, %v2522
      %v2703 = vpack.c.b16 %v2527, %v2523
      %v2704 = vpack.c.b16 %v2528, %v2524
      %v2705 = vpack.c.b16 %v2533, %v2529
      %v2706 = vpack.c.b16 %v2534, %v2530
      %v2707 = vpack.c.b16 %v2535, %v2531
      %v2708 = vpack.c.b16 %v2536, %v2532
      %v2709 = vpack.c.b16 %v2541, %v2537
      %v2710 = vpack.c.b16 %v2542, %v2538
      %v2711 = vpack.c.b16 %v2543, %v2539
      %v2712 = vpack.c.b16 %v2544, %v2540
      %v2713 = vpack.c.b16 %v2549, %v2545
      %v2714 = vpack.c.b16 %v2550, %v2546
      %v2715 = vpack.c.b16 %v2551, %v2547
      %v2716 = vpack.c.b16 %v2552, %v2548
      %v2717 = vpack.c.b16 %v2557, %v2553
      %v2718 = vpack.c.b16 %v2558, %v2554
      %v2719 = vpack.c.b16 %v2559, %v2555
      %v2720 = vpack.c.b16 %v2560, %v2556
      %v2721 = vpack.c.b16 %v2565, %v2561
      %v2722 = vpack.c.b16 %v2566, %v2562
      %v2723 = vpack.c.b16 %v2567, %v2563
      %v2724 = vpack.c.b16 %v2568, %v2564
      %v2725 = vpack.c.b16 %v2573, %v2569
      %v2726 = vpack.c.b16 %v2574, %v2570
      %v2727 = vpack.c.b16 %v2575, %v2571
      %v2728 = vpack.c.b16 %v2576, %v2572
      %v2729 = vpack.c.b16 %v2581, %v2577
      %v2730 = vpack.c.b16 %v2582, %v2578
      %v2731 = vpack.c.b16 %v2583, %v2579
      %v2732 = vpack.c.b16 %v2584, %v2580
      %v2733 = vpack.c.b16 %v2589, %v2585
      %v2734 = vpack.c.b16 %v2590, %v2586
      %v2735 = vpack.c.b16 %v2591, %v2587
      %v2736 = vpack.c.b16 %v2592, %v2588
      %v2737 = vpack.c.b16 %v2597, %v2593
      %v2738 = vpack.c.b16 %v2598, %v2594
      %v2739 = vpack.c.b16 %v2599, %v2595
      %v2740 = vpack.c.b16 %v2600, %v2596
      %v2741 = vpack.c.b16 %v2605, %v2601
      %v2742 = vpack.c.b16 %v2606, %v2602
      %v2743 = vpack.c.b16 %v2607, %v2603
      %v2744 = vpack.c.b16 %v2608, %v2604
      %v2745 = vpack.c.b16 %v2613, %v2609
      %v2746 = vpack.c.b16 %v2614, %v2610
      %v2747 = vpack.c.b16 %v2615, %v2611
      %v2748 = vpack.c.b16 %v2616, %v2612
      %v2749 = vpack.c.b16 %v2621, %v2617
      %v2750 = vpack.c.b16 %v2622, %v2618
      %v2751 = vpack.c.b16 %v2623, %v2619
      %v2752 = vpack.c.b16 %v2624, %v2620
      %2881 = vmatprep.subr.bf16.mxu0 %v2626
      %2882 = vmatpush1.bf16.msra.mxu0 %v2625
      %2883 = vmatprep.subr.bf16.mxu0 %v2630
      %2884 = vmatpush1.bf16.msra.mxu0 %v2629
      %2885 = vmatprep.subr.bf16.mxu0 %v2634
      %2886 = vmatpush1.bf16.msra.mxu0 %v2633
      %2887 = vmatprep.subr.bf16.mxu0 %v2638
      %2888 = vmatpush1.bf16.msra.mxu0 %v2637
      %2889 = vmatprep.subr.bf16.mxu0 %v2642
      %2890 = vmatpush1.bf16.msra.mxu0 %v2641
      %2891 = vmatprep.subr.bf16.mxu0 %v2646
      %2892 = vmatpush1.bf16.msra.mxu0 %v2645
      %2893 = vmatprep.subr.bf16.mxu0 %v2650
      %2894 = vmatpush1.bf16.msra.mxu0 %v2649
      %2895 = vmatprep.subr.bf16.mxu0 %v2654
      %2896 = vmatpush1.bf16.msra.mxu0 %v2653
      %2897 = vmatprep.subr.bf16.mxu0 %v2658
      %2898 = vmatpush1.bf16.msra.mxu0 %v2657
      %2899 = vmatprep.subr.bf16.mxu0 %v2662
      %2900 = vmatpush1.bf16.msra.mxu0 %v2661
      %2901 = vmatprep.subr.bf16.mxu0 %v2666
      %2902 = vmatpush1.bf16.msra.mxu0 %v2665
      %2903 = vmatprep.subr.bf16.mxu0 %v2670
      %2904 = vmatpush1.bf16.msra.mxu0 %v2669
      %2905 = vmatprep.subr.bf16.mxu0 %v2674
      %2906 = vmatpush1.bf16.msra.mxu0 %v2673
      %2907 = vmatprep.subr.bf16.mxu0 %v2678
      %2908 = vmatpush1.bf16.msra.mxu0 %v2677
      %2909 = vmatprep.subr.bf16.mxu0 %v2682
      %2910 = vmatpush1.bf16.msra.mxu0 %v2681
      %2911 = vmatprep.subr.bf16.mxu0 %v2686
      %2912 = vmatpush1.bf16.msra.mxu0 %v2685
      %2913 = vmatprep.mubr.bf16.mxu0 %v2088
      %2914 = vmatmul.mubr.bf16.gmra.mrb[0].mxu0 %v2087
      %v2915 = vpop.f32.mrb[0].mxu0
      %v2916 = vadd.f32 %v2224, %v2915
      %v2917 = vpop.f32.mrb[0].mxu0
      %v2918 = vadd.f32 %v2228, %v2917
      %v2919 = vpop.f32.mrb[0].mxu0
      %v2920 = vpop.f32.mrb[0].mxu0
      %2921 = vdwg.mxu0
      %2922 = vmatprep.subr.bf16.mxu0 %v2690
      %2923 = vmatpush1.bf16.msra.mxu0 %v2689
      %2924 = vmatprep.subr.bf16.mxu0 %v2694
      %2925 = vmatpush1.bf16.msra.mxu0 %v2693
      %2926 = vmatprep.subr.bf16.mxu0 %v2698
      %2927 = vmatpush1.bf16.msra.mxu0 %v2697
      %2928 = vmatprep.subr.bf16.mxu0 %v2702
      %2929 = vmatpush1.bf16.msra.mxu0 %v2701
      %2930 = vmatprep.subr.bf16.mxu0 %v2706
      %2931 = vmatpush1.bf16.msra.mxu0 %v2705
      %2932 = vmatprep.subr.bf16.mxu0 %v2710
      %2933 = vmatpush1.bf16.msra.mxu0 %v2709
      %2934 = vmatprep.subr.bf16.mxu0 %v2714
      %2935 = vmatpush1.bf16.msra.mxu0 %v2713
      %2936 = vmatprep.subr.bf16.mxu0 %v2718
      %2937 = vmatpush1.bf16.msra.mxu0 %v2717
      %2938 = vmatprep.subr.bf16.mxu0 %v2722
      %2939 = vmatpush1.bf16.msra.mxu0 %v2721
      %2940 = vmatprep.subr.bf16.mxu0 %v2726
      %2941 = vmatpush1.bf16.msra.mxu0 %v2725
      %2942 = vmatprep.subr.bf16.mxu0 %v2730
      %2943 = vmatpush1.bf16.msra.mxu0 %v2729
      %2944 = vmatprep.subr.bf16.mxu0 %v2734
      %2945 = vmatpush1.bf16.msra.mxu0 %v2733
      %2946 = vmatprep.subr.bf16.mxu0 %v2738
      %2947 = vmatpush1.bf16.msra.mxu0 %v2737
      %2948 = vmatprep.subr.bf16.mxu0 %v2742
      %2949 = vmatpush1.bf16.msra.mxu0 %v2741
      %2950 = vmatprep.subr.bf16.mxu0 %v2746
      %2951 = vmatpush1.bf16.msra.mxu0 %v2745
      %2952 = vmatprep.subr.bf16.mxu0 %v2750
      %2953 = vmatpush1.bf16.msra.mxu0 %v2749
      %2954 = vmatprep.mubr.bf16.mxu0 %v2090
      %2955 = vmatmul.mubr.bf16.gmra.mrb[0].mxu0 %v2089
      %v2956 = vpop.f32.mrb[0].mxu0
      %v2957 = vadd.f32 %v2916, %v2956
      %v2958 = vpop.f32.mrb[0].mxu0
      %v2959 = vadd.f32 %v2918, %v2958
      %v2960 = vpop.f32.mrb[0].mxu0
      %v2961 = vpop.f32.mrb[0].mxu0
      %2962 = vdwg.mxu0
      %2963 = vmatprep.subr.bf16.mxu0 %v2628
      %2964 = vmatpush1.bf16.msra.mxu0 %v2627
      %2965 = vmatprep.subr.bf16.mxu0 %v2632
      %2966 = vmatpush1.bf16.msra.mxu0 %v2631
      %2967 = vmatprep.subr.bf16.mxu0 %v2636
      %2968 = vmatpush1.bf16.msra.mxu0 %v2635
      %2969 = vmatprep.subr.bf16.mxu0 %v2640
      %2970 = vmatpush1.bf16.msra.mxu0 %v2639
      %2971 = vmatprep.subr.bf16.mxu0 %v2644
      %2972 = vmatpush1.bf16.msra.mxu0 %v2643
      %2973 = vmatprep.subr.bf16.mxu0 %v2648
      %2974 = vmatpush1.bf16.msra.mxu0 %v2647
      %2975 = vmatprep.subr.bf16.mxu0 %v2652
      %2976 = vmatpush1.bf16.msra.mxu0 %v2651
      %2977 = vmatprep.subr.bf16.mxu0 %v2656
      %2978 = vmatpush1.bf16.msra.mxu0 %v2655
      %2979 = vmatprep.subr.bf16.mxu0 %v2660
      %2980 = vmatpush1.bf16.msra.mxu0 %v2659
      %2981 = vmatprep.subr.bf16.mxu0 %v2664
      %2982 = vmatpush1.bf16.msra.mxu0 %v2663
      %2983 = vmatprep.subr.bf16.mxu0 %v2668
      %2984 = vmatpush1.bf16.msra.mxu0 %v2667
      %2985 = vmatprep.subr.bf16.mxu0 %v2672
      %2986 = vmatpush1.bf16.msra.mxu0 %v2671
      %2987 = vmatprep.subr.bf16.mxu0 %v2676
      %2988 = vmatpush1.bf16.msra.mxu0 %v2675
      %2989 = vmatprep.subr.bf16.mxu0 %v2680
      %2990 = vmatpush1.bf16.msra.mxu0 %v2679
      %2991 = vmatprep.subr.bf16.mxu0 %v2684
      %2992 = vmatpush1.bf16.msra.mxu0 %v2683
      %2993 = vmatprep.subr.bf16.mxu0 %v2688
      %2994 = vmatpush1.bf16.msra.mxu0 %v2687
      %2995 = vmatprep.mubr.bf16.mxu0 %v2088
      %2996 = vmatmul.mubr.bf16.gmra.mrb[0].mxu0 %v2087
      %v2997 = vpop.f32.mrb[0].mxu0
      %v2998 = vadd.f32 %v2232, %v2997
      %v2999 = vpop.f32.mrb[0].mxu0
      %v3000 = vadd.f32 %v2236, %v2999
      %v3001 = vpop.f32.mrb[0].mxu0
      %v3002 = vpop.f32.mrb[0].mxu0
      %3003 = vdwg.mxu0
      %3004 = vmatprep.subr.bf16.mxu0 %v2692
      %3005 = vmatpush1.bf16.msra.mxu0 %v2691
      %3006 = vmatprep.subr.bf16.mxu0 %v2696
      %3007 = vmatpush1.bf16.msra.mxu0 %v2695
      %3008 = vmatprep.subr.bf16.mxu0 %v2700
      %3009 = vmatpush1.bf16.msra.mxu0 %v2699
      %3010 = vmatprep.subr.bf16.mxu0 %v2704
      %3011 = vmatpush1.bf16.msra.mxu0 %v2703
      %3012 = vmatprep.subr.bf16.mxu0 %v2708
      %3013 = vmatpush1.bf16.msra.mxu0 %v2707
      %3014 = vmatprep.subr.bf16.mxu0 %v2712
      %3015 = vmatpush1.bf16.msra.mxu0 %v2711
      %3016 = vmatprep.subr.bf16.mxu0 %v2716
      %3017 = vmatpush1.bf16.msra.mxu0 %v2715
      %3018 = vmatprep.subr.bf16.mxu0 %v2720
      %3019 = vmatpush1.bf16.msra.mxu0 %v2719
      %3020 = vmatprep.subr.bf16.mxu0 %v2724
      %3021 = vmatpush1.bf16.msra.mxu0 %v2723
      %3022 = vmatprep.subr.bf16.mxu0 %v2728
      %3023 = vmatpush1.bf16.msra.mxu0 %v2727
      %3024 = vmatprep.subr.bf16.mxu0 %v2732
      %3025 = vmatpush1.bf16.msra.mxu0 %v2731
      %3026 = vmatprep.subr.bf16.mxu0 %v2736
      %3027 = vmatpush1.bf16.msra.mxu0 %v2735
      %3028 = vmatprep.subr.bf16.mxu0 %v2740
      %3029 = vmatpush1.bf16.msra.mxu0 %v2739
      %3030 = vmatprep.subr.bf16.mxu0 %v2744
      %3031 = vmatpush1.bf16.msra.mxu0 %v2743
      %3032 = vmatprep.subr.bf16.mxu0 %v2748
      %3033 = vmatpush1.bf16.msra.mxu0 %v2747
      %3034 = vmatprep.subr.bf16.mxu0 %v2752
      %3035 = vmatpush1.bf16.msra.mxu0 %v2751
      %3036 = vmatprep.mubr.bf16.mxu0 %v2090
      %3037 = vmatmul.mubr.bf16.gmra.mrb[0].mxu0 %v2089
      %v3038 = vpop.f32.mrb[0].mxu0
      %v3039 = vadd.f32 %v2998, %v3038
      %v3040 = vpop.f32.mrb[0].mxu0
      %v3041 = vadd.f32 %v3000, %v3040
      %v3042 = vpop.f32.mrb[0].mxu0
      %v3043 = vpop.f32.mrb[0].mxu0
      %3044 = vdwg.mxu0
      %v3045 = vmax.f32 %v2957, 0.0
      %v3046 = vmax.f32 %v2959, 0.0
      %v3047 = vmax.f32 %v3039, 0.0
      %v3048 = vmax.f32 %v3041, 0.0
      %v3049 = vpack.c.bf16 %v3045, %v3045
      %v3050 = vpack.c.bf16 %v3046, %v3046
      %v3051 = vpack.c.bf16 %v3047, %v3047
      %v3052 = vpack.c.bf16 %v3048, %v3048
      %v3053 = vld [vmem:[#allocation8] sm:$0xf]
      %v3054 = vld [vmem:[#allocation8 + $0x4] sm:$0xf]
      %v3055 = vld [vmem:[#allocation8 + $0x8] sm:$0xf]
      %v3056 = vld [vmem:[#allocation8 + $0xc] sm:$0xf]
      %v3057 = vld [vmem:[#allocation8 + $0x10] sm:$0xf]
      %v3058 = vld [vmem:[#allocation8 + $0x14] sm:$0xf]
      %v3059 = vld [vmem:[#allocation8 + $0x18] sm:$0xf]
      %v3060 = vld [vmem:[#allocation8 + $0x1c] sm:$0xf]
      %v3061 = vld [vmem:[#allocation8 + $0x20] sm:$0xf]
      %v3062 = vld [vmem:[#allocation8 + $0x24] sm:$0xf]
      %v3063 = vld [vmem:[#allocation8 + $0x28] sm:$0xf]
      %v3064 = vld [vmem:[#allocation8 + $0x2c] sm:$0xf]
      %v3065 = vld [vmem:[#allocation8 + $0x30] sm:$0xf]
      %v3066 = vld [vmem:[#allocation8 + $0x34] sm:$0xf]
      %v3067 = vld [vmem:[#allocation8 + $0x38] sm:$0xf]
      %v3068 = vld [vmem:[#allocation8 + $0x3c] sm:$0xf]
      %v3069 = vld [vmem:[#allocation8 + $0x40] sm:$0xf]
      %v3070 = vld [vmem:[#allocation8 + $0x44] sm:$0xf]
      %v3071 = vld [vmem:[#allocation8 + $0x48] sm:$0xf]
      %v3072 = vld [vmem:[#allocation8 + $0x4c] sm:$0xf]
      %v3073 = vld [vmem:[#allocation8 + $0x50] sm:$0xf]
      %v3074 = vld [vmem:[#allocation8 + $0x54] sm:$0xf]
      %v3075 = vld [vmem:[#allocation8 + $0x58] sm:$0xf]
      %v3076 = vld [vmem:[#allocation8 + $0x5c] sm:$0xf]
      %v3077 = vld [vmem:[#allocation8 + $0x60] sm:$0xf]
      %v3078 = vld [vmem:[#allocation8 + $0x64] sm:$0xf]
      %v3079 = vld [vmem:[#allocation8 + $0x68] sm:$0xf]
      %v3080 = vld [vmem:[#allocation8 + $0x6c] sm:$0xf]
      %v3081 = vld [vmem:[#allocation8 + $0x70] sm:$0xf]
      %v3082 = vld [vmem:[#allocation8 + $0x74] sm:$0xf]
      %v3083 = vld [vmem:[#allocation8 + $0x78] sm:$0xf]
      %v3084 = vld [vmem:[#allocation8 + $0x7c] sm:$0xf]
      %v3085 = vld [vmem:[#allocation8 + $0x80] sm:$0xf]
      %v3086 = vld [vmem:[#allocation8 + $0x84] sm:$0xf]
      %v3087 = vld [vmem:[#allocation8 + $0x88] sm:$0xf]
      %v3088 = vld [vmem:[#allocation8 + $0x8c] sm:$0xf]
      %v3089 = vld [vmem:[#allocation8 + $0x90] sm:$0xf]
      %v3090 = vld [vmem:[#allocation8 + $0x94] sm:$0xf]
      %v3091 = vld [vmem:[#allocation8 + $0x98] sm:$0xf]
      %v3092 = vld [vmem:[#allocation8 + $0x9c] sm:$0xf]
      %v3093 = vld [vmem:[#allocation8 + $0xa0] sm:$0xf]
      %v3094 = vld [vmem:[#allocation8 + $0xa4] sm:$0xf]
      %v3095 = vld [vmem:[#allocation8 + $0xa8] sm:$0xf]
      %v3096 = vld [vmem:[#allocation8 + $0xac] sm:$0xf]
      %v3097 = vld [vmem:[#allocation8 + $0xb0] sm:$0xf]
      %v3098 = vld [vmem:[#allocation8 + $0xb4] sm:$0xf]
      %v3099 = vld [vmem:[#allocation8 + $0xb8] sm:$0xf]
      %v3100 = vld [vmem:[#allocation8 + $0xbc] sm:$0xf]
      %v3101 = vld [vmem:[#allocation8 + $0xc0] sm:$0xf]
      %v3102 = vld [vmem:[#allocation8 + $0xc4] sm:$0xf]
      %v3103 = vld [vmem:[#allocation8 + $0xc8] sm:$0xf]
      %v3104 = vld [vmem:[#allocation8 + $0xcc] sm:$0xf]
      %v3105 = vld [vmem:[#allocation8 + $0xd0] sm:$0xf]
      %v3106 = vld [vmem:[#allocation8 + $0xd4] sm:$0xf]
      %v3107 = vld [vmem:[#allocation8 + $0xd8] sm:$0xf]
      %v3108 = vld [vmem:[#allocation8 + $0xdc] sm:$0xf]
      %v3109 = vld [vmem:[#allocation8 + $0xe0] sm:$0xf]
      %v3110 = vld [vmem:[#allocation8 + $0xe4] sm:$0xf]
      %v3111 = vld [vmem:[#allocation8 + $0xe8] sm:$0xf]
      %v3112 = vld [vmem:[#allocation8 + $0xec] sm:$0xf]
      %v3113 = vld [vmem:[#allocation8 + $0xf0] sm:$0xf]
      %v3114 = vld [vmem:[#allocation8 + $0xf4] sm:$0xf]
      %v3115 = vld [vmem:[#allocation8 + $0xf8] sm:$0xf]
      %v3116 = vld [vmem:[#allocation8 + $0xfc] sm:$0xf]
      %v3117 = vld [vmem:[%s6] sm:$0x1]
      %v3119 = vlaneseq
      %v3120 = vshrl.u32 %v3119, 7
      %v3121 = vsub.s32 0, %v3120
      %v3122 = vrot.slane %v3117, %v3121
      %v3188 = vunpack.c.l.b16 %v3053
      %v3189 = vunpack.c.l.b16 %v3054
      %v3190 = vunpack.c.l.b16 %v3055
      %v3191 = vunpack.c.l.b16 %v3056
      %v3192 = vunpack.c.l.b16 %v3057
      %v3193 = vunpack.c.l.b16 %v3058
      %v3194 = vunpack.c.l.b16 %v3059
      %v3195 = vunpack.c.l.b16 %v3060
      %v3196 = vunpack.c.l.b16 %v3061
      %v3197 = vunpack.c.l.b16 %v3062
      %v3198 = vunpack.c.l.b16 %v3063
      %v3199 = vunpack.c.l.b16 %v3064
      %v3200 = vunpack.c.l.b16 %v3065
      %v3201 = vunpack.c.l.b16 %v3066
      %v3202 = vunpack.c.l.b16 %v3067
      %v3203 = vunpack.c.l.b16 %v3068
      %v3204 = vunpack.c.l.b16 %v3069
      %v3205 = vunpack.c.l.b16 %v3070
      %v3206 = vunpack.c.l.b16 %v3071
      %v3207 = vunpack.c.l.b16 %v3072
      %v3208 = vunpack.c.l.b16 %v3073
      %v3209 = vunpack.c.l.b16 %v3074
      %v3210 = vunpack.c.l.b16 %v3075
      %v3211 = vunpack.c.l.b16 %v3076
      %v3212 = vunpack.c.l.b16 %v3077
      %v3213 = vunpack.c.l.b16 %v3078
      %v3214 = vunpack.c.l.b16 %v3079
      %v3215 = vunpack.c.l.b16 %v3080
      %v3216 = vunpack.c.l.b16 %v3081
      %v3217 = vunpack.c.l.b16 %v3082
      %v3218 = vunpack.c.l.b16 %v3083
      %v3219 = vunpack.c.l.b16 %v3084
      %v3220 = vunpack.c.l.b16 %v3085
      %v3221 = vunpack.c.l.b16 %v3086
      %v3222 = vunpack.c.l.b16 %v3087
      %v3223 = vunpack.c.l.b16 %v3088
      %v3224 = vunpack.c.l.b16 %v3089
      %v3225 = vunpack.c.l.b16 %v3090
      %v3226 = vunpack.c.l.b16 %v3091
      %v3227 = vunpack.c.l.b16 %v3092
      %v3228 = vunpack.c.l.b16 %v3093
      %v3229 = vunpack.c.l.b16 %v3094
      %v3230 = vunpack.c.l.b16 %v3095
      %v3231 = vunpack.c.l.b16 %v3096
      %v3232 = vunpack.c.l.b16 %v3097
      %v3233 = vunpack.c.l.b16 %v3098
      %v3234 = vunpack.c.l.b16 %v3099
      %v3235 = vunpack.c.l.b16 %v3100
      %v3236 = vunpack.c.l.b16 %v3101
      %v3237 = vunpack.c.l.b16 %v3102
      %v3238 = vunpack.c.l.b16 %v3103
      %v3239 = vunpack.c.l.b16 %v3104
      %v3240 = vunpack.c.l.b16 %v3105
      %v3241 = vunpack.c.l.b16 %v3106
      %v3242 = vunpack.c.l.b16 %v3107
      %v3243 = vunpack.c.l.b16 %v3108
      %v3244 = vunpack.c.l.b16 %v3109
      %v3245 = vunpack.c.l.b16 %v3110
      %v3246 = vunpack.c.l.b16 %v3111
      %v3247 = vunpack.c.l.b16 %v3112
      %v3248 = vunpack.c.l.b16 %v3113
      %v3249 = vunpack.c.l.b16 %v3114
      %v3250 = vunpack.c.l.b16 %v3115
      %v3251 = vunpack.c.l.b16 %v3116
      %v3252 = vpack.c.b16 %v3189, %v3188
      %v3253 = vpack.c.b16 %v3191, %v3190
      %v3254 = vpack.c.b16 %v3193, %v3192
      %v3255 = vpack.c.b16 %v3195, %v3194
      %v3256 = vpack.c.b16 %v3197, %v3196
      %v3257 = vpack.c.b16 %v3199, %v3198
      %v3258 = vpack.c.b16 %v3201, %v3200
      %v3259 = vpack.c.b16 %v3203, %v3202
      %v3260 = vpack.c.b16 %v3205, %v3204
      %v3261 = vpack.c.b16 %v3207, %v3206
      %v3262 = vpack.c.b16 %v3209, %v3208
      %v3263 = vpack.c.b16 %v3211, %v3210
      %v3264 = vpack.c.b16 %v3213, %v3212
      %v3265 = vpack.c.b16 %v3215, %v3214
      %v3266 = vpack.c.b16 %v3217, %v3216
      %v3267 = vpack.c.b16 %v3219, %v3218
      %v3268 = vpack.c.b16 %v3221, %v3220
      %v3269 = vpack.c.b16 %v3223, %v3222
      %v3270 = vpack.c.b16 %v3225, %v3224
      %v3271 = vpack.c.b16 %v3227, %v3226
      %v3272 = vpack.c.b16 %v3229, %v3228
      %v3273 = vpack.c.b16 %v3231, %v3230
      %v3274 = vpack.c.b16 %v3233, %v3232
      %v3275 = vpack.c.b16 %v3235, %v3234
      %v3276 = vpack.c.b16 %v3237, %v3236
      %v3277 = vpack.c.b16 %v3239, %v3238
      %v3278 = vpack.c.b16 %v3241, %v3240
      %v3279 = vpack.c.b16 %v3243, %v3242
      %v3280 = vpack.c.b16 %v3245, %v3244
      %v3281 = vpack.c.b16 %v3247, %v3246
      %v3282 = vpack.c.b16 %v3249, %v3248
      %v3283 = vpack.c.b16 %v3251, %v3250
      %3316 = vmatprep.subr.bf16.mxu0 0
      %3317 = vmatpush1.bf16.msra.mxu0 %v3252
      %3318 = vmatprep.subr.bf16.mxu0 0
      %3319 = vmatpush1.bf16.msra.mxu0 %v3253
      %3320 = vmatprep.subr.bf16.mxu0 0
      %3321 = vmatpush1.bf16.msra.mxu0 %v3254
      %3322 = vmatprep.subr.bf16.mxu0 0
      %3323 = vmatpush1.bf16.msra.mxu0 %v3255
      %3324 = vmatprep.subr.bf16.mxu0 0
      %3325 = vmatpush1.bf16.msra.mxu0 %v3256
      %3326 = vmatprep.subr.bf16.mxu0 0
      %3327 = vmatpush1.bf16.msra.mxu0 %v3257
      %3328 = vmatprep.subr.bf16.mxu0 0
      %3329 = vmatpush1.bf16.msra.mxu0 %v3258
      %3330 = vmatprep.subr.bf16.mxu0 0
      %3331 = vmatpush1.bf16.msra.mxu0 %v3259
      %3332 = vmatprep.subr.bf16.mxu0 0
      %3333 = vmatpush1.bf16.msra.mxu0 %v3260
      %3334 = vmatprep.subr.bf16.mxu0 0
      %3335 = vmatpush1.bf16.msra.mxu0 %v3261
      %3336 = vmatprep.subr.bf16.mxu0 0
      %3337 = vmatpush1.bf16.msra.mxu0 %v3262
      %3338 = vmatprep.subr.bf16.mxu0 0
      %3339 = vmatpush1.bf16.msra.mxu0 %v3263
      %3340 = vmatprep.subr.bf16.mxu0 0
      %3341 = vmatpush1.bf16.msra.mxu0 %v3264
      %3342 = vmatprep.subr.bf16.mxu0 0
      %3343 = vmatpush1.bf16.msra.mxu0 %v3265
      %3344 = vmatprep.subr.bf16.mxu0 0
      %3345 = vmatpush1.bf16.msra.mxu0 %v3266
      %3346 = vmatprep.subr.bf16.mxu0 0
      %3347 = vmatpush1.bf16.msra.mxu0 %v3267
      %3348 = vmatprep.mubr.bf16.mxu0 %v3050
      %3349 = vmatmul.mubr.bf16.gmra.mrb[0].mxu0 %v3049
      %v3350 = vpop.f32.mrb[0].mxu0
      %v3351 = vadd.f32 %v3122, %v3350
      %v3352 = vpop.f32.mrb[0].mxu0
      %v3353 = vpop.f32.mrb[0].mxu0
      %v3354 = vpop.f32.mrb[0].mxu0
      %3355 = vdwg.mxu0
      %3356 = vmatprep.subr.bf16.mxu0 0
      %3357 = vmatpush1.bf16.msra.mxu0 %v3268
      %3358 = vmatprep.subr.bf16.mxu0 0
      %3359 = vmatpush1.bf16.msra.mxu0 %v3269
      %3360 = vmatprep.subr.bf16.mxu0 0
      %3361 = vmatpush1.bf16.msra.mxu0 %v3270
      %3362 = vmatprep.subr.bf16.mxu0 0
      %3363 = vmatpush1.bf16.msra.mxu0 %v3271
      %3364 = vmatprep.subr.bf16.mxu0 0
      %3365 = vmatpush1.bf16.msra.mxu0 %v3272
      %3366 = vmatprep.subr.bf16.mxu0 0
      %3367 = vmatpush1.bf16.msra.mxu0 %v3273
      %3368 = vmatprep.subr.bf16.mxu0 0
      %3369 = vmatpush1.bf16.msra.mxu0 %v3274
      %3370 = vmatprep.subr.bf16.mxu0 0
      %3371 = vmatpush1.bf16.msra.mxu0 %v3275
      %3372 = vmatprep.subr.bf16.mxu0 0
      %3373 = vmatpush1.bf16.msra.mxu0 %v3276
      %3374 = vmatprep.subr.bf16.mxu0 0
      %3375 = vmatpush1.bf16.msra.mxu0 %v3277
      %3376 = vmatprep.subr.bf16.mxu0 0
      %3377 = vmatpush1.bf16.msra.mxu0 %v3278
      %3378 = vmatprep.subr.bf16.mxu0 0
      %3379 = vmatpush1.bf16.msra.mxu0 %v3279
      %3380 = vmatprep.subr.bf16.mxu0 0
      %3381 = vmatpush1.bf16.msra.mxu0 %v3280
      %3382 = vmatprep.subr.bf16.mxu0 0
      %3383 = vmatpush1.bf16.msra.mxu0 %v3281
      %3384 = vmatprep.subr.bf16.mxu0 0
      %3385 = vmatpush1.bf16.msra.mxu0 %v3282
      %3386 = vmatprep.subr.bf16.mxu0 0
      %3387 = vmatpush1.bf16.msra.mxu0 %v3283
      %3388 = vmatprep.mubr.bf16.mxu0 %v3052
      %3389 = vmatmul.mubr.bf16.gmra.mrb[0].mxu0 %v3051
      %v3390 = vpop.f32.mrb[0].mxu0
      %v3391 = vadd.f32 %v3351, %v3390
      %v3392 = vpop.f32.mrb[0].mxu0
      %v3393 = vpop.f32.mrb[0].mxu0
      %v3394 = vpop.f32.mrb[0].mxu0
      %3395 = vdwg.mxu0
      %v3396 = vmax.f32 %v3391, 0.0
      %v3397 = vpack.c.bf16 %v3396, %v3396
      %v3398 = vld [vmem:[%s7] sm:$0xf]
      %v3399 = vld [vmem:[%s7 + $0x4] sm:$0xf]
      %v3400 = vld [vmem:[%s7 + $0x8] sm:$0xf]
      %v3401 = vld [vmem:[%s7 + $0xc] sm:$0xf]
      %v3402 = vld [vmem:[%s7 + $0x10] sm:$0xf]
      %v3403 = vld [vmem:[%s7 + $0x14] sm:$0xf]
      %v3404 = vld [vmem:[%s7 + $0x18] sm:$0xf]
      %v3405 = vld [vmem:[%s7 + $0x1c] sm:$0xf]
      %v3406 = vld [vmem:[%s7 + $0x20] sm:$0xf]
      %v3407 = vld [vmem:[%s7 + $0x24] sm:$0xf]
      %v3408 = vld [vmem:[%s7 + $0x28] sm:$0xf]
      %v3409 = vld [vmem:[%s7 + $0x2c] sm:$0xf]
      %v3410 = vld [vmem:[%s7 + $0x30] sm:$0xf]
      %v3411 = vld [vmem:[%s7 + $0x34] sm:$0xf]
      %v3412 = vld [vmem:[%s7 + $0x38] sm:$0xf]
      %v3413 = vld [vmem:[%s7 + $0x3c] sm:$0xf]
      %v3414 = vld [vmem:[%s8] sm:$0x1]
      %v3416 = vlaneseq
      %v3417 = vshrl.u32 %v3416, 7
      %v3418 = vsub.s32 0, %v3417
      %v3419 = vrot.slane %v3414, %v3418
      %v3437 = vunpack.c.l.b16 %v3398
      %v3438 = vunpack.c.l.b16 %v3399
      %v3439 = vunpack.c.l.b16 %v3400
      %v3440 = vunpack.c.l.b16 %v3401
      %v3441 = vunpack.c.l.b16 %v3402
      %v3442 = vunpack.c.l.b16 %v3403
      %v3443 = vunpack.c.l.b16 %v3404
      %v3444 = vunpack.c.l.b16 %v3405
      %v3445 = vunpack.c.l.b16 %v3406
      %v3446 = vunpack.c.l.b16 %v3407
      %v3447 = vunpack.c.l.b16 %v3408
      %v3448 = vunpack.c.l.b16 %v3409
      %v3449 = vunpack.c.l.b16 %v3410
      %v3450 = vunpack.c.l.b16 %v3411
      %v3451 = vunpack.c.l.b16 %v3412
      %v3452 = vunpack.c.l.b16 %v3413
      %v3453 = vpack.c.b16 %v3438, %v3437
      %v3454 = vpack.c.b16 %v3440, %v3439
      %v3455 = vpack.c.b16 %v3442, %v3441
      %v3456 = vpack.c.b16 %v3444, %v3443
      %v3457 = vpack.c.b16 %v3446, %v3445
      %v3458 = vpack.c.b16 %v3448, %v3447
      %v3459 = vpack.c.b16 %v3450, %v3449
      %v3460 = vpack.c.b16 %v3452, %v3451
      %3469 = vmatprep.subr.bf16.mxu0 0
      %3470 = vmatpush1.bf16.msra.mxu0 %v3453
      %3471 = vmatprep.subr.bf16.mxu0 0
      %3472 = vmatpush1.bf16.msra.mxu0 %v3454
      %3473 = vmatprep.subr.bf16.mxu0 0
      %3474 = vmatpush1.bf16.msra.mxu0 %v3455
      %3475 = vmatprep.subr.bf16.mxu0 0
      %3476 = vmatpush1.bf16.msra.mxu0 %v3456
      %3477 = vmatprep.subr.bf16.mxu0 0
      %3478 = vmatpush1.bf16.msra.mxu0 %v3457
      %3479 = vmatprep.subr.bf16.mxu0 0
      %3480 = vmatpush1.bf16.msra.mxu0 %v3458
      %3481 = vmatprep.subr.bf16.mxu0 0
      %3482 = vmatpush1.bf16.msra.mxu0 %v3459
      %3483 = vmatprep.subr.bf16.mxu0 0
      %3484 = vmatpush1.bf16.msra.mxu0 %v3460
      %3485 = vmatprep.subr.bf16.mxu0 0
      %3486 = vmatpush1.bf16.msra.mxu0 0
      %3487 = vmatprep.subr.bf16.mxu0 0
      %3488 = vmatpush1.bf16.msra.mxu0 0
      %3489 = vmatprep.subr.bf16.mxu0 0
      %3490 = vmatpush1.bf16.msra.mxu0 0
      %3491 = vmatprep.subr.bf16.mxu0 0
      %3492 = vmatpush1.bf16.msra.mxu0 0
      %3493 = vmatprep.subr.bf16.mxu0 0
      %3494 = vmatpush1.bf16.msra.mxu0 0
      %3495 = vmatprep.subr.bf16.mxu0 0
      %3496 = vmatpush1.bf16.msra.mxu0 0
      %3497 = vmatprep.subr.bf16.mxu0 0
      %3498 = vmatpush1.bf16.msra.mxu0 0
      %3499 = vmatprep.subr.bf16.mxu0 0
      %3500 = vmatpush1.bf16.msra.mxu0 0
      %3501 = vmatprep.mubr.bf16.mxu0 0
      %3502 = vmatmul.mubr.bf16.gmra.mrb[0].mxu0 %v3397
      %v3503 = vpop.f32.mrb[0].mxu0
      %v3504 = vadd.f32 %v3419, %v3503
      %v3505 = vpop.f32.mrb[0].mxu0
      %v3506 = vpop.f32.mrb[0].mxu0
      %v3507 = vpop.f32.mrb[0].mxu0
      %3508 = vdwg.mxu0
      %3509 = vst [vmem:[#allocation9] sm:$0x3] %v3504
    $region57: #{simple_ff_forward.1} parent=1 // pred_fallthru
      _
    // Predicated region
    $region58: #{simple_ff_forward.1} parent=1 // pred_check
      _
    $region59: #{simple_ff_forward.1} parent=1 // pred_check_branch
      %3511 = sbr.rel (0) target = $region61
    $region60: #{simple_ff_forward.1} parent=1 // pred_region
      %s3513 = ssub.s32 32, 32
      %3514 = vsyncadd [#allocation5], %s3513
      %s3516 = sshll.u32 [#allocation9], 4
      %s3517 = int_to_ptr.vmem [resolvable:$true] %s3516
      %3519 = dma.vmem_to_hbm [thread:$0]  %s3517, 32, %s9, [#allocation5]
    $region61: #{simple_ff_forward.1} parent=1 // pred_fallthru
      _
    // Predicated region
    $region62: #{simple_ff_forward.1} parent=1 // pred_check
      _
    $region63: #{simple_ff_forward.1} parent=1 // pred_check_branch
      %3521 = sbr.rel (0) target = $region65
    $region64: #{simple_ff_forward.1} parent=1 // pred_region
      %3522 = dma.done [#allocation5], 32
    $region65: #{simple_ff_forward.1} parent=1 // pred_fallthru
      _
    %3523 = vsyncpa [#allocation4], 1
    %3524 = vsyncpa [#allocation7], 1
    %3525 = vsyncpa [#allocation5], 1

// kernel: simple_ff_forward.1
$region0: #{simple_ff_forward.1}
  #allocation0 [shape = 'u32[]', space=smem, size = 0x4, offset = 0x4, fixed_abs, tag = 'smem constant byte address 0x4 - core index']
  #allocation1 [shape = 'u32[144,128]{1,0:T(1,128)}', space=vmem, size = 0x12000, scoped, tag = 'internal scratch']
  #allocation2 [shape = 'f32[2,512]{1,0:T(2,128)}', space=vmem, size = 0x1000, scoped, tag = 'scratch operand']
  %s0 = inlined_call_operand.vmem [shape: f32[2,1024], index: 0, kind: input, shape index: {}]
  %s1 = inlined_call_operand.hbm [shape: bf16[1024,512], index: 1, kind: input, shape index: {}]
  %s2 = inlined_call_operand.vmem [shape: f32[1,512], index: 2, kind: input, shape index: {}]
  %s3 = inlined_call_operand.hbm [shape: bf16[512,512], index: 3, kind: input, shape index: {}]
  %s4 = inlined_call_operand.vmem [shape: f32[1,512], index: 4, kind: input, shape index: {}]
  %s5 = inlined_call_operand.hbm [shape: bf16[512,128], index: 5, kind: input, shape index: {}]
  %s6 = inlined_call_operand.vmem [shape: f32[1,128], index: 6, kind: input, shape index: {}]
  %s7 = inlined_call_operand.vmem [shape: bf16[128,128], index: 7, kind: input, shape index: {}]
  %s8 = inlined_call_operand.vmem [shape: f32[1,128], index: 8, kind: input, shape index: {}]
  %s9 = inlined_call_operand.hbm [shape: f32[2,128], index: 9, kind: output, shape index: {}]
  %s10 = sld [smem:[#allocation0]]
  $region66: #{simple_ff_forward.1} parent=0
    _
  %s12 = ssub.s32 1, %s10
  %s13 = scalar_select 0, %s12, %s10
  $region1: #{simple_ff_forward.1} parent=0
    #allocation3 [shape = 'u8[1048576]{0}', space=vmem, size = 0x100000, scoped, tag = 'input window, operand 1, single buffered']
    #allocation4 [shape = 's32[1]{0}', space=sflag, size = 0x4, scoped, tag = 'scoped memory for simple_ff_forward.1']
    #allocation5 [shape = 's32[1]{0}', space=sflag, size = 0x4, scoped, tag = 'scoped memory for simple_ff_forward.1']
    #allocation6 [shape = 'u8[524288]{0}', space=vmem, size = 0x80000, scoped, tag = 'input window, operand 3, single buffered']
    #allocation7 [shape = 's32[1]{0}', space=sflag, size = 0x4, scoped, tag = 'scoped memory for simple_ff_forward.1']
    #allocation8 [shape = 'u8[131072]{0}', space=vmem, size = 0x20000, scoped, tag = 'input window, operand 5, single buffered']
    #allocation9 [shape = 'u8[1024]{0}', space=vmem, size = 0x400, scoped, tag = 'output window, operand 0, single buffered']
    %14 = vsyncpa [#allocation4], 0
    %15 = vsyncpa [#allocation7], 0
    %16 = vsyncpa [#allocation5], 0
    // Predicated region
    $region2: #{simple_ff_forward.1} parent=1 // pred_check
      _
    $region3: #{simple_ff_forward.1} parent=1 // pred_check_branch
      %18 = sbr.rel (0) target = $region5
    $region4: #{simple_ff_forward.1} parent=1 // pred_region
      _
    $region5: #{simple_ff_forward.1} parent=1 // pred_fallthru
      _
    // Predicated region
    $region6: #{simple_ff_forward.1} parent=1 // pred_check
      _
    $region7: #{simple_ff_forward.1} parent=1 // pred_check_branch
      %20 = sbr.rel (0) target = $region9
    $region8: #{simple_ff_forward.1} parent=1 // pred_region
      %s22 = ssub.s32 32768, 32768
      %23 = vsyncadd [#allocation4], %s22
      %s24 = sshll.u32 [#allocation3], 4
      %s25 = int_to_ptr.vmem [resolvable:$true] %s24
      %30 = dma.hbm_to_vmem [thread:$0]  %s1, 32768, %s25, [#allocation4], 256, 256, 16
    $region9: #{simple_ff_forward.1} parent=1 // pred_fallthru
      _
    // Predicated region
    $region10: #{simple_ff_forward.1} parent=1 // pred_check
      _
    $region11: #{simple_ff_forward.1} parent=1 // pred_check_branch
      %32 = sbr.rel (0) target = $region13
    $region12: #{simple_ff_forward.1} parent=1 // pred_region
      _
    $region13: #{simple_ff_forward.1} parent=1 // pred_fallthru
      _
    // Predicated region
    $region14: #{simple_ff_forward.1} parent=1 // pred_check
      _
    $region15: #{simple_ff_forward.1} parent=1 // pred_check_branch
      %34 = sbr.rel (0) target = $region17
    $region16: #{simple_ff_forward.1} parent=1 // pred_region
      %s36 = ssub.s32 16384, 16384
      %37 = vsyncadd [#allocation7], %s36
      %s38 = sshll.u32 [#allocation6], 4
      %s39 = int_to_ptr.vmem [resolvable:$true] %s38
      %44 = dma.hbm_to_vmem [thread:$0]  %s3, 16384, %s39, [#allocation7], 256, 256, 16
    $region17: #{simple_ff_forward.1} parent=1 // pred_fallthru
      _
    // Predicated region
    $region18: #{simple_ff_forward.1} parent=1 // pred_check
      _
    $region19: #{simple_ff_forward.1} parent=1 // pred_check_branch
      %46 = sbr.rel (0) target = $region21
    $region20: #{simple_ff_forward.1} parent=1 // pred_region
      _
    $region21: #{simple_ff_forward.1} parent=1 // pred_fallthru
      _
    // Predicated region
    $region22: #{simple_ff_forward.1} parent=1 // pred_check
      _
    $region23: #{simple_ff_forward.1} parent=1 // pred_check_branch
      %48 = sbr.rel (0) target = $region25
    $region24: #{simple_ff_forward.1} parent=1 // pred_region
      %s50 = ssub.s32 4096, 4096
      %51 = vsyncadd [#allocation7], %s50
      %s52 = sshll.u32 [#allocation8], 4
      %s53 = int_to_ptr.vmem [resolvable:$true] %s52
      %58 = dma.hbm_to_vmem [thread:$0]  %s5, 4096, %s53, [#allocation7], 64, 64, 4
    $region25: #{simple_ff_forward.1} parent=1 // pred_fallthru
      _
    // Predicated region
    $region26: #{simple_ff_forward.1} parent=1 // pred_check
      _
    $region27: #{simple_ff_forward.1} parent=1 // pred_check_branch
      %60 = sbr.rel (0) target = $region29
    $region28: #{simple_ff_forward.1} parent=1 // pred_region
      _
    $region29: #{simple_ff_forward.1} parent=1 // pred_fallthru
      _
    // Predicated region
    $region30: #{simple_ff_forward.1} parent=1 // pred_check
      _
    $region31: #{simple_ff_forward.1} parent=1 // pred_check_branch
      %62 = sbr.rel (0) target = $region33
    $region32: #{simple_ff_forward.1} parent=1 // pred_region
      _
    $region33: #{simple_ff_forward.1} parent=1 // pred_fallthru
      _
    // Predicated region
    $region34: #{simple_ff_forward.1} parent=1 // pred_check
      _
    $region35: #{simple_ff_forward.1} parent=1 // pred_check_branch
      %64 = sbr.rel (0) target = $region37
    $region36: #{simple_ff_forward.1} parent=1 // pred_region
      _
    $region37: #{simple_ff_forward.1} parent=1 // pred_fallthru
      _
    // Predicated region
    $region38: #{simple_ff_forward.1} parent=1 // pred_check
      _
    $region39: #{simple_ff_forward.1} parent=1 // pred_check_branch
      %66 = sbr.rel (0) target = $region41
    $region40: #{simple_ff_forward.1} parent=1 // pred_region
      %67 = dma.done [#allocation4], 32768
    $region41: #{simple_ff_forward.1} parent=1 // pred_fallthru
      _
    // Predicated region
    $region42: #{simple_ff_forward.1} parent=1 // pred_check
      _
    $region43: #{simple_ff_forward.1} parent=1 // pred_check_branch
      %69 = sbr.rel (0) target = $region45
    $region44: #{simple_ff_forward.1} parent=1 // pred_region
      %70 = dma.done [#allocation7], 16384
    $region45: #{simple_ff_forward.1} parent=1 // pred_fallthru
      _
    // Predicated region
    $region46: #{simple_ff_forward.1} parent=1 // pred_check
      _
    $region47: #{simple_ff_forward.1} parent=1 // pred_check_branch
      %72 = sbr.rel (0) target = $region49
    $region48: #{simple_ff_forward.1} parent=1 // pred_region
      %73 = dma.done [#allocation7], 4096
    $region49: #{simple_ff_forward.1} parent=1 // pred_fallthru
      _
    %p75 = scmp.eq.s32.totalorder 0, 0
    // Predicated region
    $region50: #{simple_ff_forward.1} parent=1 // pred_check
      %p76 = pneg %p75
    $region51: #{simple_ff_forward.1} parent=1 // pred_check_branch
      %78 = sbr.rel (%p76) target = $region53
    $region52: #{simple_ff_forward.1} parent=1 // pred_region
      %79 = vst [vmem:[#allocation2] sm:$0xff] 0.0
    $region53: #{simple_ff_forward.1} parent=1 // pred_fallthru
      _
    %v80 = vld [vmem:[%s0] sm:$0xff]
    %v81 = vld [vmem:[%s0 + $0x8] sm:$0xff]
    %v84 = vcombine.high %v80, %v80
    %v86 = vunpack.c.l.s4 1983009808
    %v87 = vunpack.c.0.s8 %v86
    %v88 = vlaneseq
    %v89 = vshrl.u32 %v88, 7
    %v90 = vsub.s32 %v87, %v89
    %v91 = vrot.slane %v80, %v90
    %v93 = vunpack.c.l.s4 1983009808
    %v94 = vunpack.c.0.s8 %v93
    %v95 = vlaneseq
    %v96 = vshrl.u32 %v95, 7
    %v97 = vsub.s32 %v94, %v96
    %v98 = vrot.slane %v84, %v97
    %v99 = vcombine.high %v91, %v91
    %v100 = vcombine.high %v98, %v98
    %v101 = vcombine.high %v81, %v81
    %v103 = vunpack.c.l.s4 1983009808
    %v104 = vunpack.c.0.s8 %v103
    %v105 = vlaneseq
    %v106 = vshrl.u32 %v105, 7
    %v107 = vsub.s32 %v104, %v106
    %v108 = vrot.slane %v81, %v107
    %v110 = vunpack.c.l.s4 1983009808
    %v111 = vunpack.c.0.s8 %v110
    %v112 = vlaneseq
    %v113 = vshrl.u32 %v112, 7
    %v114 = vsub.s32 %v111, %v113
    %v115 = vrot.slane %v101, %v114
    %v116 = vcombine.high %v108, %v108
    %v117 = vcombine.high %v115, %v115
    %v126 = vpack.c.bf16 %v91, %v91
    %v127 = vpack.c.bf16 %v99, %v99
    %v128 = vpack.c.bf16 %v98, %v98
    %v129 = vpack.c.bf16 %v100, %v100
    %v130 = vpack.c.bf16 %v108, %v108
    %v131 = vpack.c.bf16 %v116, %v116
    %v132 = vpack.c.bf16 %v115, %v115
    %v133 = vpack.c.bf16 %v117, %v117
    %v134 = vld [vmem:[#allocation2] sm:$0xff]
    %v135 = vld [vmem:[#allocation3] sm:$0xff]
    %v136 = vld [vmem:[#allocation3 + $0x8] sm:$0xff]
    %v137 = vld [vmem:[#allocation3 + $0x10] sm:$0xff]
    %v138 = vld [vmem:[#allocation3 + $0x18] sm:$0xff]
    %v139 = vld [vmem:[#allocation3 + $0x20] sm:$0xff]
    %v140 = vld [vmem:[#allocation3 + $0x28] sm:$0xff]
    %v141 = vld [vmem:[#allocation3 + $0x30] sm:$0xff]
    %v142 = vld [vmem:[#allocation3 + $0x38] sm:$0xff]
    %v143 = vld [vmem:[#allocation3 + $0x40] sm:$0xff]
    %v144 = vld [vmem:[#allocation3 + $0x48] sm:$0xff]
    %v145 = vld [vmem:[#allocation3 + $0x50] sm:$0xff]
    %v146 = vld [vmem:[#allocation3 + $0x58] sm:$0xff]
    %v147 = vld [vmem:[#allocation3 + $0x60] sm:$0xff]
    %v148 = vld [vmem:[#allocation3 + $0x68] sm:$0xff]
    %v149 = vld [vmem:[#allocation3 + $0x70] sm:$0xff]
    %v150 = vld [vmem:[#allocation3 + $0x78] sm:$0xff]
    %v151 = vld [vmem:[#allocation3 + $0x80] sm:$0xff]
    %v152 = vld [vmem:[#allocation3 + $0x88] sm:$0xff]
    %v153 = vld [vmem:[#allocation3 + $0x90] sm:$0xff]
    %v154 = vld [vmem:[#allocation3 + $0x98] sm:$0xff]
    %v155 = vld [vmem:[#allocation3 + $0xa0] sm:$0xff]
    %v156 = vld [vmem:[#allocation3 + $0xa8] sm:$0xff]
    %v157 = vld [vmem:[#allocation3 + $0xb0] sm:$0xff]
    %v158 = vld [vmem:[#allocation3 + $0xb8] sm:$0xff]
    %v159 = vld [vmem:[#allocation3 + $0xc0] sm:$0xff]
    %v160 = vld [vmem:[#allocation3 + $0xc8] sm:$0xff]
    %v161 = vld [vmem:[#allocation3 + $0xd0] sm:$0xff]
    %v162 = vld [vmem:[#allocation3 + $0xd8] sm:$0xff]
    %v163 = vld [vmem:[#allocation3 + $0xe0] sm:$0xff]
    %v164 = vld [vmem:[#allocation3 + $0xe8] sm:$0xff]
    %v165 = vld [vmem:[#allocation3 + $0xf0] sm:$0xff]
    %v166 = vld [vmem:[#allocation3 + $0xf8] sm:$0xff]
    %v167 = vld [vmem:[#allocation3 + $0x100] sm:$0xff]
    %v168 = vld [vmem:[#allocation3 + $0x108] sm:$0xff]
    %v169 = vld [vmem:[#allocation3 + $0x110] sm:$0xff]
    %v170 = vld [vmem:[#allocation3 + $0x118] sm:$0xff]
    %v171 = vld [vmem:[#allocation3 + $0x120] sm:$0xff]
    %v172 = vld [vmem:[#allocation3 + $0x128] sm:$0xff]
    %v173 = vld [vmem:[#allocation3 + $0x130] sm:$0xff]
    %v174 = vld [vmem:[#allocation3 + $0x138] sm:$0xff]
    %v175 = vld [vmem:[#allocation3 + $0x140] sm:$0xff]
    %v176 = vld [vmem:[#allocation3 + $0x148] sm:$0xff]
    %v177 = vld [vmem:[#allocation3 + $0x150] sm:$0xff]
    %v178 = vld [vmem:[#allocation3 + $0x158] sm:$0xff]
    %v179 = vld [vmem:[#allocation3 + $0x160] sm:$0xff]
    %v180 = vld [vmem:[#allocation3 + $0x168] sm:$0xff]
    %v181 = vld [vmem:[#allocation3 + $0x170] sm:$0xff]
    %v182 = vld [vmem:[#allocation3 + $0x178] sm:$0xff]
    %v183 = vld [vmem:[#allocation3 + $0x180] sm:$0xff]
    %v184 = vld [vmem:[#allocation3 + $0x188] sm:$0xff]
    %v185 = vld [vmem:[#allocation3 + $0x190] sm:$0xff]
    %v186 = vld [vmem:[#allocation3 + $0x198] sm:$0xff]
    %v187 = vld [vmem:[#allocation3 + $0x1a0] sm:$0xff]
    %v188 = vld [vmem:[#allocation3 + $0x1a8] sm:$0xff]
    %v189 = vld [vmem:[#allocation3 + $0x1b0] sm:$0xff]
    %v190 = vld [vmem:[#allocation3 + $0x1b8] sm:$0xff]
    %v191 = vld [vmem:[#allocation3 + $0x1c0] sm:$0xff]
    %v192 = vld [vmem:[#allocation3 + $0x1c8] sm:$0xff]
    %v193 = vld [vmem:[#allocation3 + $0x1d0] sm:$0xff]
    %v194 = vld [vmem:[#allocation3 + $0x1d8] sm:$0xff]
    %v195 = vld [vmem:[#allocation3 + $0x1e0] sm:$0xff]
    %v196 = vld [vmem:[#allocation3 + $0x1e8] sm:$0xff]
    %v197 = vld [vmem:[#allocation3 + $0x1f0] sm:$0xff]
    %v198 = vld [vmem:[#allocation3 + $0x1f8] sm:$0xff]
    %v199 = vld [vmem:[#allocation3 + $0x200] sm:$0xff]
    %v200 = vld [vmem:[#allocation3 + $0x208] sm:$0xff]
    %v201 = vld [vmem:[#allocation3 + $0x210] sm:$0xff]
    %v202 = vld [vmem:[#allocation3 + $0x218] sm:$0xff]
    %v203 = vld [vmem:[#allocation3 + $0x220] sm:$0xff]
    %v204 = vld [vmem:[#allocation3 + $0x228] sm:$0xff]
    %v205 = vld [vmem:[#allocation3 + $0x230] sm:$0xff]
    %v206 = vld [vmem:[#allocation3 + $0x238] sm:$0xff]
    %v207 = vld [vmem:[#allocation3 + $0x240] sm:$0xff]
    %v208 = vld [vmem:[#allocation3 + $0x248] sm:$0xff]
    %v209 = vld [vmem:[#allocation3 + $0x250] sm:$0xff]
    %v210 = vld [vmem:[#allocation3 + $0x258] sm:$0xff]
    %v211 = vld [vmem:[#allocation3 + $0x260] sm:$0xff]
    %v212 = vld [vmem:[#allocation3 + $0x268] sm:$0xff]
    %v213 = vld [vmem:[#allocation3 + $0x270] sm:$0xff]
    %v214 = vld [vmem:[#allocation3 + $0x278] sm:$0xff]
    %v215 = vld [vmem:[#allocation3 + $0x280] sm:$0xff]
    %v216 = vld [vmem:[#allocation3 + $0x288] sm:$0xff]
    %v217 = vld [vmem:[#allocation3 + $0x290] sm:$0xff]
    %v218 = vld [vmem:[#allocation3 + $0x298] sm:$0xff]
    %v219 = vld [vmem:[#allocation3 + $0x2a0] sm:$0xff]
    %v220 = vld [vmem:[#allocation3 + $0x2a8] sm:$0xff]
    %v221 = vld [vmem:[#allocation3 + $0x2b0] sm:$0xff]
    %v222 = vld [vmem:[#allocation3 + $0x2b8] sm:$0xff]
    %v223 = vld [vmem:[#allocation3 + $0x2c0] sm:$0xff]
    %v224 = vld [vmem:[#allocation3 + $0x2c8] sm:$0xff]
    %v225 = vld [vmem:[#allocation3 + $0x2d0] sm:$0xff]
    %v226 = vld [vmem:[#allocation3 + $0x2d8] sm:$0xff]
    %v227 = vld [vmem:[#allocation3 + $0x2e0] sm:$0xff]
    %v228 = vld [vmem:[#allocation3 + $0x2e8] sm:$0xff]
    %v229 = vld [vmem:[#allocation3 + $0x2f0] sm:$0xff]
    %v230 = vld [vmem:[#allocation3 + $0x2f8] sm:$0xff]
    %v231 = vld [vmem:[#allocation3 + $0x300] sm:$0xff]
    %v232 = vld [vmem:[#allocation3 + $0x308] sm:$0xff]
    %v233 = vld [vmem:[#allocation3 + $0x310] sm:$0xff]
    %v234 = vld [vmem:[#allocation3 + $0x318] sm:$0xff]
    %v235 = vld [vmem:[#allocation3 + $0x320] sm:$0xff]
    %v236 = vld [vmem:[#allocation3 + $0x328] sm:$0xff]
    %v237 = vld [vmem:[#allocation3 + $0x330] sm:$0xff]
    %v238 = vld [vmem:[#allocation3 + $0x338] sm:$0xff]
    %v239 = vld [vmem:[#allocation3 + $0x340] sm:$0xff]
    %v240 = vld [vmem:[#allocation3 + $0x348] sm:$0xff]
    %v241 = vld [vmem:[#allocation3 + $0x350] sm:$0xff]
    %v242 = vld [vmem:[#allocation3 + $0x358] sm:$0xff]
    %v243 = vld [vmem:[#allocation3 + $0x360] sm:$0xff]
    %v244 = vld [vmem:[#allocation3 + $0x368] sm:$0xff]
    %v245 = vld [vmem:[#allocation3 + $0x370] sm:$0xff]
    %v246 = vld [vmem:[#allocation3 + $0x378] sm:$0xff]
    %v247 = vld [vmem:[#allocation3 + $0x380] sm:$0xff]
    %v248 = vld [vmem:[#allocation3 + $0x388] sm:$0xff]
    %v249 = vld [vmem:[#allocation3 + $0x390] sm:$0xff]
    %v250 = vld [vmem:[#allocation3 + $0x398] sm:$0xff]
    %v251 = vld [vmem:[#allocation3 + $0x3a0] sm:$0xff]
    %v252 = vld [vmem:[#allocation3 + $0x3a8] sm:$0xff]
    %v253 = vld [vmem:[#allocation3 + $0x3b0] sm:$0xff]
    %v254 = vld [vmem:[#allocation3 + $0x3b8] sm:$0xff]
    %v255 = vld [vmem:[#allocation3 + $0x3c0] sm:$0xff]
    %v256 = vld [vmem:[#allocation3 + $0x3c8] sm:$0xff]
    %v257 = vld [vmem:[#allocation3 + $0x3d0] sm:$0xff]
    %v258 = vld [vmem:[#allocation3 + $0x3d8] sm:$0xff]
    %v259 = vld [vmem:[#allocation3 + $0x3e0] sm:$0xff]
    %v260 = vld [vmem:[#allocation3 + $0x3e8] sm:$0xff]
    %v261 = vld [vmem:[#allocation3 + $0x3f0] sm:$0xff]
    %v262 = vld [vmem:[#allocation3 + $0x3f8] sm:$0xff]
    %v263 = vld [vmem:[#allocation3 + $0x400] sm:$0xff]
    %v264 = vld [vmem:[#allocation3 + $0x408] sm:$0xff]
    %v265 = vld [vmem:[#allocation3 + $0x410] sm:$0xff]
    %v266 = vld [vmem:[#allocation3 + $0x418] sm:$0xff]
    %v267 = vld [vmem:[#allocation3 + $0x420] sm:$0xff]
    %v268 = vld [vmem:[#allocation3 + $0x428] sm:$0xff]
    %v269 = vld [vmem:[#allocation3 + $0x430] sm:$0xff]
    %v270 = vld [vmem:[#allocation3 + $0x438] sm:$0xff]
    %v271 = vld [vmem:[#allocation3 + $0x440] sm:$0xff]
    %v272 = vld [vmem:[#allocation3 + $0x448] sm:$0xff]
    %v273 = vld [vmem:[#allocation3 + $0x450] sm:$0xff]
    %v274 = vld [vmem:[#allocation3 + $0x458] sm:$0xff]
    %v275 = vld [vmem:[#allocation3 + $0x460] sm:$0xff]
    %v276 = vld [vmem:[#allocation3 + $0x468] sm:$0xff]
    %v277 = vld [vmem:[#allocation3 + $0x470] sm:$0xff]
    %v278 = vld [vmem:[#allocation3 + $0x478] sm:$0xff]
    %v279 = vld [vmem:[#allocation3 + $0x480] sm:$0xff]
    %v280 = vld [vmem:[#allocation3 + $0x488] sm:$0xff]
    %v281 = vld [vmem:[#allocation3 + $0x490] sm:$0xff]
    %v282 = vld [vmem:[#allocation3 + $0x498] sm:$0xff]
    %v283 = vld [vmem:[#allocation3 + $0x4a0] sm:$0xff]
    %v284 = vld [vmem:[#allocation3 + $0x4a8] sm:$0xff]
    %v285 = vld [vmem:[#allocation3 + $0x4b0] sm:$0xff]
    %v286 = vld [vmem:[#allocation3 + $0x4b8] sm:$0xff]
    %v287 = vld [vmem:[#allocation3 + $0x4c0] sm:$0xff]
    %v288 = vld [vmem:[#allocation3 + $0x4c8] sm:$0xff]
    %v289 = vld [vmem:[#allocation3 + $0x4d0] sm:$0xff]
    %v290 = vld [vmem:[#allocation3 + $0x4d8] sm:$0xff]
    %v291 = vld [vmem:[#allocation3 + $0x4e0] sm:$0xff]
    %v292 = vld [vmem:[#allocation3 + $0x4e8] sm:$0xff]
    %v293 = vld [vmem:[#allocation3 + $0x4f0] sm:$0xff]
    %v294 = vld [vmem:[#allocation3 + $0x4f8] sm:$0xff]
    %v295 = vld [vmem:[#allocation3 + $0x500] sm:$0xff]
    %v296 = vld [vmem:[#allocation3 + $0x508] sm:$0xff]
    %v297 = vld [vmem:[#allocation3 + $0x510] sm:$0xff]
    %v298 = vld [vmem:[#allocation3 + $0x518] sm:$0xff]
    %v299 = vld [vmem:[#allocation3 + $0x520] sm:$0xff]
    %v300 = vld [vmem:[#allocation3 + $0x528] sm:$0xff]
    %v301 = vld [vmem:[#allocation3 + $0x530] sm:$0xff]
    %v302 = vld [vmem:[#allocation3 + $0x538] sm:$0xff]
    %v303 = vld [vmem:[#allocation3 + $0x540] sm:$0xff]
    %v304 = vld [vmem:[#allocation3 + $0x548] sm:$0xff]
    %v305 = vld [vmem:[#allocation3 + $0x550] sm:$0xff]
    %v306 = vld [vmem:[#allocation3 + $0x558] sm:$0xff]
    %v307 = vld [vmem:[#allocation3 + $0x560] sm:$0xff]
    %v308 = vld [vmem:[#allocation3 + $0x568] sm:$0xff]
    %v309 = vld [vmem:[#allocation3 + $0x570] sm:$0xff]
    %v310 = vld [vmem:[#allocation3 + $0x578] sm:$0xff]
    %v311 = vld [vmem:[#allocation3 + $0x580] sm:$0xff]
    %v312 = vld [vmem:[#allocation3 + $0x588] sm:$0xff]
    %v313 = vld [vmem:[#allocation3 + $0x590] sm:$0xff]
    %v314 = vld [vmem:[#allocation3 + $0x598] sm:$0xff]
    %v315 = vld [vmem:[#allocation3 + $0x5a0] sm:$0xff]
    %v316 = vld [vmem:[#allocation3 + $0x5a8] sm:$0xff]
    %v317 = vld [vmem:[#allocation3 + $0x5b0] sm:$0xff]
    %v318 = vld [vmem:[#allocation3 + $0x5b8] sm:$0xff]
    %v319 = vld [vmem:[#allocation3 + $0x5c0] sm:$0xff]
    %v320 = vld [vmem:[#allocation3 + $0x5c8] sm:$0xff]
    %v321 = vld [vmem:[#allocation3 + $0x5d0] sm:$0xff]
    %v322 = vld [vmem:[#allocation3 + $0x5d8] sm:$0xff]
    %v323 = vld [vmem:[#allocation3 + $0x5e0] sm:$0xff]
    %v324 = vld [vmem:[#allocation3 + $0x5e8] sm:$0xff]
    %v325 = vld [vmem:[#allocation3 + $0x5f0] sm:$0xff]
    %v326 = vld [vmem:[#allocation3 + $0x5f8] sm:$0xff]
    %v327 = vld [vmem:[#allocation3 + $0x600] sm:$0xff]
    %v328 = vld [vmem:[#allocation3 + $0x608] sm:$0xff]
    %v329 = vld [vmem:[#allocation3 + $0x610] sm:$0xff]
    %v330 = vld [vmem:[#allocation3 + $0x618] sm:$0xff]
    %v331 = vld [vmem:[#allocation3 + $0x620] sm:$0xff]
    %v332 = vld [vmem:[#allocation3 + $0x628] sm:$0xff]
    %v333 = vld [vmem:[#allocation3 + $0x630] sm:$0xff]
    %v334 = vld [vmem:[#allocation3 + $0x638] sm:$0xff]
    %v335 = vld [vmem:[#allocation3 + $0x640] sm:$0xff]
    %v336 = vld [vmem:[#allocation3 + $0x648] sm:$0xff]
    %v337 = vld [vmem:[#allocation3 + $0x650] sm:$0xff]
    %v338 = vld [vmem:[#allocation3 + $0x658] sm:$0xff]
    %v339 = vld [vmem:[#allocation3 + $0x660] sm:$0xff]
    %v340 = vld [vmem:[#allocation3 + $0x668] sm:$0xff]
    %v341 = vld [vmem:[#allocation3 + $0x670] sm:$0xff]
    %v342 = vld [vmem:[#allocation3 + $0x678] sm:$0xff]
    %v343 = vld [vmem:[#allocation3 + $0x680] sm:$0xff]
    %v344 = vld [vmem:[#allocation3 + $0x688] sm:$0xff]
    %v345 = vld [vmem:[#allocation3 + $0x690] sm:$0xff]
    %v346 = vld [vmem:[#allocation3 + $0x698] sm:$0xff]
    %v347 = vld [vmem:[#allocation3 + $0x6a0] sm:$0xff]
    %v348 = vld [vmem:[#allocation3 + $0x6a8] sm:$0xff]
    %v349 = vld [vmem:[#allocation3 + $0x6b0] sm:$0xff]
    %v350 = vld [vmem:[#allocation3 + $0x6b8] sm:$0xff]
    %v351 = vld [vmem:[#allocation3 + $0x6c0] sm:$0xff]
    %v352 = vld [vmem:[#allocation3 + $0x6c8] sm:$0xff]
    %v353 = vld [vmem:[#allocation3 + $0x6d0] sm:$0xff]
    %v354 = vld [vmem:[#allocation3 + $0x6d8] sm:$0xff]
    %v355 = vld [vmem:[#allocation3 + $0x6e0] sm:$0xff]
    %v356 = vld [vmem:[#allocation3 + $0x6e8] sm:$0xff]
    %v357 = vld [vmem:[#allocation3 + $0x6f0] sm:$0xff]
    %v358 = vld [vmem:[#allocation3 + $0x6f8] sm:$0xff]
    %v359 = vld [vmem:[#allocation3 + $0x700] sm:$0xff]
    %v360 = vld [vmem:[#allocation3 + $0x708] sm:$0xff]
    %v361 = vld [vmem:[#allocation3 + $0x710] sm:$0xff]
    %v362 = vld [vmem:[#allocation3 + $0x718] sm:$0xff]
    %v363 = vld [vmem:[#allocation3 + $0x720] sm:$0xff]
    %v364 = vld [vmem:[#allocation3 + $0x728] sm:$0xff]
    %v365 = vld [vmem:[#allocation3 + $0x730] sm:$0xff]
    %v366 = vld [vmem:[#allocation3 + $0x738] sm:$0xff]
    %v367 = vld [vmem:[#allocation3 + $0x740] sm:$0xff]
    %v368 = vld [vmem:[#allocation3 + $0x748] sm:$0xff]
    %v369 = vld [vmem:[#allocation3 + $0x750] sm:$0xff]
    %v370 = vld [vmem:[#allocation3 + $0x758] sm:$0xff]
    %v371 = vld [vmem:[#allocation3 + $0x760] sm:$0xff]
    %v372 = vld [vmem:[#allocation3 + $0x768] sm:$0xff]
    %v373 = vld [vmem:[#allocation3 + $0x770] sm:$0xff]
    %v374 = vld [vmem:[#allocation3 + $0x778] sm:$0xff]
    %v375 = vld [vmem:[#allocation3 + $0x780] sm:$0xff]
    %v376 = vld [vmem:[#allocation3 + $0x788] sm:$0xff]
    %v377 = vld [vmem:[#allocation3 + $0x790] sm:$0xff]
    %v378 = vld [vmem:[#allocation3 + $0x798] sm:$0xff]
    %v379 = vld [vmem:[#allocation3 + $0x7a0] sm:$0xff]
    %v380 = vld [vmem:[#allocation3 + $0x7a8] sm:$0xff]
    %v381 = vld [vmem:[#allocation3 + $0x7b0] sm:$0xff]
    %v382 = vld [vmem:[#allocation3 + $0x7b8] sm:$0xff]
    %v383 = vld [vmem:[#allocation3 + $0x7c0] sm:$0xff]
    %v384 = vld [vmem:[#allocation3 + $0x7c8] sm:$0xff]
    %v385 = vld [vmem:[#allocation3 + $0x7d0] sm:$0xff]
    %v386 = vld [vmem:[#allocation3 + $0x7d8] sm:$0xff]
    %v387 = vld [vmem:[#allocation3 + $0x7e0] sm:$0xff]
    %v388 = vld [vmem:[#allocation3 + $0x7e8] sm:$0xff]
    %v389 = vld [vmem:[#allocation3 + $0x7f0] sm:$0xff]
    %v390 = vld [vmem:[#allocation3 + $0x7f8] sm:$0xff]
    %v647 = vunpack.c.l.b16 %v135
    %v648 = vunpack.c.h.b16 %v135
    %v649 = vunpack.c.l.b16 %v136
    %v650 = vunpack.c.h.b16 %v136
    %v651 = vunpack.c.l.b16 %v137
    %v652 = vunpack.c.h.b16 %v137
    %v653 = vunpack.c.l.b16 %v138
    %v654 = vunpack.c.h.b16 %v138
    %v655 = vunpack.c.l.b16 %v139
    %v656 = vunpack.c.h.b16 %v139
    %v657 = vunpack.c.l.b16 %v140
    %v658 = vunpack.c.h.b16 %v140
    %v659 = vunpack.c.l.b16 %v141
    %v660 = vunpack.c.h.b16 %v141
    %v661 = vunpack.c.l.b16 %v142
    %v662 = vunpack.c.h.b16 %v142
    %v663 = vunpack.c.l.b16 %v143
    %v664 = vunpack.c.h.b16 %v143
    %v665 = vunpack.c.l.b16 %v144
    %v666 = vunpack.c.h.b16 %v144
    %v667 = vunpack.c.l.b16 %v145
    %v668 = vunpack.c.h.b16 %v145
    %v669 = vunpack.c.l.b16 %v146
    %v670 = vunpack.c.h.b16 %v146
    %v671 = vunpack.c.l.b16 %v147
    %v672 = vunpack.c.h.b16 %v147
    %v673 = vunpack.c.l.b16 %v148
    %v674 = vunpack.c.h.b16 %v148
    %v675 = vunpack.c.l.b16 %v149
    %v676 = vunpack.c.h.b16 %v149
    %v677 = vunpack.c.l.b16 %v150
    %v678 = vunpack.c.h.b16 %v150
    %v679 = vunpack.c.l.b16 %v151
    %v680 = vunpack.c.h.b16 %v151
    %v681 = vunpack.c.l.b16 %v152
    %v682 = vunpack.c.h.b16 %v152
    %v683 = vunpack.c.l.b16 %v153
    %v684 = vunpack.c.h.b16 %v153
    %v685 = vunpack.c.l.b16 %v154
    %v686 = vunpack.c.h.b16 %v154
    %v687 = vunpack.c.l.b16 %v155
    %v688 = vunpack.c.h.b16 %v155
    %v689 = vunpack.c.l.b16 %v156
    %v690 = vunpack.c.h.b16 %v156
    %v691 = vunpack.c.l.b16 %v157
    %v692 = vunpack.c.h.b16 %v157
    %v693 = vunpack.c.l.b16 %v158
    %v694 = vunpack.c.h.b16 %v158
    %v695 = vunpack.c.l.b16 %v159
    %v696 = vunpack.c.h.b16 %v159
    %v697 = vunpack.c.l.b16 %v160
    %v698 = vunpack.c.h.b16 %v160
    %v699 = vunpack.c.l.b16 %v161
    %v700 = vunpack.c.h.b16 %v161
    %v701 = vunpack.c.l.b16 %v162
    %v702 = vunpack.c.h.b16 %v162
    %v703 = vunpack.c.l.b16 %v163
    %v704 = vunpack.c.h.b16 %v163
    %v705 = vunpack.c.l.b16 %v164
    %v706 = vunpack.c.h.b16 %v164
    %v707 = vunpack.c.l.b16 %v165
    %v708 = vunpack.c.h.b16 %v165
    %v709 = vunpack.c.l.b16 %v166
    %v710 = vunpack.c.h.b16 %v166
    %v711 = vunpack.c.l.b16 %v167
    %v712 = vunpack.c.h.b16 %v167
    %v713 = vunpack.c.l.b16 %v168
    %v714 = vunpack.c.h.b16 %v168
    %v715 = vunpack.c.l.b16 %v169
    %v716 = vunpack.c.h.b16 %v169
    %v717 = vunpack.c.l.b16 %v170
    %v718 = vunpack.c.h.b16 %v170
    %v719 = vunpack.c.l.b16 %v171
    %v720 = vunpack.c.h.b16 %v171
    %v721 = vunpack.c.l.b16 %v172
    %v722 = vunpack.c.h.b16 %v172
    %v723 = vunpack.c.l.b16 %v173
    %v724 = vunpack.c.h.b16 %v173
    %v725 = vunpack.c.l.b16 %v174
    %v726 = vunpack.c.h.b16 %v174
    %v727 = vunpack.c.l.b16 %v175
    %v728 = vunpack.c.h.b16 %v175
    %v729 = vunpack.c.l.b16 %v176
    %v730 = vunpack.c.h.b16 %v176
    %v731 = vunpack.c.l.b16 %v177
    %v732 = vunpack.c.h.b16 %v177
    %v733 = vunpack.c.l.b16 %v178
    %v734 = vunpack.c.h.b16 %v178
    %v735 = vunpack.c.l.b16 %v179
    %v736 = vunpack.c.h.b16 %v179
    %v737 = vunpack.c.l.b16 %v180
    %v738 = vunpack.c.h.b16 %v180
    %v739 = vunpack.c.l.b16 %v181
    %v740 = vunpack.c.h.b16 %v181
    %v741 = vunpack.c.l.b16 %v182
    %v742 = vunpack.c.h.b16 %v182
    %v743 = vunpack.c.l.b16 %v183
    %v744 = vunpack.c.h.b16 %v183
    %v745 = vunpack.c.l.b16 %v184
    %v746 = vunpack.c.h.b16 %v184
    %v747 = vunpack.c.l.b16 %v185
    %v748 = vunpack.c.h.b16 %v185
    %v749 = vunpack.c.l.b16 %v186
    %v750 = vunpack.c.h.b16 %v186
    %v751 = vunpack.c.l.b16 %v187
    %v752 = vunpack.c.h.b16 %v187
    %v753 = vunpack.c.l.b16 %v188
    %v754 = vunpack.c.h.b16 %v188
    %v755 = vunpack.c.l.b16 %v189
    %v756 = vunpack.c.h.b16 %v189
    %v757 = vunpack.c.l.b16 %v190
    %v758 = vunpack.c.h.b16 %v190
    %v759 = vunpack.c.l.b16 %v191
    %v760 = vunpack.c.h.b16 %v191
    %v761 = vunpack.c.l.b16 %v192
    %v762 = vunpack.c.h.b16 %v192
    %v763 = vunpack.c.l.b16 %v193
    %v764 = vunpack.c.h.b16 %v193
    %v765 = vunpack.c.l.b16 %v194
    %v766 = vunpack.c.h.b16 %v194
    %v767 = vunpack.c.l.b16 %v195
    %v768 = vunpack.c.h.b16 %v195
    %v769 = vunpack.c.l.b16 %v196
    %v770 = vunpack.c.h.b16 %v196
    %v771 = vunpack.c.l.b16 %v197
    %v772 = vunpack.c.h.b16 %v197
    %v773 = vunpack.c.l.b16 %v198
    %v774 = vunpack.c.h.b16 %v198
    %v775 = vunpack.c.l.b16 %v199
    %v776 = vunpack.c.h.b16 %v199
    %v777 = vunpack.c.l.b16 %v200
    %v778 = vunpack.c.h.b16 %v200
    %v779 = vunpack.c.l.b16 %v201
    %v780 = vunpack.c.h.b16 %v201
    %v781 = vunpack.c.l.b16 %v202
    %v782 = vunpack.c.h.b16 %v202
    %v783 = vunpack.c.l.b16 %v203
    %v784 = vunpack.c.h.b16 %v203
    %v785 = vunpack.c.l.b16 %v204
    %v786 = vunpack.c.h.b16 %v204
    %v787 = vunpack.c.l.b16 %v205
    %v788 = vunpack.c.h.b16 %v205
    %v789 = vunpack.c.l.b16 %v206
    %v790 = vunpack.c.h.b16 %v206
    %v791 = vunpack.c.l.b16 %v207
    %v792 = vunpack.c.h.b16 %v207
    %v793 = vunpack.c.l.b16 %v208
    %v794 = vunpack.c.h.b16 %v208
    %v795 = vunpack.c.l.b16 %v209
    %v796 = vunpack.c.h.b16 %v209
    %v797 = vunpack.c.l.b16 %v210
    %v798 = vunpack.c.h.b16 %v210
    %v799 = vunpack.c.l.b16 %v211
    %v800 = vunpack.c.h.b16 %v211
    %v801 = vunpack.c.l.b16 %v212
    %v802 = vunpack.c.h.b16 %v212
    %v803 = vunpack.c.l.b16 %v213
    %v804 = vunpack.c.h.b16 %v213
    %v805 = vunpack.c.l.b16 %v214
    %v806 = vunpack.c.h.b16 %v214
    %v807 = vunpack.c.l.b16 %v215
    %v808 = vunpack.c.h.b16 %v215
    %v809 = vunpack.c.l.b16 %v216
    %v810 = vunpack.c.h.b16 %v216
    %v811 = vunpack.c.l.b16 %v217
    %v812 = vunpack.c.h.b16 %v217
    %v813 = vunpack.c.l.b16 %v218
    %v814 = vunpack.c.h.b16 %v218
    %v815 = vunpack.c.l.b16 %v219
    %v816 = vunpack.c.h.b16 %v219
    %v817 = vunpack.c.l.b16 %v220
    %v818 = vunpack.c.h.b16 %v220
    %v819 = vunpack.c.l.b16 %v221
    %v820 = vunpack.c.h.b16 %v221
    %v821 = vunpack.c.l.b16 %v222
    %v822 = vunpack.c.h.b16 %v222
    %v823 = vunpack.c.l.b16 %v223
    %v824 = vunpack.c.h.b16 %v223
    %v825 = vunpack.c.l.b16 %v224
    %v826 = vunpack.c.h.b16 %v224
    %v827 = vunpack.c.l.b16 %v225
    %v828 = vunpack.c.h.b16 %v225
    %v829 = vunpack.c.l.b16 %v226
    %v830 = vunpack.c.h.b16 %v226
    %v831 = vunpack.c.l.b16 %v227
    %v832 = vunpack.c.h.b16 %v227
    %v833 = vunpack.c.l.b16 %v228
    %v834 = vunpack.c.h.b16 %v228
    %v835 = vunpack.c.l.b16 %v229
    %v836 = vunpack.c.h.b16 %v229
    %v837 = vunpack.c.l.b16 %v230
    %v838 = vunpack.c.h.b16 %v230
    %v839 = vunpack.c.l.b16 %v231
    %v840 = vunpack.c.h.b16 %v231
    %v841 = vunpack.c.l.b16 %v232
    %v842 = vunpack.c.h.b16 %v232
    %v843 = vunpack.c.l.b16 %v233
    %v844 = vunpack.c.h.b16 %v233
    %v845 = vunpack.c.l.b16 %v234
    %v846 = vunpack.c.h.b16 %v234
    %v847 = vunpack.c.l.b16 %v235
    %v848 = vunpack.c.h.b16 %v235
    %v849 = vunpack.c.l.b16 %v236
    %v850 = vunpack.c.h.b16 %v236
    %v851 = vunpack.c.l.b16 %v237
    %v852 = vunpack.c.h.b16 %v237
    %v853 = vunpack.c.l.b16 %v238
    %v854 = vunpack.c.h.b16 %v238
    %v855 = vunpack.c.l.b16 %v239
    %v856 = vunpack.c.h.b16 %v239
    %v857 = vunpack.c.l.b16 %v240
    %v858 = vunpack.c.h.b16 %v240
    %v859 = vunpack.c.l.b16 %v241
    %v860 = vunpack.c.h.b16 %v241
    %v861 = vunpack.c.l.b16 %v242
    %v862 = vunpack.c.h.b16 %v242
    %v863 = vunpack.c.l.b16 %v243
    %v864 = vunpack.c.h.b16 %v243
    %v865 = vunpack.c.l.b16 %v244
    %v866 = vunpack.c.h.b16 %v244
    %v867 = vunpack.c.l.b16 %v245
    %v868 = vunpack.c.h.b16 %v245
    %v869 = vunpack.c.l.b16 %v246
    %v870 = vunpack.c.h.b16 %v246
    %v871 = vunpack.c.l.b16 %v247
    %v872 = vunpack.c.h.b16 %v247
    %v873 = vunpack.c.l.b16 %v248
    %v874 = vunpack.c.h.b16 %v248
    %v875 = vunpack.c.l.b16 %v249
    %v876 = vunpack.c.h.b16 %v249
    %v877 = vunpack.c.l.b16 %v250
    %v878 = vunpack.c.h.b16 %v250
    %v879 = vunpack.c.l.b16 %v251
    %v880 = vunpack.c.h.b16 %v251
    %v881 = vunpack.c.l.b16 %v252
    %v882 = vunpack.c.h.b16 %v252
    %v883 = vunpack.c.l.b16 %v253
    %v884 = vunpack.c.h.b16 %v253
    %v885 = vunpack.c.l.b16 %v254
    %v886 = vunpack.c.h.b16 %v254
    %v887 = vunpack.c.l.b16 %v255
    %v888 = vunpack.c.h.b16 %v255
    %v889 = vunpack.c.l.b16 %v256
    %v890 = vunpack.c.h.b16 %v256
    %v891 = vunpack.c.l.b16 %v257
    %v892 = vunpack.c.h.b16 %v257
    %v893 = vunpack.c.l.b16 %v258
    %v894 = vunpack.c.h.b16 %v258
    %v895 = vunpack.c.l.b16 %v259
    %v896 = vunpack.c.h.b16 %v259
    %v897 = vunpack.c.l.b16 %v260
    %v898 = vunpack.c.h.b16 %v260
    %v899 = vunpack.c.l.b16 %v261
    %v900 = vunpack.c.h.b16 %v261
    %v901 = vunpack.c.l.b16 %v262
    %v902 = vunpack.c.h.b16 %v262
    %v903 = vunpack.c.l.b16 %v263
    %v904 = vunpack.c.h.b16 %v263
    %v905 = vunpack.c.l.b16 %v264
    %v906 = vunpack.c.h.b16 %v264
    %v907 = vunpack.c.l.b16 %v265
    %v908 = vunpack.c.h.b16 %v265
    %v909 = vunpack.c.l.b16 %v266
    %v910 = vunpack.c.h.b16 %v266
    %v911 = vunpack.c.l.b16 %v267
    %v912 = vunpack.c.h.b16 %v267
    %v913 = vunpack.c.l.b16 %v268
    %v914 = vunpack.c.h.b16 %v268
    %v915 = vunpack.c.l.b16 %v269
    %v916 = vunpack.c.h.b16 %v269
    %v917 = vunpack.c.l.b16 %v270
    %v918 = vunpack.c.h.b16 %v270
    %v919 = vunpack.c.l.b16 %v271
    %v920 = vunpack.c.h.b16 %v271
    %v921 = vunpack.c.l.b16 %v272
    %v922 = vunpack.c.h.b16 %v272
    %v923 = vunpack.c.l.b16 %v273
    %v924 = vunpack.c.h.b16 %v273
    %v925 = vunpack.c.l.b16 %v274
    %v926 = vunpack.c.h.b16 %v274
    %v927 = vunpack.c.l.b16 %v275
    %v928 = vunpack.c.h.b16 %v275
    %v929 = vunpack.c.l.b16 %v276
    %v930 = vunpack.c.h.b16 %v276
    %v931 = vunpack.c.l.b16 %v277
    %v932 = vunpack.c.h.b16 %v277
    %v933 = vunpack.c.l.b16 %v278
    %v934 = vunpack.c.h.b16 %v278
    %v935 = vunpack.c.l.b16 %v279
    %v936 = vunpack.c.h.b16 %v279
    %v937 = vunpack.c.l.b16 %v280
    %v938 = vunpack.c.h.b16 %v280
    %v939 = vunpack.c.l.b16 %v281
    %v940 = vunpack.c.h.b16 %v281
    %v941 = vunpack.c.l.b16 %v282
    %v942 = vunpack.c.h.b16 %v282
    %v943 = vunpack.c.l.b16 %v283
    %v944 = vunpack.c.h.b16 %v283
    %v945 = vunpack.c.l.b16 %v284
    %v946 = vunpack.c.h.b16 %v284
    %v947 = vunpack.c.l.b16 %v285
    %v948 = vunpack.c.h.b16 %v285
    %v949 = vunpack.c.l.b16 %v286
    %v950 = vunpack.c.h.b16 %v286
    %v951 = vunpack.c.l.b16 %v287
    %v952 = vunpack.c.h.b16 %v287
    %v953 = vunpack.c.l.b16 %v288
    %v954 = vunpack.c.h.b16 %v288
    %v955 = vunpack.c.l.b16 %v289
    %v956 = vunpack.c.h.b16 %v289
    %v957 = vunpack.c.l.b16 %v290
    %v958 = vunpack.c.h.b16 %v290
    %v959 = vunpack.c.l.b16 %v291
    %v960 = vunpack.c.h.b16 %v291
    %v961 = vunpack.c.l.b16 %v292
    %v962 = vunpack.c.h.b16 %v292
    %v963 = vunpack.c.l.b16 %v293
    %v964 = vunpack.c.h.b16 %v293
    %v965 = vunpack.c.l.b16 %v294
    %v966 = vunpack.c.h.b16 %v294
    %v967 = vunpack.c.l.b16 %v295
    %v968 = vunpack.c.h.b16 %v295
    %v969 = vunpack.c.l.b16 %v296
    %v970 = vunpack.c.h.b16 %v296
    %v971 = vunpack.c.l.b16 %v297
    %v972 = vunpack.c.h.b16 %v297
    %v973 = vunpack.c.l.b16 %v298
    %v974 = vunpack.c.h.b16 %v298
    %v975 = vunpack.c.l.b16 %v299
    %v976 = vunpack.c.h.b16 %v299
    %v977 = vunpack.c.l.b16 %v300
    %v978 = vunpack.c.h.b16 %v300
    %v979 = vunpack.c.l.b16 %v301
    %v980 = vunpack.c.h.b16 %v301
    %v981 = vunpack.c.l.b16 %v302
    %v982 = vunpack.c.h.b16 %v302
    %v983 = vunpack.c.l.b16 %v303
    %v984 = vunpack.c.h.b16 %v303
    %v985 = vunpack.c.l.b16 %v304
    %v986 = vunpack.c.h.b16 %v304
    %v987 = vunpack.c.l.b16 %v305
    %v988 = vunpack.c.h.b16 %v305
    %v989 = vunpack.c.l.b16 %v306
    %v990 = vunpack.c.h.b16 %v306
    %v991 = vunpack.c.l.b16 %v307
    %v992 = vunpack.c.h.b16 %v307
    %v993 = vunpack.c.l.b16 %v308
    %v994 = vunpack.c.h.b16 %v308
    %v995 = vunpack.c.l.b16 %v309
    %v996 = vunpack.c.h.b16 %v309
    %v997 = vunpack.c.l.b16 %v310
    %v998 = vunpack.c.h.b16 %v310
    %v999 = vunpack.c.l.b16 %v311
    %v1000 = vunpack.c.h.b16 %v311
    %v1001 = vunpack.c.l.b16 %v312
    %v1002 = vunpack.c.h.b16 %v312
    %v1003 = vunpack.c.l.b16 %v313
    %v1004 = vunpack.c.h.b16 %v313
    %v1005 = vunpack.c.l.b16 %v314
    %v1006 = vunpack.c.h.b16 %v314
    %v1007 = vunpack.c.l.b16 %v315
    %v1008 = vunpack.c.h.b16 %v315
    %v1009 = vunpack.c.l.b16 %v316
    %v1010 = vunpack.c.h.b16 %v316
    %v1011 = vunpack.c.l.b16 %v317
    %v1012 = vunpack.c.h.b16 %v317
    %v1013 = vunpack.c.l.b16 %v318
    %v1014 = vunpack.c.h.b16 %v318
    %v1015 = vunpack.c.l.b16 %v319
    %v1016 = vunpack.c.h.b16 %v319
    %v1017 = vunpack.c.l.b16 %v320
    %v1018 = vunpack.c.h.b16 %v320
    %v1019 = vunpack.c.l.b16 %v321
    %v1020 = vunpack.c.h.b16 %v321
    %v1021 = vunpack.c.l.b16 %v322
    %v1022 = vunpack.c.h.b16 %v322
    %v1023 = vunpack.c.l.b16 %v323
    %v1024 = vunpack.c.h.b16 %v323
    %v1025 = vunpack.c.l.b16 %v324
    %v1026 = vunpack.c.h.b16 %v324
    %v1027 = vunpack.c.l.b16 %v325
    %v1028 = vunpack.c.h.b16 %v325
    %v1029 = vunpack.c.l.b16 %v326
    %v1030 = vunpack.c.h.b16 %v326
    %v1031 = vunpack.c.l.b16 %v327
    %v1032 = vunpack.c.h.b16 %v327
    %v1033 = vunpack.c.l.b16 %v328
    %v1034 = vunpack.c.h.b16 %v328
    %v1035 = vunpack.c.l.b16 %v329
    %v1036 = vunpack.c.h.b16 %v329
    %v1037 = vunpack.c.l.b16 %v330
    %v1038 = vunpack.c.h.b16 %v330
    %v1039 = vunpack.c.l.b16 %v331
    %v1040 = vunpack.c.h.b16 %v331
    %v1041 = vunpack.c.l.b16 %v332
    %v1042 = vunpack.c.h.b16 %v332
    %v1043 = vunpack.c.l.b16 %v333
    %v1044 = vunpack.c.h.b16 %v333
    %v1045 = vunpack.c.l.b16 %v334
    %v1046 = vunpack.c.h.b16 %v334
    %v1047 = vunpack.c.l.b16 %v335
    %v1048 = vunpack.c.h.b16 %v335
    %v1049 = vunpack.c.l.b16 %v336
    %v1050 = vunpack.c.h.b16 %v336
    %v1051 = vunpack.c.l.b16 %v337
    %v1052 = vunpack.c.h.b16 %v337
    %v1053 = vunpack.c.l.b16 %v338
    %v1054 = vunpack.c.h.b16 %v338
    %v1055 = vunpack.c.l.b16 %v339
    %v1056 = vunpack.c.h.b16 %v339
    %v1057 = vunpack.c.l.b16 %v340
    %v1058 = vunpack.c.h.b16 %v340
    %v1059 = vunpack.c.l.b16 %v341
    %v1060 = vunpack.c.h.b16 %v341
    %v1061 = vunpack.c.l.b16 %v342
    %v1062 = vunpack.c.h.b16 %v342
    %v1063 = vunpack.c.l.b16 %v343
    %v1064 = vunpack.c.h.b16 %v343
    %v1065 = vunpack.c.l.b16 %v344
    %v1066 = vunpack.c.h.b16 %v344
    %v1067 = vunpack.c.l.b16 %v345
    %v1068 = vunpack.c.h.b16 %v345
    %v1069 = vunpack.c.l.b16 %v346
    %v1070 = vunpack.c.h.b16 %v346
    %v1071 = vunpack.c.l.b16 %v347
    %v1072 = vunpack.c.h.b16 %v347
    %v1073 = vunpack.c.l.b16 %v348
    %v1074 = vunpack.c.h.b16 %v348
    %v1075 = vunpack.c.l.b16 %v349
    %v1076 = vunpack.c.h.b16 %v349
    %v1077 = vunpack.c.l.b16 %v350
    %v1078 = vunpack.c.h.b16 %v350
    %v1079 = vunpack.c.l.b16 %v351
    %v1080 = vunpack.c.h.b16 %v351
    %v1081 = vunpack.c.l.b16 %v352
    %v1082 = vunpack.c.h.b16 %v352
    %v1083 = vunpack.c.l.b16 %v353
    %v1084 = vunpack.c.h.b16 %v353
    %v1085 = vunpack.c.l.b16 %v354
    %v1086 = vunpack.c.h.b16 %v354
    %v1087 = vunpack.c.l.b16 %v355
    %v1088 = vunpack.c.h.b16 %v355
    %v1089 = vunpack.c.l.b16 %v356
    %v1090 = vunpack.c.h.b16 %v356
    %v1091 = vunpack.c.l.b16 %v357
    %v1092 = vunpack.c.h.b16 %v357
    %v1093 = vunpack.c.l.b16 %v358
    %v1094 = vunpack.c.h.b16 %v358
    %v1095 = vunpack.c.l.b16 %v359
    %v1096 = vunpack.c.h.b16 %v359
    %v1097 = vunpack.c.l.b16 %v360
    %v1098 = vunpack.c.h.b16 %v360
    %v1099 = vunpack.c.l.b16 %v361
    %v1100 = vunpack.c.h.b16 %v361
    %v1101 = vunpack.c.l.b16 %v362
    %v1102 = vunpack.c.h.b16 %v362
    %v1103 = vunpack.c.l.b16 %v363
    %v1104 = vunpack.c.h.b16 %v363
    %v1105 = vunpack.c.l.b16 %v364
    %v1106 = vunpack.c.h.b16 %v364
    %v1107 = vunpack.c.l.b16 %v365
    %v1108 = vunpack.c.h.b16 %v365
    %v1109 = vunpack.c.l.b16 %v366
    %v1110 = vunpack.c.h.b16 %v366
    %v1111 = vunpack.c.l.b16 %v367
    %v1112 = vunpack.c.h.b16 %v367
    %v1113 = vunpack.c.l.b16 %v368
    %v1114 = vunpack.c.h.b16 %v368
    %v1115 = vunpack.c.l.b16 %v369
    %v1116 = vunpack.c.h.b16 %v369
    %v1117 = vunpack.c.l.b16 %v370
    %v1118 = vunpack.c.h.b16 %v370
    %v1119 = vunpack.c.l.b16 %v371
    %v1120 = vunpack.c.h.b16 %v371
    %v1121 = vunpack.c.l.b16 %v372
    %v1122 = vunpack.c.h.b16 %v372
    %v1123 = vunpack.c.l.b16 %v373
    %v1124 = vunpack.c.h.b16 %v373
    %v1125 = vunpack.c.l.b16 %v374
    %v1126 = vunpack.c.h.b16 %v374
    %v1127 = vunpack.c.l.b16 %v375
    %v1128 = vunpack.c.h.b16 %v375
    %v1129 = vunpack.c.l.b16 %v376
    %v1130 = vunpack.c.h.b16 %v376
    %v1131 = vunpack.c.l.b16 %v377
    %v1132 = vunpack.c.h.b16 %v377
    %v1133 = vunpack.c.l.b16 %v378
    %v1134 = vunpack.c.h.b16 %v378
    %v1135 = vunpack.c.l.b16 %v379
    %v1136 = vunpack.c.h.b16 %v379
    %v1137 = vunpack.c.l.b16 %v380
    %v1138 = vunpack.c.h.b16 %v380
    %v1139 = vunpack.c.l.b16 %v381
    %v1140 = vunpack.c.h.b16 %v381
    %v1141 = vunpack.c.l.b16 %v382
    %v1142 = vunpack.c.h.b16 %v382
    %v1143 = vunpack.c.l.b16 %v383
    %v1144 = vunpack.c.h.b16 %v383
    %v1145 = vunpack.c.l.b16 %v384
    %v1146 = vunpack.c.h.b16 %v384
    %v1147 = vunpack.c.l.b16 %v385
    %v1148 = vunpack.c.h.b16 %v385
    %v1149 = vunpack.c.l.b16 %v386
    %v1150 = vunpack.c.h.b16 %v386
    %v1151 = vunpack.c.l.b16 %v387
    %v1152 = vunpack.c.h.b16 %v387
    %v1153 = vunpack.c.l.b16 %v388
    %v1154 = vunpack.c.h.b16 %v388
    %v1155 = vunpack.c.l.b16 %v389
    %v1156 = vunpack.c.h.b16 %v389
    %v1157 = vunpack.c.l.b16 %v390
    %v1158 = vunpack.c.h.b16 %v390
    %v1159 = vpack.c.b16 %v651, %v647
    %v1160 = vpack.c.b16 %v652, %v648
    %v1161 = vpack.c.b16 %v653, %v649
    %v1162 = vpack.c.b16 %v654, %v650
    %v1163 = vpack.c.b16 %v659, %v655
    %v1164 = vpack.c.b16 %v660, %v656
    %v1165 = vpack.c.b16 %v661, %v657
    %v1166 = vpack.c.b16 %v662, %v658
    %v1167 = vpack.c.b16 %v667, %v663
    %v1168 = vpack.c.b16 %v668, %v664
    %v1169 = vpack.c.b16 %v669, %v665
    %v1170 = vpack.c.b16 %v670, %v666
    %v1171 = vpack.c.b16 %v675, %v671
    %v1172 = vpack.c.b16 %v676, %v672
    %v1173 = vpack.c.b16 %v677, %v673
    %v1174 = vpack.c.b16 %v678, %v674
    %v1175 = vpack.c.b16 %v683, %v679
    %v1176 = vpack.c.b16 %v684, %v680
    %v1177 = vpack.c.b16 %v685, %v681
    %v1178 = vpack.c.b16 %v686, %v682
    %v1179 = vpack.c.b16 %v691, %v687
    %v1180 = vpack.c.b16 %v692, %v688
    %v1181 = vpack.c.b16 %v693, %v689
    %v1182 = vpack.c.b16 %v694, %v690
    %v1183 = vpack.c.b16 %v699, %v695
    %v1184 = vpack.c.b16 %v700, %v696
    %v1185 = vpack.c.b16 %v701, %v697
    %v1186 = vpack.c.b16 %v702, %v698
    %v1187 = vpack.c.b16 %v707, %v703
    %v1188 = vpack.c.b16 %v708, %v704
    %v1189 = vpack.c.b16 %v709, %v705
    %v1190 = vpack.c.b16 %v710, %v706
    %v1191 = vpack.c.b16 %v715, %v711
    %v1192 = vpack.c.b16 %v716, %v712
    %v1193 = vpack.c.b16 %v717, %v713
    %v1194 = vpack.c.b16 %v718, %v714
    %v1195 = vpack.c.b16 %v723, %v719
    %v1196 = vpack.c.b16 %v724, %v720
    %v1197 = vpack.c.b16 %v725, %v721
    %v1198 = vpack.c.b16 %v726, %v722
    %v1199 = vpack.c.b16 %v731, %v727
    %v1200 = vpack.c.b16 %v732, %v728
    %v1201 = vpack.c.b16 %v733, %v729
    %v1202 = vpack.c.b16 %v734, %v730
    %v1203 = vpack.c.b16 %v739, %v735
    %v1204 = vpack.c.b16 %v740, %v736
    %v1205 = vpack.c.b16 %v741, %v737
    %v1206 = vpack.c.b16 %v742, %v738
    %v1207 = vpack.c.b16 %v747, %v743
    %v1208 = vpack.c.b16 %v748, %v744
    %v1209 = vpack.c.b16 %v749, %v745
    %v1210 = vpack.c.b16 %v750, %v746
    %v1211 = vpack.c.b16 %v755, %v751
    %v1212 = vpack.c.b16 %v756, %v752
    %v1213 = vpack.c.b16 %v757, %v753
    %v1214 = vpack.c.b16 %v758, %v754
    %v1215 = vpack.c.b16 %v763, %v759
    %v1216 = vpack.c.b16 %v764, %v760
    %v1217 = vpack.c.b16 %v765, %v761
    %v1218 = vpack.c.b16 %v766, %v762
    %v1219 = vpack.c.b16 %v771, %v767
    %v1220 = vpack.c.b16 %v772, %v768
    %v1221 = vpack.c.b16 %v773, %v769
    %v1222 = vpack.c.b16 %v774, %v770
    %v1223 = vpack.c.b16 %v779, %v775
    %v1224 = vpack.c.b16 %v780, %v776
    %v1225 = vpack.c.b16 %v781, %v777
    %v1226 = vpack.c.b16 %v782, %v778
    %v1227 = vpack.c.b16 %v787, %v783
    %v1228 = vpack.c.b16 %v788, %v784
    %v1229 = vpack.c.b16 %v789, %v785
    %v1230 = vpack.c.b16 %v790, %v786
    %v1231 = vpack.c.b16 %v795, %v791
    %v1232 = vpack.c.b16 %v796, %v792
    %v1233 = vpack.c.b16 %v797, %v793
    %v1234 = vpack.c.b16 %v798, %v794
    %v1235 = vpack.c.b16 %v803, %v799
    %v1236 = vpack.c.b16 %v804, %v800
    %v1237 = vpack.c.b16 %v805, %v801
    %v1238 = vpack.c.b16 %v806, %v802
    %v1239 = vpack.c.b16 %v811, %v807
    %v1240 = vpack.c.b16 %v812, %v808
    %v1241 = vpack.c.b16 %v813, %v809
    %v1242 = vpack.c.b16 %v814, %v810
    %v1243 = vpack.c.b16 %v819, %v815
    %v1244 = vpack.c.b16 %v820, %v816
    %v1245 = vpack.c.b16 %v821, %v817
    %v1246 = vpack.c.b16 %v822, %v818
    %v1247 = vpack.c.b16 %v827, %v823
    %v1248 = vpack.c.b16 %v828, %v824
    %v1249 = vpack.c.b16 %v829, %v825
    %v1250 = vpack.c.b16 %v830, %v826
    %v1251 = vpack.c.b16 %v835, %v831
    %v1252 = vpack.c.b16 %v836, %v832
    %v1253 = vpack.c.b16 %v837, %v833
    %v1254 = vpack.c.b16 %v838, %v834
    %v1255 = vpack.c.b16 %v843, %v839
    %v1256 = vpack.c.b16 %v844, %v840
    %v1257 = vpack.c.b16 %v845, %v841
    %v1258 = vpack.c.b16 %v846, %v842
    %v1259 = vpack.c.b16 %v851, %v847
    %v1260 = vpack.c.b16 %v852, %v848
    %v1261 = vpack.c.b16 %v853, %v849
    %v1262 = vpack.c.b16 %v854, %v850
    %v1263 = vpack.c.b16 %v859, %v855
    %v1264 = vpack.c.b16 %v860, %v856
    %v1265 = vpack.c.b16 %v861, %v857
    %v1266 = vpack.c.b16 %v862, %v858
    %v1267 = vpack.c.b16 %v867, %v863
    %v1268 = vpack.c.b16 %v868, %v864
    %v1269 = vpack.c.b16 %v869, %v865
    %v1270 = vpack.c.b16 %v870, %v866
    %v1271 = vpack.c.b16 %v875, %v871
    %v1272 = vpack.c.b16 %v876, %v872
    %v1273 = vpack.c.b16 %v877, %v873
    %v1274 = vpack.c.b16 %v878, %v874
    %v1275 = vpack.c.b16 %v883, %v879
    %v1276 = vpack.c.b16 %v884, %v880
    %v1277 = vpack.c.b16 %v885, %v881
    %v1278 = vpack.c.b16 %v886, %v882
    %v1279 = vpack.c.b16 %v891, %v887
    %v1280 = vpack.c.b16 %v892, %v888
    %v1281 = vpack.c.b16 %v893, %v889
    %v1282 = vpack.c.b16 %v894, %v890
    %v1283 = vpack.c.b16 %v899, %v895
    %v1284 = vpack.c.b16 %v900, %v896
    %v1285 = vpack.c.b16 %v901, %v897
    %v1286 = vpack.c.b16 %v902, %v898
    %v1287 = vpack.c.b16 %v907, %v903
    %v1288 = vpack.c.b16 %v908, %v904
    %v1289 = vpack.c.b16 %v909, %v905
    %v1290 = vpack.c.b16 %v910, %v906
    %v1291 = vpack.c.b16 %v915, %v911
    %v1292 = vpack.c.b16 %v916, %v912
    %v1293 = vpack.c.b16 %v917, %v913
    %v1294 = vpack.c.b16 %v918, %v914
    %v1295 = vpack.c.b16 %v923, %v919
    %v1296 = vpack.c.b16 %v924, %v920
    %v1297 = vpack.c.b16 %v925, %v921
    %v1298 = vpack.c.b16 %v926, %v922
    %v1299 = vpack.c.b16 %v931, %v927
    %v1300 = vpack.c.b16 %v932, %v928
    %v1301 = vpack.c.b16 %v933, %v929
    %v1302 = vpack.c.b16 %v934, %v930
    %v1303 = vpack.c.b16 %v939, %v935
    %v1304 = vpack.c.b16 %v940, %v936
    %v1305 = vpack.c.b16 %v941, %v937
    %v1306 = vpack.c.b16 %v942, %v938
    %v1307 = vpack.c.b16 %v947, %v943
    %v1308 = vpack.c.b16 %v948, %v944
    %v1309 = vpack.c.b16 %v949, %v945
    %v1310 = vpack.c.b16 %v950, %v946
    %v1311 = vpack.c.b16 %v955, %v951
    %v1312 = vpack.c.b16 %v956, %v952
    %v1313 = vpack.c.b16 %v957, %v953
    %v1314 = vpack.c.b16 %v958, %v954
    %v1315 = vpack.c.b16 %v963, %v959
    %v1316 = vpack.c.b16 %v964, %v960
    %v1317 = vpack.c.b16 %v965, %v961
    %v1318 = vpack.c.b16 %v966, %v962
    %v1319 = vpack.c.b16 %v971, %v967
    %v1320 = vpack.c.b16 %v972, %v968
    %v1321 = vpack.c.b16 %v973, %v969
    %v1322 = vpack.c.b16 %v974, %v970
    %v1323 = vpack.c.b16 %v979, %v975
    %v1324 = vpack.c.b16 %v980, %v976
    %v1325 = vpack.c.b16 %v981, %v977
    %v1326 = vpack.c.b16 %v982, %v978
    %v1327 = vpack.c.b16 %v987, %v983
    %v1328 = vpack.c.b16 %v988, %v984
    %v1329 = vpack.c.b16 %v989, %v985
    %v1330 = vpack.c.b16 %v990, %v986
    %v1331 = vpack.c.b16 %v995, %v991
    %v1332 = vpack.c.b16 %v996, %v992
    %v1333 = vpack.c.b16 %v997, %v993
    %v1334 = vpack.c.b16 %v998, %v994
    %v1335 = vpack.c.b16 %v1003, %v999
    %v1336 = vpack.c.b16 %v1004, %v1000
    %v1337 = vpack.c.b16 %v1005, %v1001
    %v1338 = vpack.c.b16 %v1006, %v1002
    %v1339 = vpack.c.b16 %v1011, %v1007
    %v1340 = vpack.c.b16 %v1012, %v1008
    %v1341 = vpack.c.b16 %v1013, %v1009
    %v1342 = vpack.c.b16 %v1014, %v1010
    %v1343 = vpack.c.b16 %v1019, %v1015
    %v1344 = vpack.c.b16 %v1020, %v1016
    %v1345 = vpack.c.b16 %v1021, %v1017
    %v1346 = vpack.c.b16 %v1022, %v1018
    %v1347 = vpack.c.b16 %v1027, %v1023
    %v1348 = vpack.c.b16 %v1028, %v1024
    %v1349 = vpack.c.b16 %v1029, %v1025
    %v1350 = vpack.c.b16 %v1030, %v1026
    %v1351 = vpack.c.b16 %v1035, %v1031
    %v1352 = vpack.c.b16 %v1036, %v1032
    %v1353 = vpack.c.b16 %v1037, %v1033
    %v1354 = vpack.c.b16 %v1038, %v1034
    %v1355 = vpack.c.b16 %v1043, %v1039
    %v1356 = vpack.c.b16 %v1044, %v1040
    %v1357 = vpack.c.b16 %v1045, %v1041
    %v1358 = vpack.c.b16 %v1046, %v1042
    %v1359 = vpack.c.b16 %v1051, %v1047
    %v1360 = vpack.c.b16 %v1052, %v1048
    %v1361 = vpack.c.b16 %v1053, %v1049
    %v1362 = vpack.c.b16 %v1054, %v1050
    %v1363 = vpack.c.b16 %v1059, %v1055
    %v1364 = vpack.c.b16 %v1060, %v1056
    %v1365 = vpack.c.b16 %v1061, %v1057
    %v1366 = vpack.c.b16 %v1062, %v1058
    %v1367 = vpack.c.b16 %v1067, %v1063
    %v1368 = vpack.c.b16 %v1068, %v1064
    %v1369 = vpack.c.b16 %v1069, %v1065
    %v1370 = vpack.c.b16 %v1070, %v1066
    %v1371 = vpack.c.b16 %v1075, %v1071
    %v1372 = vpack.c.b16 %v1076, %v1072
    %v1373 = vpack.c.b16 %v1077, %v1073
    %v1374 = vpack.c.b16 %v1078, %v1074
    %v1375 = vpack.c.b16 %v1083, %v1079
    %v1376 = vpack.c.b16 %v1084, %v1080
    %v1377 = vpack.c.b16 %v1085, %v1081
    %v1378 = vpack.c.b16 %v1086, %v1082
    %v1379 = vpack.c.b16 %v1091, %v1087
    %v1380 = vpack.c.b16 %v1092, %v1088
    %v1381 = vpack.c.b16 %v1093, %v1089
    %v1382 = vpack.c.b16 %v1094, %v1090
    %v1383 = vpack.c.b16 %v1099, %v1095
    %v1384 = vpack.c.b16 %v1100, %v1096
    %v1385 = vpack.c.b16 %v1101, %v1097
    %v1386 = vpack.c.b16 %v1102, %v1098
    %v1387 = vpack.c.b16 %v1107, %v1103
    %v1388 = vpack.c.b16 %v1108, %v1104
    %v1389 = vpack.c.b16 %v1109, %v1105
    %v1390 = vpack.c.b16 %v1110, %v1106
    %v1391 = vpack.c.b16 %v1115, %v1111
    %v1392 = vpack.c.b16 %v1116, %v1112
    %v1393 = vpack.c.b16 %v1117, %v1113
    %v1394 = vpack.c.b16 %v1118, %v1114
    %v1395 = vpack.c.b16 %v1123, %v1119
    %v1396 = vpack.c.b16 %v1124, %v1120
    %v1397 = vpack.c.b16 %v1125, %v1121
    %v1398 = vpack.c.b16 %v1126, %v1122
    %v1399 = vpack.c.b16 %v1131, %v1127
    %v1400 = vpack.c.b16 %v1132, %v1128
    %v1401 = vpack.c.b16 %v1133, %v1129
    %v1402 = vpack.c.b16 %v1134, %v1130
    %v1403 = vpack.c.b16 %v1139, %v1135
    %v1404 = vpack.c.b16 %v1140, %v1136
    %v1405 = vpack.c.b16 %v1141, %v1137
    %v1406 = vpack.c.b16 %v1142, %v1138
    %v1407 = vpack.c.b16 %v1147, %v1143
    %v1408 = vpack.c.b16 %v1148, %v1144
    %v1409 = vpack.c.b16 %v1149, %v1145
    %v1410 = vpack.c.b16 %v1150, %v1146
    %v1411 = vpack.c.b16 %v1155, %v1151
    %v1412 = vpack.c.b16 %v1156, %v1152
    %v1413 = vpack.c.b16 %v1157, %v1153
    %v1414 = vpack.c.b16 %v1158, %v1154
    %1671 = vmatprep.subr.bf16.mxu0 %v1160
    %1672 = vmatpush1.bf16.msra.mxu0 %v1159
    %1673 = vmatprep.subr.bf16.mxu0 %v1164
    %1674 = vmatpush1.bf16.msra.mxu0 %v1163
    %1675 = vmatprep.subr.bf16.mxu0 %v1168
    %1676 = vmatpush1.bf16.msra.mxu0 %v1167
    %1677 = vmatprep.subr.bf16.mxu0 %v1172
    %1678 = vmatpush1.bf16.msra.mxu0 %v1171
    %1679 = vmatprep.subr.bf16.mxu0 %v1176
    %1680 = vmatpush1.bf16.msra.mxu0 %v1175
    %1681 = vmatprep.subr.bf16.mxu0 %v1180
    %1682 = vmatpush1.bf16.msra.mxu0 %v1179
    %1683 = vmatprep.subr.bf16.mxu0 %v1184
    %1684 = vmatpush1.bf16.msra.mxu0 %v1183
    %1685 = vmatprep.subr.bf16.mxu0 %v1188
    %1686 = vmatpush1.bf16.msra.mxu0 %v1187
    %1687 = vmatprep.subr.bf16.mxu0 %v1192
    %1688 = vmatpush1.bf16.msra.mxu0 %v1191
    %1689 = vmatprep.subr.bf16.mxu0 %v1196
    %1690 = vmatpush1.bf16.msra.mxu0 %v1195
    %1691 = vmatprep.subr.bf16.mxu0 %v1200
    %1692 = vmatpush1.bf16.msra.mxu0 %v1199
    %1693 = vmatprep.subr.bf16.mxu0 %v1204
    %1694 = vmatpush1.bf16.msra.mxu0 %v1203
    %1695 = vmatprep.subr.bf16.mxu0 %v1208
    %1696 = vmatpush1.bf16.msra.mxu0 %v1207
    %1697 = vmatprep.subr.bf16.mxu0 %v1212
    %1698 = vmatpush1.bf16.msra.mxu0 %v1211
    %1699 = vmatprep.subr.bf16.mxu0 %v1216
    %1700 = vmatpush1.bf16.msra.mxu0 %v1215
    %1701 = vmatprep.subr.bf16.mxu0 %v1220
    %1702 = vmatpush1.bf16.msra.mxu0 %v1219
    %1703 = vmatprep.mubr.bf16.mxu0 %v127
    %1704 = vmatmul.mubr.bf16.gmra.mrb[0].mxu0 %v126
    %v1705 = vpop.f32.mrb[0].mxu0
    %v1706 = vadd.f32 0.0, %v1705
    %v1707 = vpop.f32.mrb[0].mxu0
    %v1708 = vadd.f32 0.0, %v1707
    %v1709 = vpop.f32.mrb[0].mxu0
    %v1710 = vpop.f32.mrb[0].mxu0
    %1711 = vdwg.mxu0
    %1712 = vmatprep.subr.bf16.mxu0 %v1224
    %1713 = vmatpush1.bf16.msra.mxu0 %v1223
    %1714 = vmatprep.subr.bf16.mxu0 %v1228
    %1715 = vmatpush1.bf16.msra.mxu0 %v1227
    %1716 = vmatprep.subr.bf16.mxu0 %v1232
    %1717 = vmatpush1.bf16.msra.mxu0 %v1231
    %1718 = vmatprep.subr.bf16.mxu0 %v1236
    %1719 = vmatpush1.bf16.msra.mxu0 %v1235
    %1720 = vmatprep.subr.bf16.mxu0 %v1240
    %1721 = vmatpush1.bf16.msra.mxu0 %v1239
    %1722 = vmatprep.subr.bf16.mxu0 %v1244
    %1723 = vmatpush1.bf16.msra.mxu0 %v1243
    %1724 = vmatprep.subr.bf16.mxu0 %v1248
    %1725 = vmatpush1.bf16.msra.mxu0 %v1247
    %1726 = vmatprep.subr.bf16.mxu0 %v1252
    %1727 = vmatpush1.bf16.msra.mxu0 %v1251
    %1728 = vmatprep.subr.bf16.mxu0 %v1256
    %1729 = vmatpush1.bf16.msra.mxu0 %v1255
    %1730 = vmatprep.subr.bf16.mxu0 %v1260
    %1731 = vmatpush1.bf16.msra.mxu0 %v1259
    %1732 = vmatprep.subr.bf16.mxu0 %v1264
    %1733 = vmatpush1.bf16.msra.mxu0 %v1263
    %1734 = vmatprep.subr.bf16.mxu0 %v1268
    %1735 = vmatpush1.bf16.msra.mxu0 %v1267
    %1736 = vmatprep.subr.bf16.mxu0 %v1272
    %1737 = vmatpush1.bf16.msra.mxu0 %v1271
    %1738 = vmatprep.subr.bf16.mxu0 %v1276
    %1739 = vmatpush1.bf16.msra.mxu0 %v1275
    %1740 = vmatprep.subr.bf16.mxu0 %v1280
    %1741 = vmatpush1.bf16.msra.mxu0 %v1279
    %1742 = vmatprep.subr.bf16.mxu0 %v1284
    %1743 = vmatpush1.bf16.msra.mxu0 %v1283
    %1744 = vmatprep.mubr.bf16.mxu0 %v129
    %1745 = vmatmul.mubr.bf16.gmra.mrb[0].mxu0 %v128
    %v1746 = vpop.f32.mrb[0].mxu0
    %v1747 = vadd.f32 %v1706, %v1746
    %v1748 = vpop.f32.mrb[0].mxu0
    %v1749 = vadd.f32 %v1708, %v1748
    %v1750 = vpop.f32.mrb[0].mxu0
    %v1751 = vpop.f32.mrb[0].mxu0
    %1752 = vdwg.mxu0
    %1753 = vmatprep.subr.bf16.mxu0 %v1288
    %1754 = vmatpush1.bf16.msra.mxu0 %v1287
    %1755 = vmatprep.subr.bf16.mxu0 %v1292
    %1756 = vmatpush1.bf16.msra.mxu0 %v1291
    %1757 = vmatprep.subr.bf16.mxu0 %v1296
    %1758 = vmatpush1.bf16.msra.mxu0 %v1295
    %1759 = vmatprep.subr.bf16.mxu0 %v1300
    %1760 = vmatpush1.bf16.msra.mxu0 %v1299
    %1761 = vmatprep.subr.bf16.mxu0 %v1304
    %1762 = vmatpush1.bf16.msra.mxu0 %v1303
    %1763 = vmatprep.subr.bf16.mxu0 %v1308
    %1764 = vmatpush1.bf16.msra.mxu0 %v1307
    %1765 = vmatprep.subr.bf16.mxu0 %v1312
    %1766 = vmatpush1.bf16.msra.mxu0 %v1311
    %1767 = vmatprep.subr.bf16.mxu0 %v1316
    %1768 = vmatpush1.bf16.msra.mxu0 %v1315
    %1769 = vmatprep.subr.bf16.mxu0 %v1320
    %1770 = vmatpush1.bf16.msra.mxu0 %v1319
    %1771 = vmatprep.subr.bf16.mxu0 %v1324
    %1772 = vmatpush1.bf16.msra.mxu0 %v1323
    %1773 = vmatprep.subr.bf16.mxu0 %v1328
    %1774 = vmatpush1.bf16.msra.mxu0 %v1327
    %1775 = vmatprep.subr.bf16.mxu0 %v1332
    %1776 = vmatpush1.bf16.msra.mxu0 %v1331
    %1777 = vmatprep.subr.bf16.mxu0 %v1336
    %1778 = vmatpush1.bf16.msra.mxu0 %v1335
    %1779 = vmatprep.subr.bf16.mxu0 %v1340
    %1780 = vmatpush1.bf16.msra.mxu0 %v1339
    %1781 = vmatprep.subr.bf16.mxu0 %v1344
    %1782 = vmatpush1.bf16.msra.mxu0 %v1343
    %1783 = vmatprep.subr.bf16.mxu0 %v1348
    %1784 = vmatpush1.bf16.msra.mxu0 %v1347
    %1785 = vmatprep.mubr.bf16.mxu0 %v131
    %1786 = vmatmul.mubr.bf16.gmra.mrb[0].mxu0 %v130
    %v1787 = vpop.f32.mrb[0].mxu0
    %v1788 = vadd.f32 %v1747, %v1787
    %v1789 = vpop.f32.mrb[0].mxu0
    %v1790 = vadd.f32 %v1749, %v1789
    %v1791 = vpop.f32.mrb[0].mxu0
    %v1792 = vpop.f32.mrb[0].mxu0
    %1793 = vdwg.mxu0
    %1794 = vmatprep.subr.bf16.mxu0 %v1352
    %1795 = vmatpush1.bf16.msra.mxu0 %v1351
    %1796 = vmatprep.subr.bf16.mxu0 %v1356
    %1797 = vmatpush1.bf16.msra.mxu0 %v1355
    %1798 = vmatprep.subr.bf16.mxu0 %v1360
    %1799 = vmatpush1.bf16.msra.mxu0 %v1359
    %1800 = vmatprep.subr.bf16.mxu0 %v1364
    %1801 = vmatpush1.bf16.msra.mxu0 %v1363
    %1802 = vmatprep.subr.bf16.mxu0 %v1368
    %1803 = vmatpush1.bf16.msra.mxu0 %v1367
    %1804 = vmatprep.subr.bf16.mxu0 %v1372
    %1805 = vmatpush1.bf16.msra.mxu0 %v1371
    %1806 = vmatprep.subr.bf16.mxu0 %v1376
    %1807 = vmatpush1.bf16.msra.mxu0 %v1375
    %1808 = vmatprep.subr.bf16.mxu0 %v1380
    %1809 = vmatpush1.bf16.msra.mxu0 %v1379
    %1810 = vmatprep.subr.bf16.mxu0 %v1384
    %1811 = vmatpush1.bf16.msra.mxu0 %v1383
    %1812 = vmatprep.subr.bf16.mxu0 %v1388
    %1813 = vmatpush1.bf16.msra.mxu0 %v1387
    %1814 = vmatprep.subr.bf16.mxu0 %v1392
    %1815 = vmatpush1.bf16.msra.mxu0 %v1391
    %1816 = vmatprep.subr.bf16.mxu0 %v1396
    %1817 = vmatpush1.bf16.msra.mxu0 %v1395
    %1818 = vmatprep.subr.bf16.mxu0 %v1400
    %1819 = vmatpush1.bf16.msra.mxu0 %v1399
    %1820 = vmatprep.subr.bf16.mxu0 %v1404
    %1821 = vmatpush1.bf16.msra.mxu0 %v1403
    %1822 = vmatprep.subr.bf16.mxu0 %v1408
    %1823 = vmatpush1.bf16.msra.mxu0 %v1407
    %1824 = vmatprep.subr.bf16.mxu0 %v1412
    %1825 = vmatpush1.bf16.msra.mxu0 %v1411
    %1826 = vmatprep.mubr.bf16.mxu0 %v133
    %1827 = vmatmul.mubr.bf16.gmra.mrb[0].mxu0 %v132
    %v1828 = vpop.f32.mrb[0].mxu0
    %v1829 = vadd.f32 %v1788, %v1828
    %v1830 = vpop.f32.mrb[0].mxu0
    %v1831 = vadd.f32 %v1790, %v1830
    %v1832 = vpop.f32.mrb[0].mxu0
    %v1833 = vpop.f32.mrb[0].mxu0
    %1834 = vdwg.mxu0
    %1835 = vmatprep.subr.bf16.mxu0 %v1162
    %1836 = vmatpush1.bf16.msra.mxu0 %v1161
    %1837 = vmatprep.subr.bf16.mxu0 %v1166
    %1838 = vmatpush1.bf16.msra.mxu0 %v1165
    %1839 = vmatprep.subr.bf16.mxu0 %v1170
    %1840 = vmatpush1.bf16.msra.mxu0 %v1169
    %1841 = vmatprep.subr.bf16.mxu0 %v1174
    %1842 = vmatpush1.bf16.msra.mxu0 %v1173
    %1843 = vmatprep.subr.bf16.mxu0 %v1178
    %1844 = vmatpush1.bf16.msra.mxu0 %v1177
    %1845 = vmatprep.subr.bf16.mxu0 %v1182
    %1846 = vmatpush1.bf16.msra.mxu0 %v1181
    %1847 = vmatprep.subr.bf16.mxu0 %v1186
    %1848 = vmatpush1.bf16.msra.mxu0 %v1185
    %1849 = vmatprep.subr.bf16.mxu0 %v1190
    %1850 = vmatpush1.bf16.msra.mxu0 %v1189
    %1851 = vmatprep.subr.bf16.mxu0 %v1194
    %1852 = vmatpush1.bf16.msra.mxu0 %v1193
    %1853 = vmatprep.subr.bf16.mxu0 %v1198
    %1854 = vmatpush1.bf16.msra.mxu0 %v1197
    %1855 = vmatprep.subr.bf16.mxu0 %v1202
    %1856 = vmatpush1.bf16.msra.mxu0 %v1201
    %1857 = vmatprep.subr.bf16.mxu0 %v1206
    %1858 = vmatpush1.bf16.msra.mxu0 %v1205
    %1859 = vmatprep.subr.bf16.mxu0 %v1210
    %1860 = vmatpush1.bf16.msra.mxu0 %v1209
    %1861 = vmatprep.subr.bf16.mxu0 %v1214
    %1862 = vmatpush1.bf16.msra.mxu0 %v1213
    %1863 = vmatprep.subr.bf16.mxu0 %v1218
    %1864 = vmatpush1.bf16.msra.mxu0 %v1217
    %1865 = vmatprep.subr.bf16.mxu0 %v1222
    %1866 = vmatpush1.bf16.msra.mxu0 %v1221
    %1867 = vmatprep.mubr.bf16.mxu0 %v127
    %1868 = vmatmul.mubr.bf16.gmra.mrb[0].mxu0 %v126
    %v1869 = vpop.f32.mrb[0].mxu0
    %v1870 = vadd.f32 0.0, %v1869
    %v1871 = vpop.f32.mrb[0].mxu0
    %v1872 = vadd.f32 0.0, %v1871
    %v1873 = vpop.f32.mrb[0].mxu0
    %v1874 = vpop.f32.mrb[0].mxu0
    %1875 = vdwg.mxu0
    %1876 = vmatprep.subr.bf16.mxu0 %v1226
    %1877 = vmatpush1.bf16.msra.mxu0 %v1225
    %1878 = vmatprep.subr.bf16.mxu0 %v1230
    %1879 = vmatpush1.bf16.msra.mxu0 %v1229
    %1880 = vmatprep.subr.bf16.mxu0 %v1234
    %1881 = vmatpush1.bf16.msra.mxu0 %v1233
    %1882 = vmatprep.subr.bf16.mxu0 %v1238
    %1883 = vmatpush1.bf16.msra.mxu0 %v1237
    %1884 = vmatprep.subr.bf16.mxu0 %v1242
    %1885 = vmatpush1.bf16.msra.mxu0 %v1241
    %1886 = vmatprep.subr.bf16.mxu0 %v1246
    %1887 = vmatpush1.bf16.msra.mxu0 %v1245
    %1888 = vmatprep.subr.bf16.mxu0 %v1250
    %1889 = vmatpush1.bf16.msra.mxu0 %v1249
    %1890 = vmatprep.subr.bf16.mxu0 %v1254
    %1891 = vmatpush1.bf16.msra.mxu0 %v1253
    %1892 = vmatprep.subr.bf16.mxu0 %v1258
    %1893 = vmatpush1.bf16.msra.mxu0 %v1257
    %1894 = vmatprep.subr.bf16.mxu0 %v1262
    %1895 = vmatpush1.bf16.msra.mxu0 %v1261
    %1896 = vmatprep.subr.bf16.mxu0 %v1266
    %1897 = vmatpush1.bf16.msra.mxu0 %v1265
    %1898 = vmatprep.subr.bf16.mxu0 %v1270
    %1899 = vmatpush1.bf16.msra.mxu0 %v1269
    %1900 = vmatprep.subr.bf16.mxu0 %v1274
    %1901 = vmatpush1.bf16.msra.mxu0 %v1273
    %1902 = vmatprep.subr.bf16.mxu0 %v1278
    %1903 = vmatpush1.bf16.msra.mxu0 %v1277
    %1904 = vmatprep.subr.bf16.mxu0 %v1282
    %1905 = vmatpush1.bf16.msra.mxu0 %v1281
    %1906 = vmatprep.subr.bf16.mxu0 %v1286
    %1907 = vmatpush1.bf16.msra.mxu0 %v1285
    %1908 = vmatprep.mubr.bf16.mxu0 %v129
    %1909 = vmatmul.mubr.bf16.gmra.mrb[0].mxu0 %v128
    %v1910 = vpop.f32.mrb[0].mxu0
    %v1911 = vadd.f32 %v1870, %v1910
    %v1912 = vpop.f32.mrb[0].mxu0
    %v1913 = vadd.f32 %v1872, %v1912
    %v1914 = vpop.f32.mrb[0].mxu0
    %v1915 = vpop.f32.mrb[0].mxu0
    %1916 = vdwg.mxu0
    %1917 = vmatprep.subr.bf16.mxu0 %v1290
    %1918 = vmatpush1.bf16.msra.mxu0 %v1289
    %1919 = vmatprep.subr.bf16.mxu0 %v1294
    %1920 = vmatpush1.bf16.msra.mxu0 %v1293
    %1921 = vmatprep.subr.bf16.mxu0 %v1298
    %1922 = vmatpush1.bf16.msra.mxu0 %v1297
    %1923 = vmatprep.subr.bf16.mxu0 %v1302
    %1924 = vmatpush1.bf16.msra.mxu0 %v1301
    %1925 = vmatprep.subr.bf16.mxu0 %v1306
    %1926 = vmatpush1.bf16.msra.mxu0 %v1305
    %1927 = vmatprep.subr.bf16.mxu0 %v1310
    %1928 = vmatpush1.bf16.msra.mxu0 %v1309
    %1929 = vmatprep.subr.bf16.mxu0 %v1314
    %1930 = vmatpush1.bf16.msra.mxu0 %v1313
    %1931 = vmatprep.subr.bf16.mxu0 %v1318
    %1932 = vmatpush1.bf16.msra.mxu0 %v1317
    %1933 = vmatprep.subr.bf16.mxu0 %v1322
    %1934 = vmatpush1.bf16.msra.mxu0 %v1321
    %1935 = vmatprep.subr.bf16.mxu0 %v1326
    %1936 = vmatpush1.bf16.msra.mxu0 %v1325
    %1937 = vmatprep.subr.bf16.mxu0 %v1330
    %1938 = vmatpush1.bf16.msra.mxu0 %v1329
    %1939 = vmatprep.subr.bf16.mxu0 %v1334
    %1940 = vmatpush1.bf16.msra.mxu0 %v1333
    %1941 = vmatprep.subr.bf16.mxu0 %v1338
    %1942 = vmatpush1.bf16.msra.mxu0 %v1337
    %1943 = vmatprep.subr.bf16.mxu0 %v1342
    %1944 = vmatpush1.bf16.msra.mxu0 %v1341
    %1945 = vmatprep.subr.bf16.mxu0 %v1346
    %1946 = vmatpush1.bf16.msra.mxu0 %v1345
    %1947 = vmatprep.subr.bf16.mxu0 %v1350
    %1948 = vmatpush1.bf16.msra.mxu0 %v1349
    %1949 = vmatprep.mubr.bf16.mxu0 %v131
    %1950 = vmatmul.mubr.bf16.gmra.mrb[0].mxu0 %v130
    %v1951 = vpop.f32.mrb[0].mxu0
    %v1952 = vadd.f32 %v1911, %v1951
    %v1953 = vpop.f32.mrb[0].mxu0
    %v1954 = vadd.f32 %v1913, %v1953
    %v1955 = vpop.f32.mrb[0].mxu0
    %v1956 = vpop.f32.mrb[0].mxu0
    %1957 = vdwg.mxu0
    %1958 = vmatprep.subr.bf16.mxu0 %v1354
    %1959 = vmatpush1.bf16.msra.mxu0 %v1353
    %1960 = vmatprep.subr.bf16.mxu0 %v1358
    %1961 = vmatpush1.bf16.msra.mxu0 %v1357
    %1962 = vmatprep.subr.bf16.mxu0 %v1362
    %1963 = vmatpush1.bf16.msra.mxu0 %v1361
    %1964 = vmatprep.subr.bf16.mxu0 %v1366
    %1965 = vmatpush1.bf16.msra.mxu0 %v1365
    %1966 = vmatprep.subr.bf16.mxu0 %v1370
    %1967 = vmatpush1.bf16.msra.mxu0 %v1369
    %1968 = vmatprep.subr.bf16.mxu0 %v1374
    %1969 = vmatpush1.bf16.msra.mxu0 %v1373
    %1970 = vmatprep.subr.bf16.mxu0 %v1378
    %1971 = vmatpush1.bf16.msra.mxu0 %v1377
    %1972 = vmatprep.subr.bf16.mxu0 %v1382
    %1973 = vmatpush1.bf16.msra.mxu0 %v1381
    %1974 = vmatprep.subr.bf16.mxu0 %v1386
    %1975 = vmatpush1.bf16.msra.mxu0 %v1385
    %1976 = vmatprep.subr.bf16.mxu0 %v1390
    %1977 = vmatpush1.bf16.msra.mxu0 %v1389
    %1978 = vmatprep.subr.bf16.mxu0 %v1394
    %1979 = vmatpush1.bf16.msra.mxu0 %v1393
    %1980 = vmatprep.subr.bf16.mxu0 %v1398
    %1981 = vmatpush1.bf16.msra.mxu0 %v1397
    %1982 = vmatprep.subr.bf16.mxu0 %v1402
    %1983 = vmatpush1.bf16.msra.mxu0 %v1401
    %1984 = vmatprep.subr.bf16.mxu0 %v1406
    %1985 = vmatpush1.bf16.msra.mxu0 %v1405
    %1986 = vmatprep.subr.bf16.mxu0 %v1410
    %1987 = vmatpush1.bf16.msra.mxu0 %v1409
    %1988 = vmatprep.subr.bf16.mxu0 %v1414
    %1989 = vmatpush1.bf16.msra.mxu0 %v1413
    %1990 = vmatprep.mubr.bf16.mxu0 %v133
    %1991 = vmatmul.mubr.bf16.gmra.mrb[0].mxu0 %v132
    %v1992 = vpop.f32.mrb[0].mxu0
    %v1993 = vadd.f32 %v1952, %v1992
    %v1994 = vpop.f32.mrb[0].mxu0
    %v1995 = vadd.f32 %v1954, %v1994
    %v1996 = vpop.f32.mrb[0].mxu0
    %v1997 = vpop.f32.mrb[0].mxu0
    %1998 = vdwg.mxu0
    %v2003 = vcombine.low %v1829, %v1831
    %v2004 = vcombine.low %v1993, %v1995
    %v2006 = vunpack.c.l.s4 1983009808
    %v2007 = vunpack.c.0.s8 %v2006
    %v2008 = vlaneseq
    %v2009 = vshrl.u32 %v2008, 7
    %v2010 = vsub.s32 %v2007, %v2009
    %v2011 = vrot.slane %v2003, %v2010
    %v2013 = vunpack.c.l.s4 1983009808
    %v2014 = vunpack.c.0.s8 %v2013
    %v2015 = vlaneseq
    %v2016 = vshrl.u32 %v2015, 7
    %v2017 = vsub.s32 %v2014, %v2016
    %v2018 = vrot.slane %v2004, %v2017
    %v2019 = vcombine.low %v2011, %v2018
    %v2021 = vadd.f32 %v134, %v2019
    %2022 = vst [vmem:[#allocation2] sm:$0xff] %v2021
    // Predicated region
    $region54: #{simple_ff_forward.1} parent=1 // pred_check
      %p2023 = pneg %p75
    $region55: #{simple_ff_forward.1} parent=1 // pred_check_branch
      %2025 = sbr.rel (%p2023) target = $region57
    $region56: #{simple_ff_forward.1} parent=1 // pred_region
      %v2026 = vld [vmem:[#allocation2] sm:$0xff]
      %v2027 = vld [vmem:[%s2] sm:$0xf]
      %v2029 = vlaneseq
      %v2030 = vshrl.u32 %v2029, 7
      %v2031 = vsub.s32 0, %v2030
      %v2032 = vrot.slane %v2027, %v2031
      %v2033 = vlaneseq
      %v2034 = vshrl.u32 %v2033, 7
      %v2035 = vsub.s32 1, %v2034
      %v2036 = vrot.slane %v2027, %v2035
      %v2037 = vlaneseq
      %v2038 = vshrl.u32 %v2037, 7
      %v2039 = vsub.s32 2, %v2038
      %v2040 = vrot.slane %v2027, %v2039
      %v2041 = vlaneseq
      %v2042 = vshrl.u32 %v2041, 7
      %v2043 = vsub.s32 3, %v2042
      %v2044 = vrot.slane %v2027, %v2043
      %v2045 = vcombine.low %v2032, %v2036
      %v2046 = vcombine.low %v2040, %v2044
      %v2048 = vunpack.c.l.s4 1983009808
      %v2049 = vunpack.c.0.s8 %v2048
      %v2050 = vlaneseq
      %v2051 = vshrl.u32 %v2050, 7
      %v2052 = vsub.s32 %v2049, %v2051
      %v2053 = vrot.slane %v2045, %v2052
      %v2055 = vunpack.c.l.s4 1983009808
      %v2056 = vunpack.c.0.s8 %v2055
      %v2057 = vlaneseq
      %v2058 = vshrl.u32 %v2057, 7
      %v2059 = vsub.s32 %v2056, %v2058
      %v2060 = vrot.slane %v2046, %v2059
      %v2061 = vcombine.low %v2053, %v2060
      %v2063 = vadd.f32 %v2026, %v2061
      %v2064 = vmax.f32 %v2063, 0.0
      %v2066 = vcombine.high %v2064, %v2064
      %v2068 = vunpack.c.l.s4 1983009808
      %v2069 = vunpack.c.0.s8 %v2068
      %v2070 = vlaneseq
      %v2071 = vshrl.u32 %v2070, 7
      %v2072 = vsub.s32 %v2069, %v2071
      %v2073 = vrot.slane %v2064, %v2072
      %v2075 = vunpack.c.l.s4 1983009808
      %v2076 = vunpack.c.0.s8 %v2075
      %v2077 = vlaneseq
      %v2078 = vshrl.u32 %v2077, 7
      %v2079 = vsub.s32 %v2076, %v2078
      %v2080 = vrot.slane %v2066, %v2079
      %v2081 = vcombine.high %v2073, %v2073
      %v2082 = vcombine.high %v2080, %v2080
      %v2087 = vpack.c.bf16 %v2073, %v2073
      %v2088 = vpack.c.bf16 %v2081, %v2081
      %v2089 = vpack.c.bf16 %v2080, %v2080
      %v2090 = vpack.c.bf16 %v2082, %v2082
      %v2091 = vld [vmem:[#allocation6] sm:$0xff]
      %v2092 = vld [vmem:[#allocation6 + $0x8] sm:$0xff]
      %v2093 = vld [vmem:[#allocation6 + $0x10] sm:$0xff]
      %v2094 = vld [vmem:[#allocation6 + $0x18] sm:$0xff]
      %v2095 = vld [vmem:[#allocation6 + $0x20] sm:$0xff]
      %v2096 = vld [vmem:[#allocation6 + $0x28] sm:$0xff]
      %v2097 = vld [vmem:[#allocation6 + $0x30] sm:$0xff]
      %v2098 = vld [vmem:[#allocation6 + $0x38] sm:$0xff]
      %v2099 = vld [vmem:[#allocation6 + $0x40] sm:$0xff]
      %v2100 = vld [vmem:[#allocation6 + $0x48] sm:$0xff]
      %v2101 = vld [vmem:[#allocation6 + $0x50] sm:$0xff]
      %v2102 = vld [vmem:[#allocation6 + $0x58] sm:$0xff]
      %v2103 = vld [vmem:[#allocation6 + $0x60] sm:$0xff]
      %v2104 = vld [vmem:[#allocation6 + $0x68] sm:$0xff]
      %v2105 = vld [vmem:[#allocation6 + $0x70] sm:$0xff]
      %v2106 = vld [vmem:[#allocation6 + $0x78] sm:$0xff]
      %v2107 = vld [vmem:[#allocation6 + $0x80] sm:$0xff]
      %v2108 = vld [vmem:[#allocation6 + $0x88] sm:$0xff]
      %v2109 = vld [vmem:[#allocation6 + $0x90] sm:$0xff]
      %v2110 = vld [vmem:[#allocation6 + $0x98] sm:$0xff]
      %v2111 = vld [vmem:[#allocation6 + $0xa0] sm:$0xff]
      %v2112 = vld [vmem:[#allocation6 + $0xa8] sm:$0xff]
      %v2113 = vld [vmem:[#allocation6 + $0xb0] sm:$0xff]
      %v2114 = vld [vmem:[#allocation6 + $0xb8] sm:$0xff]
      %v2115 = vld [vmem:[#allocation6 + $0xc0] sm:$0xff]
      %v2116 = vld [vmem:[#allocation6 + $0xc8] sm:$0xff]
      %v2117 = vld [vmem:[#allocation6 + $0xd0] sm:$0xff]
      %v2118 = vld [vmem:[#allocation6 + $0xd8] sm:$0xff]
      %v2119 = vld [vmem:[#allocation6 + $0xe0] sm:$0xff]
      %v2120 = vld [vmem:[#allocation6 + $0xe8] sm:$0xff]
      %v2121 = vld [vmem:[#allocation6 + $0xf0] sm:$0xff]
      %v2122 = vld [vmem:[#allocation6 + $0xf8] sm:$0xff]
      %v2123 = vld [vmem:[#allocation6 + $0x100] sm:$0xff]
      %v2124 = vld [vmem:[#allocation6 + $0x108] sm:$0xff]
      %v2125 = vld [vmem:[#allocation6 + $0x110] sm:$0xff]
      %v2126 = vld [vmem:[#allocation6 + $0x118] sm:$0xff]
      %v2127 = vld [vmem:[#allocation6 + $0x120] sm:$0xff]
      %v2128 = vld [vmem:[#allocation6 + $0x128] sm:$0xff]
      %v2129 = vld [vmem:[#allocation6 + $0x130] sm:$0xff]
      %v2130 = vld [vmem:[#allocation6 + $0x138] sm:$0xff]
      %v2131 = vld [vmem:[#allocation6 + $0x140] sm:$0xff]
      %v2132 = vld [vmem:[#allocation6 + $0x148] sm:$0xff]
      %v2133 = vld [vmem:[#allocation6 + $0x150] sm:$0xff]
      %v2134 = vld [vmem:[#allocation6 + $0x158] sm:$0xff]
      %v2135 = vld [vmem:[#allocation6 + $0x160] sm:$0xff]
      %v2136 = vld [vmem:[#allocation6 + $0x168] sm:$0xff]
      %v2137 = vld [vmem:[#allocation6 + $0x170] sm:$0xff]
      %v2138 = vld [vmem:[#allocation6 + $0x178] sm:$0xff]
      %v2139 = vld [vmem:[#allocation6 + $0x180] sm:$0xff]
      %v2140 = vld [vmem:[#allocation6 + $0x188] sm:$0xff]
      %v2141 = vld [vmem:[#allocation6 + $0x190] sm:$0xff]
      %v2142 = vld [vmem:[#allocation6 + $0x198] sm:$0xff]
      %v2143 = vld [vmem:[#allocation6 + $0x1a0] sm:$0xff]
      %v2144 = vld [vmem:[#allocation6 + $0x1a8] sm:$0xff]
      %v2145 = vld [vmem:[#allocation6 + $0x1b0] sm:$0xff]
      %v2146 = vld [vmem:[#allocation6 + $0x1b8] sm:$0xff]
      %v2147 = vld [vmem:[#allocation6 + $0x1c0] sm:$0xff]
      %v2148 = vld [vmem:[#allocation6 + $0x1c8] sm:$0xff]
      %v2149 = vld [vmem:[#allocation6 + $0x1d0] sm:$0xff]
      %v2150 = vld [vmem:[#allocation6 + $0x1d8] sm:$0xff]
      %v2151 = vld [vmem:[#allocation6 + $0x1e0] sm:$0xff]
      %v2152 = vld [vmem:[#allocation6 + $0x1e8] sm:$0xff]
      %v2153 = vld [vmem:[#allocation6 + $0x1f0] sm:$0xff]
      %v2154 = vld [vmem:[#allocation6 + $0x1f8] sm:$0xff]
      %v2155 = vld [vmem:[#allocation6 + $0x200] sm:$0xff]
      %v2156 = vld [vmem:[#allocation6 + $0x208] sm:$0xff]
      %v2157 = vld [vmem:[#allocation6 + $0x210] sm:$0xff]
      %v2158 = vld [vmem:[#allocation6 + $0x218] sm:$0xff]
      %v2159 = vld [vmem:[#allocation6 + $0x220] sm:$0xff]
      %v2160 = vld [vmem:[#allocation6 + $0x228] sm:$0xff]
      %v2161 = vld [vmem:[#allocation6 + $0x230] sm:$0xff]
      %v2162 = vld [vmem:[#allocation6 + $0x238] sm:$0xff]
      %v2163 = vld [vmem:[#allocation6 + $0x240] sm:$0xff]
      %v2164 = vld [vmem:[#allocation6 + $0x248] sm:$0xff]
      %v2165 = vld [vmem:[#allocation6 + $0x250] sm:$0xff]
      %v2166 = vld [vmem:[#allocation6 + $0x258] sm:$0xff]
      %v2167 = vld [vmem:[#allocation6 + $0x260] sm:$0xff]
      %v2168 = vld [vmem:[#allocation6 + $0x268] sm:$0xff]
      %v2169 = vld [vmem:[#allocation6 + $0x270] sm:$0xff]
      %v2170 = vld [vmem:[#allocation6 + $0x278] sm:$0xff]
      %v2171 = vld [vmem:[#allocation6 + $0x280] sm:$0xff]
      %v2172 = vld [vmem:[#allocation6 + $0x288] sm:$0xff]
      %v2173 = vld [vmem:[#allocation6 + $0x290] sm:$0xff]
      %v2174 = vld [vmem:[#allocation6 + $0x298] sm:$0xff]
      %v2175 = vld [vmem:[#allocation6 + $0x2a0] sm:$0xff]
      %v2176 = vld [vmem:[#allocation6 + $0x2a8] sm:$0xff]
      %v2177 = vld [vmem:[#allocation6 + $0x2b0] sm:$0xff]
      %v2178 = vld [vmem:[#allocation6 + $0x2b8] sm:$0xff]
      %v2179 = vld [vmem:[#allocation6 + $0x2c0] sm:$0xff]
      %v2180 = vld [vmem:[#allocation6 + $0x2c8] sm:$0xff]
      %v2181 = vld [vmem:[#allocation6 + $0x2d0] sm:$0xff]
      %v2182 = vld [vmem:[#allocation6 + $0x2d8] sm:$0xff]
      %v2183 = vld [vmem:[#allocation6 + $0x2e0] sm:$0xff]
      %v2184 = vld [vmem:[#allocation6 + $0x2e8] sm:$0xff]
      %v2185 = vld [vmem:[#allocation6 + $0x2f0] sm:$0xff]
      %v2186 = vld [vmem:[#allocation6 + $0x2f8] sm:$0xff]
      %v2187 = vld [vmem:[#allocation6 + $0x300] sm:$0xff]
      %v2188 = vld [vmem:[#allocation6 + $0x308] sm:$0xff]
      %v2189 = vld [vmem:[#allocation6 + $0x310] sm:$0xff]
      %v2190 = vld [vmem:[#allocation6 + $0x318] sm:$0xff]
      %v2191 = vld [vmem:[#allocation6 + $0x320] sm:$0xff]
      %v2192 = vld [vmem:[#allocation6 + $0x328] sm:$0xff]
      %v2193 = vld [vmem:[#allocation6 + $0x330] sm:$0xff]
      %v2194 = vld [vmem:[#allocation6 + $0x338] sm:$0xff]
      %v2195 = vld [vmem:[#allocation6 + $0x340] sm:$0xff]
      %v2196 = vld [vmem:[#allocation6 + $0x348] sm:$0xff]
      %v2197 = vld [vmem:[#allocation6 + $0x350] sm:$0xff]
      %v2198 = vld [vmem:[#allocation6 + $0x358] sm:$0xff]
      %v2199 = vld [vmem:[#allocation6 + $0x360] sm:$0xff]
      %v2200 = vld [vmem:[#allocation6 + $0x368] sm:$0xff]
      %v2201 = vld [vmem:[#allocation6 + $0x370] sm:$0xff]
      %v2202 = vld [vmem:[#allocation6 + $0x378] sm:$0xff]
      %v2203 = vld [vmem:[#allocation6 + $0x380] sm:$0xff]
      %v2204 = vld [vmem:[#allocation6 + $0x388] sm:$0xff]
      %v2205 = vld [vmem:[#allocation6 + $0x390] sm:$0xff]
      %v2206 = vld [vmem:[#allocation6 + $0x398] sm:$0xff]
      %v2207 = vld [vmem:[#allocation6 + $0x3a0] sm:$0xff]
      %v2208 = vld [vmem:[#allocation6 + $0x3a8] sm:$0xff]
      %v2209 = vld [vmem:[#allocation6 + $0x3b0] sm:$0xff]
      %v2210 = vld [vmem:[#allocation6 + $0x3b8] sm:$0xff]
      %v2211 = vld [vmem:[#allocation6 + $0x3c0] sm:$0xff]
      %v2212 = vld [vmem:[#allocation6 + $0x3c8] sm:$0xff]
      %v2213 = vld [vmem:[#allocation6 + $0x3d0] sm:$0xff]
      %v2214 = vld [vmem:[#allocation6 + $0x3d8] sm:$0xff]
      %v2215 = vld [vmem:[#allocation6 + $0x3e0] sm:$0xff]
      %v2216 = vld [vmem:[#allocation6 + $0x3e8] sm:$0xff]
      %v2217 = vld [vmem:[#allocation6 + $0x3f0] sm:$0xff]
      %v2218 = vld [vmem:[#allocation6 + $0x3f8] sm:$0xff]
      %v2219 = vld [vmem:[%s4] sm:$0xf]
      %v2221 = vlaneseq
      %v2222 = vshrl.u32 %v2221, 7
      %v2223 = vsub.s32 0, %v2222
      %v2224 = vrot.slane %v2219, %v2223
      %v2225 = vlaneseq
      %v2226 = vshrl.u32 %v2225, 7
      %v2227 = vsub.s32 1, %v2226
      %v2228 = vrot.slane %v2219, %v2227
      %v2229 = vlaneseq
      %v2230 = vshrl.u32 %v2229, 7
      %v2231 = vsub.s32 2, %v2230
      %v2232 = vrot.slane %v2219, %v2231
      %v2233 = vlaneseq
      %v2234 = vshrl.u32 %v2233, 7
      %v2235 = vsub.s32 3, %v2234
      %v2236 = vrot.slane %v2219, %v2235
      %v2369 = vunpack.c.l.b16 %v2091
      %v2370 = vunpack.c.h.b16 %v2091
      %v2371 = vunpack.c.l.b16 %v2092
      %v2372 = vunpack.c.h.b16 %v2092
      %v2373 = vunpack.c.l.b16 %v2093
      %v2374 = vunpack.c.h.b16 %v2093
      %v2375 = vunpack.c.l.b16 %v2094
      %v2376 = vunpack.c.h.b16 %v2094
      %v2377 = vunpack.c.l.b16 %v2095
      %v2378 = vunpack.c.h.b16 %v2095
      %v2379 = vunpack.c.l.b16 %v2096
      %v2380 = vunpack.c.h.b16 %v2096
      %v2381 = vunpack.c.l.b16 %v2097
      %v2382 = vunpack.c.h.b16 %v2097
      %v2383 = vunpack.c.l.b16 %v2098
      %v2384 = vunpack.c.h.b16 %v2098
      %v2385 = vunpack.c.l.b16 %v2099
      %v2386 = vunpack.c.h.b16 %v2099
      %v2387 = vunpack.c.l.b16 %v2100
      %v2388 = vunpack.c.h.b16 %v2100
      %v2389 = vunpack.c.l.b16 %v2101
      %v2390 = vunpack.c.h.b16 %v2101
      %v2391 = vunpack.c.l.b16 %v2102
      %v2392 = vunpack.c.h.b16 %v2102
      %v2393 = vunpack.c.l.b16 %v2103
      %v2394 = vunpack.c.h.b16 %v2103
      %v2395 = vunpack.c.l.b16 %v2104
      %v2396 = vunpack.c.h.b16 %v2104
      %v2397 = vunpack.c.l.b16 %v2105
      %v2398 = vunpack.c.h.b16 %v2105
      %v2399 = vunpack.c.l.b16 %v2106
      %v2400 = vunpack.c.h.b16 %v2106
      %v2401 = vunpack.c.l.b16 %v2107
      %v2402 = vunpack.c.h.b16 %v2107
      %v2403 = vunpack.c.l.b16 %v2108
      %v2404 = vunpack.c.h.b16 %v2108
      %v2405 = vunpack.c.l.b16 %v2109
      %v2406 = vunpack.c.h.b16 %v2109
      %v2407 = vunpack.c.l.b16 %v2110
      %v2408 = vunpack.c.h.b16 %v2110
      %v2409 = vunpack.c.l.b16 %v2111
      %v2410 = vunpack.c.h.b16 %v2111
      %v2411 = vunpack.c.l.b16 %v2112
      %v2412 = vunpack.c.h.b16 %v2112
      %v2413 = vunpack.c.l.b16 %v2113
      %v2414 = vunpack.c.h.b16 %v2113
      %v2415 = vunpack.c.l.b16 %v2114
      %v2416 = vunpack.c.h.b16 %v2114
      %v2417 = vunpack.c.l.b16 %v2115
      %v2418 = vunpack.c.h.b16 %v2115
      %v2419 = vunpack.c.l.b16 %v2116
      %v2420 = vunpack.c.h.b16 %v2116
      %v2421 = vunpack.c.l.b16 %v2117
      %v2422 = vunpack.c.h.b16 %v2117
      %v2423 = vunpack.c.l.b16 %v2118
      %v2424 = vunpack.c.h.b16 %v2118
      %v2425 = vunpack.c.l.b16 %v2119
      %v2426 = vunpack.c.h.b16 %v2119
      %v2427 = vunpack.c.l.b16 %v2120
      %v2428 = vunpack.c.h.b16 %v2120
      %v2429 = vunpack.c.l.b16 %v2121
      %v2430 = vunpack.c.h.b16 %v2121
      %v2431 = vunpack.c.l.b16 %v2122
      %v2432 = vunpack.c.h.b16 %v2122
      %v2433 = vunpack.c.l.b16 %v2123
      %v2434 = vunpack.c.h.b16 %v2123
      %v2435 = vunpack.c.l.b16 %v2124
      %v2436 = vunpack.c.h.b16 %v2124
      %v2437 = vunpack.c.l.b16 %v2125
      %v2438 = vunpack.c.h.b16 %v2125
      %v2439 = vunpack.c.l.b16 %v2126
      %v2440 = vunpack.c.h.b16 %v2126
      %v2441 = vunpack.c.l.b16 %v2127
      %v2442 = vunpack.c.h.b16 %v2127
      %v2443 = vunpack.c.l.b16 %v2128
      %v2444 = vunpack.c.h.b16 %v2128
      %v2445 = vunpack.c.l.b16 %v2129
      %v2446 = vunpack.c.h.b16 %v2129
      %v2447 = vunpack.c.l.b16 %v2130
      %v2448 = vunpack.c.h.b16 %v2130
      %v2449 = vunpack.c.l.b16 %v2131
      %v2450 = vunpack.c.h.b16 %v2131
      %v2451 = vunpack.c.l.b16 %v2132
      %v2452 = vunpack.c.h.b16 %v2132
      %v2453 = vunpack.c.l.b16 %v2133
      %v2454 = vunpack.c.h.b16 %v2133
      %v2455 = vunpack.c.l.b16 %v2134
      %v2456 = vunpack.c.h.b16 %v2134
      %v2457 = vunpack.c.l.b16 %v2135
      %v2458 = vunpack.c.h.b16 %v2135
      %v2459 = vunpack.c.l.b16 %v2136
      %v2460 = vunpack.c.h.b16 %v2136
      %v2461 = vunpack.c.l.b16 %v2137
      %v2462 = vunpack.c.h.b16 %v2137
      %v2463 = vunpack.c.l.b16 %v2138
      %v2464 = vunpack.c.h.b16 %v2138
      %v2465 = vunpack.c.l.b16 %v2139
      %v2466 = vunpack.c.h.b16 %v2139
      %v2467 = vunpack.c.l.b16 %v2140
      %v2468 = vunpack.c.h.b16 %v2140
      %v2469 = vunpack.c.l.b16 %v2141
      %v2470 = vunpack.c.h.b16 %v2141
      %v2471 = vunpack.c.l.b16 %v2142
      %v2472 = vunpack.c.h.b16 %v2142
      %v2473 = vunpack.c.l.b16 %v2143
      %v2474 = vunpack.c.h.b16 %v2143
      %v2475 = vunpack.c.l.b16 %v2144
      %v2476 = vunpack.c.h.b16 %v2144
      %v2477 = vunpack.c.l.b16 %v2145
      %v2478 = vunpack.c.h.b16 %v2145
      %v2479 = vunpack.c.l.b16 %v2146
      %v2480 = vunpack.c.h.b16 %v2146
      %v2481 = vunpack.c.l.b16 %v2147
      %v2482 = vunpack.c.h.b16 %v2147
      %v2483 = vunpack.c.l.b16 %v2148
      %v2484 = vunpack.c.h.b16 %v2148
      %v2485 = vunpack.c.l.b16 %v2149
      %v2486 = vunpack.c.h.b16 %v2149
      %v2487 = vunpack.c.l.b16 %v2150
      %v2488 = vunpack.c.h.b16 %v2150
      %v2489 = vunpack.c.l.b16 %v2151
      %v2490 = vunpack.c.h.b16 %v2151
      %v2491 = vunpack.c.l.b16 %v2152
      %v2492 = vunpack.c.h.b16 %v2152
      %v2493 = vunpack.c.l.b16 %v2153
      %v2494 = vunpack.c.h.b16 %v2153
      %v2495 = vunpack.c.l.b16 %v2154
      %v2496 = vunpack.c.h.b16 %v2154
      %v2497 = vunpack.c.l.b16 %v2155
      %v2498 = vunpack.c.h.b16 %v2155
      %v2499 = vunpack.c.l.b16 %v2156
      %v2500 = vunpack.c.h.b16 %v2156
      %v2501 = vunpack.c.l.b16 %v2157
      %v2502 = vunpack.c.h.b16 %v2157
      %v2503 = vunpack.c.l.b16 %v2158
      %v2504 = vunpack.c.h.b16 %v2158
      %v2505 = vunpack.c.l.b16 %v2159
      %v2506 = vunpack.c.h.b16 %v2159
      %v2507 = vunpack.c.l.b16 %v2160
      %v2508 = vunpack.c.h.b16 %v2160
      %v2509 = vunpack.c.l.b16 %v2161
      %v2510 = vunpack.c.h.b16 %v2161
      %v2511 = vunpack.c.l.b16 %v2162
      %v2512 = vunpack.c.h.b16 %v2162
      %v2513 = vunpack.c.l.b16 %v2163
      %v2514 = vunpack.c.h.b16 %v2163
      %v2515 = vunpack.c.l.b16 %v2164
      %v2516 = vunpack.c.h.b16 %v2164
      %v2517 = vunpack.c.l.b16 %v2165
      %v2518 = vunpack.c.h.b16 %v2165
      %v2519 = vunpack.c.l.b16 %v2166
      %v2520 = vunpack.c.h.b16 %v2166
      %v2521 = vunpack.c.l.b16 %v2167
      %v2522 = vunpack.c.h.b16 %v2167
      %v2523 = vunpack.c.l.b16 %v2168
      %v2524 = vunpack.c.h.b16 %v2168
      %v2525 = vunpack.c.l.b16 %v2169
      %v2526 = vunpack.c.h.b16 %v2169
      %v2527 = vunpack.c.l.b16 %v2170
      %v2528 = vunpack.c.h.b16 %v2170
      %v2529 = vunpack.c.l.b16 %v2171
      %v2530 = vunpack.c.h.b16 %v2171
      %v2531 = vunpack.c.l.b16 %v2172
      %v2532 = vunpack.c.h.b16 %v2172
      %v2533 = vunpack.c.l.b16 %v2173
      %v2534 = vunpack.c.h.b16 %v2173
      %v2535 = vunpack.c.l.b16 %v2174
      %v2536 = vunpack.c.h.b16 %v2174
      %v2537 = vunpack.c.l.b16 %v2175
      %v2538 = vunpack.c.h.b16 %v2175
      %v2539 = vunpack.c.l.b16 %v2176
      %v2540 = vunpack.c.h.b16 %v2176
      %v2541 = vunpack.c.l.b16 %v2177
      %v2542 = vunpack.c.h.b16 %v2177
      %v2543 = vunpack.c.l.b16 %v2178
      %v2544 = vunpack.c.h.b16 %v2178
      %v2545 = vunpack.c.l.b16 %v2179
      %v2546 = vunpack.c.h.b16 %v2179
      %v2547 = vunpack.c.l.b16 %v2180
      %v2548 = vunpack.c.h.b16 %v2180
      %v2549 = vunpack.c.l.b16 %v2181
      %v2550 = vunpack.c.h.b16 %v2181
      %v2551 = vunpack.c.l.b16 %v2182
      %v2552 = vunpack.c.h.b16 %v2182
      %v2553 = vunpack.c.l.b16 %v2183
      %v2554 = vunpack.c.h.b16 %v2183
      %v2555 = vunpack.c.l.b16 %v2184
      %v2556 = vunpack.c.h.b16 %v2184
      %v2557 = vunpack.c.l.b16 %v2185
      %v2558 = vunpack.c.h.b16 %v2185
      %v2559 = vunpack.c.l.b16 %v2186
      %v2560 = vunpack.c.h.b16 %v2186
      %v2561 = vunpack.c.l.b16 %v2187
      %v2562 = vunpack.c.h.b16 %v2187
      %v2563 = vunpack.c.l.b16 %v2188
      %v2564 = vunpack.c.h.b16 %v2188
      %v2565 = vunpack.c.l.b16 %v2189
      %v2566 = vunpack.c.h.b16 %v2189
      %v2567 = vunpack.c.l.b16 %v2190
      %v2568 = vunpack.c.h.b16 %v2190
      %v2569 = vunpack.c.l.b16 %v2191
      %v2570 = vunpack.c.h.b16 %v2191
      %v2571 = vunpack.c.l.b16 %v2192
      %v2572 = vunpack.c.h.b16 %v2192
      %v2573 = vunpack.c.l.b16 %v2193
      %v2574 = vunpack.c.h.b16 %v2193
      %v2575 = vunpack.c.l.b16 %v2194
      %v2576 = vunpack.c.h.b16 %v2194
      %v2577 = vunpack.c.l.b16 %v2195
      %v2578 = vunpack.c.h.b16 %v2195
      %v2579 = vunpack.c.l.b16 %v2196
      %v2580 = vunpack.c.h.b16 %v2196
      %v2581 = vunpack.c.l.b16 %v2197
      %v2582 = vunpack.c.h.b16 %v2197
      %v2583 = vunpack.c.l.b16 %v2198
      %v2584 = vunpack.c.h.b16 %v2198
      %v2585 = vunpack.c.l.b16 %v2199
      %v2586 = vunpack.c.h.b16 %v2199
      %v2587 = vunpack.c.l.b16 %v2200
      %v2588 = vunpack.c.h.b16 %v2200
      %v2589 = vunpack.c.l.b16 %v2201
      %v2590 = vunpack.c.h.b16 %v2201
      %v2591 = vunpack.c.l.b16 %v2202
      %v2592 = vunpack.c.h.b16 %v2202
      %v2593 = vunpack.c.l.b16 %v2203
      %v2594 = vunpack.c.h.b16 %v2203
      %v2595 = vunpack.c.l.b16 %v2204
      %v2596 = vunpack.c.h.b16 %v2204
      %v2597 = vunpack.c.l.b16 %v2205
      %v2598 = vunpack.c.h.b16 %v2205
      %v2599 = vunpack.c.l.b16 %v2206
      %v2600 = vunpack.c.h.b16 %v2206
      %v2601 = vunpack.c.l.b16 %v2207
      %v2602 = vunpack.c.h.b16 %v2207
      %v2603 = vunpack.c.l.b16 %v2208
      %v2604 = vunpack.c.h.b16 %v2208
      %v2605 = vunpack.c.l.b16 %v2209
      %v2606 = vunpack.c.h.b16 %v2209
      %v2607 = vunpack.c.l.b16 %v2210
      %v2608 = vunpack.c.h.b16 %v2210
      %v2609 = vunpack.c.l.b16 %v2211
      %v2610 = vunpack.c.h.b16 %v2211
      %v2611 = vunpack.c.l.b16 %v2212
      %v2612 = vunpack.c.h.b16 %v2212
      %v2613 = vunpack.c.l.b16 %v2213
      %v2614 = vunpack.c.h.b16 %v2213
      %v2615 = vunpack.c.l.b16 %v2214
      %v2616 = vunpack.c.h.b16 %v2214
      %v2617 = vunpack.c.l.b16 %v2215
      %v2618 = vunpack.c.h.b16 %v2215
      %v2619 = vunpack.c.l.b16 %v2216
      %v2620 = vunpack.c.h.b16 %v2216
      %v2621 = vunpack.c.l.b16 %v2217
      %v2622 = vunpack.c.h.b16 %v2217
      %v2623 = vunpack.c.l.b16 %v2218
      %v2624 = vunpack.c.h.b16 %v2218
      %v2625 = vpack.c.b16 %v2373, %v2369
      %v2626 = vpack.c.b16 %v2374, %v2370
      %v2627 = vpack.c.b16 %v2375, %v2371
      %v2628 = vpack.c.b16 %v2376, %v2372
      %v2629 = vpack.c.b16 %v2381, %v2377
      %v2630 = vpack.c.b16 %v2382, %v2378
      %v2631 = vpack.c.b16 %v2383, %v2379
      %v2632 = vpack.c.b16 %v2384, %v2380
      %v2633 = vpack.c.b16 %v2389, %v2385
      %v2634 = vpack.c.b16 %v2390, %v2386
      %v2635 = vpack.c.b16 %v2391, %v2387
      %v2636 = vpack.c.b16 %v2392, %v2388
      %v2637 = vpack.c.b16 %v2397, %v2393
      %v2638 = vpack.c.b16 %v2398, %v2394
      %v2639 = vpack.c.b16 %v2399, %v2395
      %v2640 = vpack.c.b16 %v2400, %v2396
      %v2641 = vpack.c.b16 %v2405, %v2401
      %v2642 = vpack.c.b16 %v2406, %v2402
      %v2643 = vpack.c.b16 %v2407, %v2403
      %v2644 = vpack.c.b16 %v2408, %v2404
      %v2645 = vpack.c.b16 %v2413, %v2409
      %v2646 = vpack.c.b16 %v2414, %v2410
      %v2647 = vpack.c.b16 %v2415, %v2411
      %v2648 = vpack.c.b16 %v2416, %v2412
      %v2649 = vpack.c.b16 %v2421, %v2417
      %v2650 = vpack.c.b16 %v2422, %v2418
      %v2651 = vpack.c.b16 %v2423, %v2419
      %v2652 = vpack.c.b16 %v2424, %v2420
      %v2653 = vpack.c.b16 %v2429, %v2425
      %v2654 = vpack.c.b16 %v2430, %v2426
      %v2655 = vpack.c.b16 %v2431, %v2427
      %v2656 = vpack.c.b16 %v2432, %v2428
      %v2657 = vpack.c.b16 %v2437, %v2433
      %v2658 = vpack.c.b16 %v2438, %v2434
      %v2659 = vpack.c.b16 %v2439, %v2435
      %v2660 = vpack.c.b16 %v2440, %v2436
      %v2661 = vpack.c.b16 %v2445, %v2441
      %v2662 = vpack.c.b16 %v2446, %v2442
      %v2663 = vpack.c.b16 %v2447, %v2443
      %v2664 = vpack.c.b16 %v2448, %v2444
      %v2665 = vpack.c.b16 %v2453, %v2449
      %v2666 = vpack.c.b16 %v2454, %v2450
      %v2667 = vpack.c.b16 %v2455, %v2451
      %v2668 = vpack.c.b16 %v2456, %v2452
      %v2669 = vpack.c.b16 %v2461, %v2457
      %v2670 = vpack.c.b16 %v2462, %v2458
      %v2671 = vpack.c.b16 %v2463, %v2459
      %v2672 = vpack.c.b16 %v2464, %v2460
      %v2673 = vpack.c.b16 %v2469, %v2465
      %v2674 = vpack.c.b16 %v2470, %v2466
      %v2675 = vpack.c.b16 %v2471, %v2467
      %v2676 = vpack.c.b16 %v2472, %v2468
      %v2677 = vpack.c.b16 %v2477, %v2473
      %v2678 = vpack.c.b16 %v2478, %v2474
      %v2679 = vpack.c.b16 %v2479, %v2475
      %v2680 = vpack.c.b16 %v2480, %v2476
      %v2681 = vpack.c.b16 %v2485, %v2481
      %v2682 = vpack.c.b16 %v2486, %v2482
      %v2683 = vpack.c.b16 %v2487, %v2483
      %v2684 = vpack.c.b16 %v2488, %v2484
      %v2685 = vpack.c.b16 %v2493, %v2489
      %v2686 = vpack.c.b16 %v2494, %v2490
      %v2687 = vpack.c.b16 %v2495, %v2491
      %v2688 = vpack.c.b16 %v2496, %v2492
      %v2689 = vpack.c.b16 %v2501, %v2497
      %v2690 = vpack.c.b16 %v2502, %v2498
      %v2691 = vpack.c.b16 %v2503, %v2499
      %v2692 = vpack.c.b16 %v2504, %v2500
      %v2693 = vpack.c.b16 %v2509, %v2505
      %v2694 = vpack.c.b16 %v2510, %v2506
      %v2695 = vpack.c.b16 %v2511, %v2507
      %v2696 = vpack.c.b16 %v2512, %v2508
      %v2697 = vpack.c.b16 %v2517, %v2513
      %v2698 = vpack.c.b16 %v2518, %v2514
      %v2699 = vpack.c.b16 %v2519, %v2515
      %v2700 = vpack.c.b16 %v2520, %v2516
      %v2701 = vpack.c.b16 %v2525, %v2521
      %v2702 = vpack.c.b16 %v2526, %v2522
      %v2703 = vpack.c.b16 %v2527, %v2523
      %v2704 = vpack.c.b16 %v2528, %v2524
      %v2705 = vpack.c.b16 %v2533, %v2529
      %v2706 = vpack.c.b16 %v2534, %v2530
      %v2707 = vpack.c.b16 %v2535, %v2531
      %v2708 = vpack.c.b16 %v2536, %v2532
      %v2709 = vpack.c.b16 %v2541, %v2537
      %v2710 = vpack.c.b16 %v2542, %v2538
      %v2711 = vpack.c.b16 %v2543, %v2539
      %v2712 = vpack.c.b16 %v2544, %v2540
      %v2713 = vpack.c.b16 %v2549, %v2545
      %v2714 = vpack.c.b16 %v2550, %v2546
      %v2715 = vpack.c.b16 %v2551, %v2547
      %v2716 = vpack.c.b16 %v2552, %v2548
      %v2717 = vpack.c.b16 %v2557, %v2553
      %v2718 = vpack.c.b16 %v2558, %v2554
      %v2719 = vpack.c.b16 %v2559, %v2555
      %v2720 = vpack.c.b16 %v2560, %v2556
      %v2721 = vpack.c.b16 %v2565, %v2561
      %v2722 = vpack.c.b16 %v2566, %v2562
      %v2723 = vpack.c.b16 %v2567, %v2563
      %v2724 = vpack.c.b16 %v2568, %v2564
      %v2725 = vpack.c.b16 %v2573, %v2569
      %v2726 = vpack.c.b16 %v2574, %v2570
      %v2727 = vpack.c.b16 %v2575, %v2571
      %v2728 = vpack.c.b16 %v2576, %v2572
      %v2729 = vpack.c.b16 %v2581, %v2577
      %v2730 = vpack.c.b16 %v2582, %v2578
      %v2731 = vpack.c.b16 %v2583, %v2579
      %v2732 = vpack.c.b16 %v2584, %v2580
      %v2733 = vpack.c.b16 %v2589, %v2585
      %v2734 = vpack.c.b16 %v2590, %v2586
      %v2735 = vpack.c.b16 %v2591, %v2587
      %v2736 = vpack.c.b16 %v2592, %v2588
      %v2737 = vpack.c.b16 %v2597, %v2593
      %v2738 = vpack.c.b16 %v2598, %v2594
      %v2739 = vpack.c.b16 %v2599, %v2595
      %v2740 = vpack.c.b16 %v2600, %v2596
      %v2741 = vpack.c.b16 %v2605, %v2601
      %v2742 = vpack.c.b16 %v2606, %v2602
      %v2743 = vpack.c.b16 %v2607, %v2603
      %v2744 = vpack.c.b16 %v2608, %v2604
      %v2745 = vpack.c.b16 %v2613, %v2609
      %v2746 = vpack.c.b16 %v2614, %v2610
      %v2747 = vpack.c.b16 %v2615, %v2611
      %v2748 = vpack.c.b16 %v2616, %v2612
      %v2749 = vpack.c.b16 %v2621, %v2617
      %v2750 = vpack.c.b16 %v2622, %v2618
      %v2751 = vpack.c.b16 %v2623, %v2619
      %v2752 = vpack.c.b16 %v2624, %v2620
      %2881 = vmatprep.subr.bf16.mxu0 %v2626
      %2882 = vmatpush1.bf16.msra.mxu0 %v2625
      %2883 = vmatprep.subr.bf16.mxu0 %v2630
      %2884 = vmatpush1.bf16.msra.mxu0 %v2629
      %2885 = vmatprep.subr.bf16.mxu0 %v2634
      %2886 = vmatpush1.bf16.msra.mxu0 %v2633
      %2887 = vmatprep.subr.bf16.mxu0 %v2638
      %2888 = vmatpush1.bf16.msra.mxu0 %v2637
      %2889 = vmatprep.subr.bf16.mxu0 %v2642
      %2890 = vmatpush1.bf16.msra.mxu0 %v2641
      %2891 = vmatprep.subr.bf16.mxu0 %v2646
      %2892 = vmatpush1.bf16.msra.mxu0 %v2645
      %2893 = vmatprep.subr.bf16.mxu0 %v2650
      %2894 = vmatpush1.bf16.msra.mxu0 %v2649
      %2895 = vmatprep.subr.bf16.mxu0 %v2654
      %2896 = vmatpush1.bf16.msra.mxu0 %v2653
      %2897 = vmatprep.subr.bf16.mxu0 %v2658
      %2898 = vmatpush1.bf16.msra.mxu0 %v2657
      %2899 = vmatprep.subr.bf16.mxu0 %v2662
      %2900 = vmatpush1.bf16.msra.mxu0 %v2661
      %2901 = vmatprep.subr.bf16.mxu0 %v2666
      %2902 = vmatpush1.bf16.msra.mxu0 %v2665
      %2903 = vmatprep.subr.bf16.mxu0 %v2670
      %2904 = vmatpush1.bf16.msra.mxu0 %v2669
      %2905 = vmatprep.subr.bf16.mxu0 %v2674
      %2906 = vmatpush1.bf16.msra.mxu0 %v2673
      %2907 = vmatprep.subr.bf16.mxu0 %v2678
      %2908 = vmatpush1.bf16.msra.mxu0 %v2677
      %2909 = vmatprep.subr.bf16.mxu0 %v2682
      %2910 = vmatpush1.bf16.msra.mxu0 %v2681
      %2911 = vmatprep.subr.bf16.mxu0 %v2686
      %2912 = vmatpush1.bf16.msra.mxu0 %v2685
      %2913 = vmatprep.mubr.bf16.mxu0 %v2088
      %2914 = vmatmul.mubr.bf16.gmra.mrb[0].mxu0 %v2087
      %v2915 = vpop.f32.mrb[0].mxu0
      %v2916 = vadd.f32 %v2224, %v2915
      %v2917 = vpop.f32.mrb[0].mxu0
      %v2918 = vadd.f32 %v2228, %v2917
      %v2919 = vpop.f32.mrb[0].mxu0
      %v2920 = vpop.f32.mrb[0].mxu0
      %2921 = vdwg.mxu0
      %2922 = vmatprep.subr.bf16.mxu0 %v2690
      %2923 = vmatpush1.bf16.msra.mxu0 %v2689
      %2924 = vmatprep.subr.bf16.mxu0 %v2694
      %2925 = vmatpush1.bf16.msra.mxu0 %v2693
      %2926 = vmatprep.subr.bf16.mxu0 %v2698
      %2927 = vmatpush1.bf16.msra.mxu0 %v2697
      %2928 = vmatprep.subr.bf16.mxu0 %v2702
      %2929 = vmatpush1.bf16.msra.mxu0 %v2701
      %2930 = vmatprep.subr.bf16.mxu0 %v2706
      %2931 = vmatpush1.bf16.msra.mxu0 %v2705
      %2932 = vmatprep.subr.bf16.mxu0 %v2710
      %2933 = vmatpush1.bf16.msra.mxu0 %v2709
      %2934 = vmatprep.subr.bf16.mxu0 %v2714
      %2935 = vmatpush1.bf16.msra.mxu0 %v2713
      %2936 = vmatprep.subr.bf16.mxu0 %v2718
      %2937 = vmatpush1.bf16.msra.mxu0 %v2717
      %2938 = vmatprep.subr.bf16.mxu0 %v2722
      %2939 = vmatpush1.bf16.msra.mxu0 %v2721
      %2940 = vmatprep.subr.bf16.mxu0 %v2726
      %2941 = vmatpush1.bf16.msra.mxu0 %v2725
      %2942 = vmatprep.subr.bf16.mxu0 %v2730
      %2943 = vmatpush1.bf16.msra.mxu0 %v2729
      %2944 = vmatprep.subr.bf16.mxu0 %v2734
      %2945 = vmatpush1.bf16.msra.mxu0 %v2733
      %2946 = vmatprep.subr.bf16.mxu0 %v2738
      %2947 = vmatpush1.bf16.msra.mxu0 %v2737
      %2948 = vmatprep.subr.bf16.mxu0 %v2742
      %2949 = vmatpush1.bf16.msra.mxu0 %v2741
      %2950 = vmatprep.subr.bf16.mxu0 %v2746
      %2951 = vmatpush1.bf16.msra.mxu0 %v2745
      %2952 = vmatprep.subr.bf16.mxu0 %v2750
      %2953 = vmatpush1.bf16.msra.mxu0 %v2749
      %2954 = vmatprep.mubr.bf16.mxu0 %v2090
      %2955 = vmatmul.mubr.bf16.gmra.mrb[0].mxu0 %v2089
      %v2956 = vpop.f32.mrb[0].mxu0
      %v2957 = vadd.f32 %v2916, %v2956
      %v2958 = vpop.f32.mrb[0].mxu0
      %v2959 = vadd.f32 %v2918, %v2958
      %v2960 = vpop.f32.mrb[0].mxu0
      %v2961 = vpop.f32.mrb[0].mxu0
      %2962 = vdwg.mxu0
      %2963 = vmatprep.subr.bf16.mxu0 %v2628
      %2964 = vmatpush1.bf16.msra.mxu0 %v2627
      %2965 = vmatprep.subr.bf16.mxu0 %v2632
      %2966 = vmatpush1.bf16.msra.mxu0 %v2631
      %2967 = vmatprep.subr.bf16.mxu0 %v2636
      %2968 = vmatpush1.bf16.msra.mxu0 %v2635
      %2969 = vmatprep.subr.bf16.mxu0 %v2640
      %2970 = vmatpush1.bf16.msra.mxu0 %v2639
      %2971 = vmatprep.subr.bf16.mxu0 %v2644
      %2972 = vmatpush1.bf16.msra.mxu0 %v2643
      %2973 = vmatprep.subr.bf16.mxu0 %v2648
      %2974 = vmatpush1.bf16.msra.mxu0 %v2647
      %2975 = vmatprep.subr.bf16.mxu0 %v2652
      %2976 = vmatpush1.bf16.msra.mxu0 %v2651
      %2977 = vmatprep.subr.bf16.mxu0 %v2656
      %2978 = vmatpush1.bf16.msra.mxu0 %v2655
      %2979 = vmatprep.subr.bf16.mxu0 %v2660
      %2980 = vmatpush1.bf16.msra.mxu0 %v2659
      %2981 = vmatprep.subr.bf16.mxu0 %v2664
      %2982 = vmatpush1.bf16.msra.mxu0 %v2663
      %2983 = vmatprep.subr.bf16.mxu0 %v2668
      %2984 = vmatpush1.bf16.msra.mxu0 %v2667
      %2985 = vmatprep.subr.bf16.mxu0 %v2672
      %2986 = vmatpush1.bf16.msra.mxu0 %v2671
      %2987 = vmatprep.subr.bf16.mxu0 %v2676
      %2988 = vmatpush1.bf16.msra.mxu0 %v2675
      %2989 = vmatprep.subr.bf16.mxu0 %v2680
      %2990 = vmatpush1.bf16.msra.mxu0 %v2679
      %2991 = vmatprep.subr.bf16.mxu0 %v2684
      %2992 = vmatpush1.bf16.msra.mxu0 %v2683
      %2993 = vmatprep.subr.bf16.mxu0 %v2688
      %2994 = vmatpush1.bf16.msra.mxu0 %v2687
      %2995 = vmatprep.mubr.bf16.mxu0 %v2088
      %2996 = vmatmul.mubr.bf16.gmra.mrb[0].mxu0 %v2087
      %v2997 = vpop.f32.mrb[0].mxu0
      %v2998 = vadd.f32 %v2232, %v2997
      %v2999 = vpop.f32.mrb[0].mxu0
      %v3000 = vadd.f32 %v2236, %v2999
      %v3001 = vpop.f32.mrb[0].mxu0
      %v3002 = vpop.f32.mrb[0].mxu0
      %3003 = vdwg.mxu0
      %3004 = vmatprep.subr.bf16.mxu0 %v2692
      %3005 = vmatpush1.bf16.msra.mxu0 %v2691
      %3006 = vmatprep.subr.bf16.mxu0 %v2696
      %3007 = vmatpush1.bf16.msra.mxu0 %v2695
      %3008 = vmatprep.subr.bf16.mxu0 %v2700
      %3009 = vmatpush1.bf16.msra.mxu0 %v2699
      %3010 = vmatprep.subr.bf16.mxu0 %v2704
      %3011 = vmatpush1.bf16.msra.mxu0 %v2703
      %3012 = vmatprep.subr.bf16.mxu0 %v2708
      %3013 = vmatpush1.bf16.msra.mxu0 %v2707
      %3014 = vmatprep.subr.bf16.mxu0 %v2712
      %3015 = vmatpush1.bf16.msra.mxu0 %v2711
      %3016 = vmatprep.subr.bf16.mxu0 %v2716
      %3017 = vmatpush1.bf16.msra.mxu0 %v2715
      %3018 = vmatprep.subr.bf16.mxu0 %v2720
      %3019 = vmatpush1.bf16.msra.mxu0 %v2719
      %3020 = vmatprep.subr.bf16.mxu0 %v2724
      %3021 = vmatpush1.bf16.msra.mxu0 %v2723
      %3022 = vmatprep.subr.bf16.mxu0 %v2728
      %3023 = vmatpush1.bf16.msra.mxu0 %v2727
      %3024 = vmatprep.subr.bf16.mxu0 %v2732
      %3025 = vmatpush1.bf16.msra.mxu0 %v2731
      %3026 = vmatprep.subr.bf16.mxu0 %v2736
      %3027 = vmatpush1.bf16.msra.mxu0 %v2735
      %3028 = vmatprep.subr.bf16.mxu0 %v2740
      %3029 = vmatpush1.bf16.msra.mxu0 %v2739
      %3030 = vmatprep.subr.bf16.mxu0 %v2744
      %3031 = vmatpush1.bf16.msra.mxu0 %v2743
      %3032 = vmatprep.subr.bf16.mxu0 %v2748
      %3033 = vmatpush1.bf16.msra.mxu0 %v2747
      %3034 = vmatprep.subr.bf16.mxu0 %v2752
      %3035 = vmatpush1.bf16.msra.mxu0 %v2751
      %3036 = vmatprep.mubr.bf16.mxu0 %v2090
      %3037 = vmatmul.mubr.bf16.gmra.mrb[0].mxu0 %v2089
      %v3038 = vpop.f32.mrb[0].mxu0
      %v3039 = vadd.f32 %v2998, %v3038
      %v3040 = vpop.f32.mrb[0].mxu0
      %v3041 = vadd.f32 %v3000, %v3040
      %v3042 = vpop.f32.mrb[0].mxu0
      %v3043 = vpop.f32.mrb[0].mxu0
      %3044 = vdwg.mxu0
      %v3045 = vmax.f32 %v2957, 0.0
      %v3046 = vmax.f32 %v2959, 0.0
      %v3047 = vmax.f32 %v3039, 0.0
      %v3048 = vmax.f32 %v3041, 0.0
      %v3049 = vpack.c.bf16 %v3045, %v3045
      %v3050 = vpack.c.bf16 %v3046, %v3046
      %v3051 = vpack.c.bf16 %v3047, %v3047
      %v3052 = vpack.c.bf16 %v3048, %v3048
      %v3053 = vld [vmem:[#allocation8] sm:$0xf]
      %v3054 = vld [vmem:[#allocation8 + $0x4] sm:$0xf]
      %v3055 = vld [vmem:[#allocation8 + $0x8] sm:$0xf]
      %v3056 = vld [vmem:[#allocation8 + $0xc] sm:$0xf]
      %v3057 = vld [vmem:[#allocation8 + $0x10] sm:$0xf]
      %v3058 = vld [vmem:[#allocation8 + $0x14] sm:$0xf]
      %v3059 = vld [vmem:[#allocation8 + $0x18] sm:$0xf]
      %v3060 = vld [vmem:[#allocation8 + $0x1c] sm:$0xf]
      %v3061 = vld [vmem:[#allocation8 + $0x20] sm:$0xf]
      %v3062 = vld [vmem:[#allocation8 + $0x24] sm:$0xf]
      %v3063 = vld [vmem:[#allocation8 + $0x28] sm:$0xf]
      %v3064 = vld [vmem:[#allocation8 + $0x2c] sm:$0xf]
      %v3065 = vld [vmem:[#allocation8 + $0x30] sm:$0xf]
      %v3066 = vld [vmem:[#allocation8 + $0x34] sm:$0xf]
      %v3067 = vld [vmem:[#allocation8 + $0x38] sm:$0xf]
      %v3068 = vld [vmem:[#allocation8 + $0x3c] sm:$0xf]
      %v3069 = vld [vmem:[#allocation8 + $0x40] sm:$0xf]
      %v3070 = vld [vmem:[#allocation8 + $0x44] sm:$0xf]
      %v3071 = vld [vmem:[#allocation8 + $0x48] sm:$0xf]
      %v3072 = vld [vmem:[#allocation8 + $0x4c] sm:$0xf]
      %v3073 = vld [vmem:[#allocation8 + $0x50] sm:$0xf]
      %v3074 = vld [vmem:[#allocation8 + $0x54] sm:$0xf]
      %v3075 = vld [vmem:[#allocation8 + $0x58] sm:$0xf]
      %v3076 = vld [vmem:[#allocation8 + $0x5c] sm:$0xf]
      %v3077 = vld [vmem:[#allocation8 + $0x60] sm:$0xf]
      %v3078 = vld [vmem:[#allocation8 + $0x64] sm:$0xf]
      %v3079 = vld [vmem:[#allocation8 + $0x68] sm:$0xf]
      %v3080 = vld [vmem:[#allocation8 + $0x6c] sm:$0xf]
      %v3081 = vld [vmem:[#allocation8 + $0x70] sm:$0xf]
      %v3082 = vld [vmem:[#allocation8 + $0x74] sm:$0xf]
      %v3083 = vld [vmem:[#allocation8 + $0x78] sm:$0xf]
      %v3084 = vld [vmem:[#allocation8 + $0x7c] sm:$0xf]
      %v3085 = vld [vmem:[#allocation8 + $0x80] sm:$0xf]
      %v3086 = vld [vmem:[#allocation8 + $0x84] sm:$0xf]
      %v3087 = vld [vmem:[#allocation8 + $0x88] sm:$0xf]
      %v3088 = vld [vmem:[#allocation8 + $0x8c] sm:$0xf]
      %v3089 = vld [vmem:[#allocation8 + $0x90] sm:$0xf]
      %v3090 = vld [vmem:[#allocation8 + $0x94] sm:$0xf]
      %v3091 = vld [vmem:[#allocation8 + $0x98] sm:$0xf]
      %v3092 = vld [vmem:[#allocation8 + $0x9c] sm:$0xf]
      %v3093 = vld [vmem:[#allocation8 + $0xa0] sm:$0xf]
      %v3094 = vld [vmem:[#allocation8 + $0xa4] sm:$0xf]
      %v3095 = vld [vmem:[#allocation8 + $0xa8] sm:$0xf]
      %v3096 = vld [vmem:[#allocation8 + $0xac] sm:$0xf]
      %v3097 = vld [vmem:[#allocation8 + $0xb0] sm:$0xf]
      %v3098 = vld [vmem:[#allocation8 + $0xb4] sm:$0xf]
      %v3099 = vld [vmem:[#allocation8 + $0xb8] sm:$0xf]
      %v3100 = vld [vmem:[#allocation8 + $0xbc] sm:$0xf]
      %v3101 = vld [vmem:[#allocation8 + $0xc0] sm:$0xf]
      %v3102 = vld [vmem:[#allocation8 + $0xc4] sm:$0xf]
      %v3103 = vld [vmem:[#allocation8 + $0xc8] sm:$0xf]
      %v3104 = vld [vmem:[#allocation8 + $0xcc] sm:$0xf]
      %v3105 = vld [vmem:[#allocation8 + $0xd0] sm:$0xf]
      %v3106 = vld [vmem:[#allocation8 + $0xd4] sm:$0xf]
      %v3107 = vld [vmem:[#allocation8 + $0xd8] sm:$0xf]
      %v3108 = vld [vmem:[#allocation8 + $0xdc] sm:$0xf]
      %v3109 = vld [vmem:[#allocation8 + $0xe0] sm:$0xf]
      %v3110 = vld [vmem:[#allocation8 + $0xe4] sm:$0xf]
      %v3111 = vld [vmem:[#allocation8 + $0xe8] sm:$0xf]
      %v3112 = vld [vmem:[#allocation8 + $0xec] sm:$0xf]
      %v3113 = vld [vmem:[#allocation8 + $0xf0] sm:$0xf]
      %v3114 = vld [vmem:[#allocation8 + $0xf4] sm:$0xf]
      %v3115 = vld [vmem:[#allocation8 + $0xf8] sm:$0xf]
      %v3116 = vld [vmem:[#allocation8 + $0xfc] sm:$0xf]
      %v3117 = vld [vmem:[%s6] sm:$0x1]
      %v3119 = vlaneseq
      %v3120 = vshrl.u32 %v3119, 7
      %v3121 = vsub.s32 0, %v3120
      %v3122 = vrot.slane %v3117, %v3121
      %v3188 = vunpack.c.l.b16 %v3053
      %v3189 = vunpack.c.l.b16 %v3054
      %v3190 = vunpack.c.l.b16 %v3055
      %v3191 = vunpack.c.l.b16 %v3056
      %v3192 = vunpack.c.l.b16 %v3057
      %v3193 = vunpack.c.l.b16 %v3058
      %v3194 = vunpack.c.l.b16 %v3059
      %v3195 = vunpack.c.l.b16 %v3060
      %v3196 = vunpack.c.l.b16 %v3061
      %v3197 = vunpack.c.l.b16 %v3062
      %v3198 = vunpack.c.l.b16 %v3063
      %v3199 = vunpack.c.l.b16 %v3064
      %v3200 = vunpack.c.l.b16 %v3065
      %v3201 = vunpack.c.l.b16 %v3066
      %v3202 = vunpack.c.l.b16 %v3067
      %v3203 = vunpack.c.l.b16 %v3068
      %v3204 = vunpack.c.l.b16 %v3069
      %v3205 = vunpack.c.l.b16 %v3070
      %v3206 = vunpack.c.l.b16 %v3071
      %v3207 = vunpack.c.l.b16 %v3072
      %v3208 = vunpack.c.l.b16 %v3073
      %v3209 = vunpack.c.l.b16 %v3074
      %v3210 = vunpack.c.l.b16 %v3075
      %v3211 = vunpack.c.l.b16 %v3076
      %v3212 = vunpack.c.l.b16 %v3077
      %v3213 = vunpack.c.l.b16 %v3078
      %v3214 = vunpack.c.l.b16 %v3079
      %v3215 = vunpack.c.l.b16 %v3080
      %v3216 = vunpack.c.l.b16 %v3081
      %v3217 = vunpack.c.l.b16 %v3082
      %v3218 = vunpack.c.l.b16 %v3083
      %v3219 = vunpack.c.l.b16 %v3084
      %v3220 = vunpack.c.l.b16 %v3085
      %v3221 = vunpack.c.l.b16 %v3086
      %v3222 = vunpack.c.l.b16 %v3087
      %v3223 = vunpack.c.l.b16 %v3088
      %v3224 = vunpack.c.l.b16 %v3089
      %v3225 = vunpack.c.l.b16 %v3090
      %v3226 = vunpack.c.l.b16 %v3091
      %v3227 = vunpack.c.l.b16 %v3092
      %v3228 = vunpack.c.l.b16 %v3093
      %v3229 = vunpack.c.l.b16 %v3094
      %v3230 = vunpack.c.l.b16 %v3095
      %v3231 = vunpack.c.l.b16 %v3096
      %v3232 = vunpack.c.l.b16 %v3097
      %v3233 = vunpack.c.l.b16 %v3098
      %v3234 = vunpack.c.l.b16 %v3099
      %v3235 = vunpack.c.l.b16 %v3100
      %v3236 = vunpack.c.l.b16 %v3101
      %v3237 = vunpack.c.l.b16 %v3102
      %v3238 = vunpack.c.l.b16 %v3103
      %v3239 = vunpack.c.l.b16 %v3104
      %v3240 = vunpack.c.l.b16 %v3105
      %v3241 = vunpack.c.l.b16 %v3106
      %v3242 = vunpack.c.l.b16 %v3107
      %v3243 = vunpack.c.l.b16 %v3108
      %v3244 = vunpack.c.l.b16 %v3109
      %v3245 = vunpack.c.l.b16 %v3110
      %v3246 = vunpack.c.l.b16 %v3111
      %v3247 = vunpack.c.l.b16 %v3112
      %v3248 = vunpack.c.l.b16 %v3113
      %v3249 = vunpack.c.l.b16 %v3114
      %v3250 = vunpack.c.l.b16 %v3115
      %v3251 = vunpack.c.l.b16 %v3116
      %v3252 = vpack.c.b16 %v3189, %v3188
      %v3253 = vpack.c.b16 %v3191, %v3190
      %v3254 = vpack.c.b16 %v3193, %v3192
      %v3255 = vpack.c.b16 %v3195, %v3194
      %v3256 = vpack.c.b16 %v3197, %v3196
      %v3257 = vpack.c.b16 %v3199, %v3198
      %v3258 = vpack.c.b16 %v3201, %v3200
      %v3259 = vpack.c.b16 %v3203, %v3202
      %v3260 = vpack.c.b16 %v3205, %v3204
      %v3261 = vpack.c.b16 %v3207, %v3206
      %v3262 = vpack.c.b16 %v3209, %v3208
      %v3263 = vpack.c.b16 %v3211, %v3210
      %v3264 = vpack.c.b16 %v3213, %v3212
      %v3265 = vpack.c.b16 %v3215, %v3214
      %v3266 = vpack.c.b16 %v3217, %v3216
      %v3267 = vpack.c.b16 %v3219, %v3218
      %v3268 = vpack.c.b16 %v3221, %v3220
      %v3269 = vpack.c.b16 %v3223, %v3222
      %v3270 = vpack.c.b16 %v3225, %v3224
      %v3271 = vpack.c.b16 %v3227, %v3226
      %v3272 = vpack.c.b16 %v3229, %v3228
      %v3273 = vpack.c.b16 %v3231, %v3230
      %v3274 = vpack.c.b16 %v3233, %v3232
      %v3275 = vpack.c.b16 %v3235, %v3234
      %v3276 = vpack.c.b16 %v3237, %v3236
      %v3277 = vpack.c.b16 %v3239, %v3238
      %v3278 = vpack.c.b16 %v3241, %v3240
      %v3279 = vpack.c.b16 %v3243, %v3242
      %v3280 = vpack.c.b16 %v3245, %v3244
      %v3281 = vpack.c.b16 %v3247, %v3246
      %v3282 = vpack.c.b16 %v3249, %v3248
      %v3283 = vpack.c.b16 %v3251, %v3250
      %3316 = vmatprep.subr.bf16.mxu0 0
      %3317 = vmatpush1.bf16.msra.mxu0 %v3252
      %3318 = vmatprep.subr.bf16.mxu0 0
      %3319 = vmatpush1.bf16.msra.mxu0 %v3253
      %3320 = vmatprep.subr.bf16.mxu0 0
      %3321 = vmatpush1.bf16.msra.mxu0 %v3254
      %3322 = vmatprep.subr.bf16.mxu0 0
      %3323 = vmatpush1.bf16.msra.mxu0 %v3255
      %3324 = vmatprep.subr.bf16.mxu0 0
      %3325 = vmatpush1.bf16.msra.mxu0 %v3256
      %3326 = vmatprep.subr.bf16.mxu0 0
      %3327 = vmatpush1.bf16.msra.mxu0 %v3257
      %3328 = vmatprep.subr.bf16.mxu0 0
      %3329 = vmatpush1.bf16.msra.mxu0 %v3258
      %3330 = vmatprep.subr.bf16.mxu0 0
      %3331 = vmatpush1.bf16.msra.mxu0 %v3259
      %3332 = vmatprep.subr.bf16.mxu0 0
      %3333 = vmatpush1.bf16.msra.mxu0 %v3260
      %3334 = vmatprep.subr.bf16.mxu0 0
      %3335 = vmatpush1.bf16.msra.mxu0 %v3261
      %3336 = vmatprep.subr.bf16.mxu0 0
      %3337 = vmatpush1.bf16.msra.mxu0 %v3262
      %3338 = vmatprep.subr.bf16.mxu0 0
      %3339 = vmatpush1.bf16.msra.mxu0 %v3263
      %3340 = vmatprep.subr.bf16.mxu0 0
      %3341 = vmatpush1.bf16.msra.mxu0 %v3264
      %3342 = vmatprep.subr.bf16.mxu0 0
      %3343 = vmatpush1.bf16.msra.mxu0 %v3265
      %3344 = vmatprep.subr.bf16.mxu0 0
      %3345 = vmatpush1.bf16.msra.mxu0 %v3266
      %3346 = vmatprep.subr.bf16.mxu0 0
      %3347 = vmatpush1.bf16.msra.mxu0 %v3267
      %3348 = vmatprep.mubr.bf16.mxu0 %v3050
      %3349 = vmatmul.mubr.bf16.gmra.mrb[0].mxu0 %v3049
      %v3350 = vpop.f32.mrb[0].mxu0
      %v3351 = vadd.f32 %v3122, %v3350
      %v3352 = vpop.f32.mrb[0].mxu0
      %v3353 = vpop.f32.mrb[0].mxu0
      %v3354 = vpop.f32.mrb[0].mxu0
      %3355 = vdwg.mxu0
      %3356 = vmatprep.subr.bf16.mxu0 0
      %3357 = vmatpush1.bf16.msra.mxu0 %v3268
      %3358 = vmatprep.subr.bf16.mxu0 0
      %3359 = vmatpush1.bf16.msra.mxu0 %v3269
      %3360 = vmatprep.subr.bf16.mxu0 0
      %3361 = vmatpush1.bf16.msra.mxu0 %v3270
      %3362 = vmatprep.subr.bf16.mxu0 0
      %3363 = vmatpush1.bf16.msra.mxu0 %v3271
      %3364 = vmatprep.subr.bf16.mxu0 0
      %3365 = vmatpush1.bf16.msra.mxu0 %v3272
      %3366 = vmatprep.subr.bf16.mxu0 0
      %3367 = vmatpush1.bf16.msra.mxu0 %v3273
      %3368 = vmatprep.subr.bf16.mxu0 0
      %3369 = vmatpush1.bf16.msra.mxu0 %v3274
      %3370 = vmatprep.subr.bf16.mxu0 0
      %3371 = vmatpush1.bf16.msra.mxu0 %v3275
      %3372 = vmatprep.subr.bf16.mxu0 0
      %3373 = vmatpush1.bf16.msra.mxu0 %v3276
      %3374 = vmatprep.subr.bf16.mxu0 0
      %3375 = vmatpush1.bf16.msra.mxu0 %v3277
      %3376 = vmatprep.subr.bf16.mxu0 0
      %3377 = vmatpush1.bf16.msra.mxu0 %v3278
      %3378 = vmatprep.subr.bf16.mxu0 0
      %3379 = vmatpush1.bf16.msra.mxu0 %v3279
      %3380 = vmatprep.subr.bf16.mxu0 0
      %3381 = vmatpush1.bf16.msra.mxu0 %v3280
      %3382 = vmatprep.subr.bf16.mxu0 0
      %3383 = vmatpush1.bf16.msra.mxu0 %v3281
      %3384 = vmatprep.subr.bf16.mxu0 0
      %3385 = vmatpush1.bf16.msra.mxu0 %v3282
      %3386 = vmatprep.subr.bf16.mxu0 0
      %3387 = vmatpush1.bf16.msra.mxu0 %v3283
      %3388 = vmatprep.mubr.bf16.mxu0 %v3052
      %3389 = vmatmul.mubr.bf16.gmra.mrb[0].mxu0 %v3051
      %v3390 = vpop.f32.mrb[0].mxu0
      %v3391 = vadd.f32 %v3351, %v3390
      %v3392 = vpop.f32.mrb[0].mxu0
      %v3393 = vpop.f32.mrb[0].mxu0
      %v3394 = vpop.f32.mrb[0].mxu0
      %3395 = vdwg.mxu0
      %v3396 = vmax.f32 %v3391, 0.0
      %v3397 = vpack.c.bf16 %v3396, %v3396
      %v3398 = vld [vmem:[%s7] sm:$0xf]
      %v3399 = vld [vmem:[%s7 + $0x4] sm:$0xf]
      %v3400 = vld [vmem:[%s7 + $0x8] sm:$0xf]
      %v3401 = vld [vmem:[%s7 + $0xc] sm:$0xf]
      %v3402 = vld [vmem:[%s7 + $0x10] sm:$0xf]
      %v3403 = vld [vmem:[%s7 + $0x14] sm:$0xf]
      %v3404 = vld [vmem:[%s7 + $0x18] sm:$0xf]
      %v3405 = vld [vmem:[%s7 + $0x1c] sm:$0xf]
      %v3406 = vld [vmem:[%s7 + $0x20] sm:$0xf]
      %v3407 = vld [vmem:[%s7 + $0x24] sm:$0xf]
      %v3408 = vld [vmem:[%s7 + $0x28] sm:$0xf]
      %v3409 = vld [vmem:[%s7 + $0x2c] sm:$0xf]
      %v3410 = vld [vmem:[%s7 + $0x30] sm:$0xf]
      %v3411 = vld [vmem:[%s7 + $0x34] sm:$0xf]
      %v3412 = vld [vmem:[%s7 + $0x38] sm:$0xf]
      %v3413 = vld [vmem:[%s7 + $0x3c] sm:$0xf]
      %v3414 = vld [vmem:[%s8] sm:$0x1]
      %v3416 = vlaneseq
      %v3417 = vshrl.u32 %v3416, 7
      %v3418 = vsub.s32 0, %v3417
      %v3419 = vrot.slane %v3414, %v3418
      %v3437 = vunpack.c.l.b16 %v3398
      %v3438 = vunpack.c.l.b16 %v3399
      %v3439 = vunpack.c.l.b16 %v3400
      %v3440 = vunpack.c.l.b16 %v3401
      %v3441 = vunpack.c.l.b16 %v3402
      %v3442 = vunpack.c.l.b16 %v3403
      %v3443 = vunpack.c.l.b16 %v3404
      %v3444 = vunpack.c.l.b16 %v3405
      %v3445 = vunpack.c.l.b16 %v3406
      %v3446 = vunpack.c.l.b16 %v3407
      %v3447 = vunpack.c.l.b16 %v3408
      %v3448 = vunpack.c.l.b16 %v3409
      %v3449 = vunpack.c.l.b16 %v3410
      %v3450 = vunpack.c.l.b16 %v3411
      %v3451 = vunpack.c.l.b16 %v3412
      %v3452 = vunpack.c.l.b16 %v3413
      %v3453 = vpack.c.b16 %v3438, %v3437
      %v3454 = vpack.c.b16 %v3440, %v3439
      %v3455 = vpack.c.b16 %v3442, %v3441
      %v3456 = vpack.c.b16 %v3444, %v3443
      %v3457 = vpack.c.b16 %v3446, %v3445
      %v3458 = vpack.c.b16 %v3448, %v3447
      %v3459 = vpack.c.b16 %v3450, %v3449
      %v3460 = vpack.c.b16 %v3452, %v3451
      %3469 = vmatprep.subr.bf16.mxu0 0
      %3470 = vmatpush1.bf16.msra.mxu0 %v3453
      %3471 = vmatprep.subr.bf16.mxu0 0
      %3472 = vmatpush1.bf16.msra.mxu0 %v3454
      %3473 = vmatprep.subr.bf16.mxu0 0
      %3474 = vmatpush1.bf16.msra.mxu0 %v3455
      %3475 = vmatprep.subr.bf16.mxu0 0
      %3476 = vmatpush1.bf16.msra.mxu0 %v3456
      %3477 = vmatprep.subr.bf16.mxu0 0
      %3478 = vmatpush1.bf16.msra.mxu0 %v3457
      %3479 = vmatprep.subr.bf16.mxu0 0
      %3480 = vmatpush1.bf16.msra.mxu0 %v3458
      %3481 = vmatprep.subr.bf16.mxu0 0
      %3482 = vmatpush1.bf16.msra.mxu0 %v3459
      %3483 = vmatprep.subr.bf16.mxu0 0
      %3484 = vmatpush1.bf16.msra.mxu0 %v3460
      %3485 = vmatprep.subr.bf16.mxu0 0
      %3486 = vmatpush1.bf16.msra.mxu0 0
      %3487 = vmatprep.subr.bf16.mxu0 0
      %3488 = vmatpush1.bf16.msra.mxu0 0
      %3489 = vmatprep.subr.bf16.mxu0 0
      %3490 = vmatpush1.bf16.msra.mxu0 0
      %3491 = vmatprep.subr.bf16.mxu0 0
      %3492 = vmatpush1.bf16.msra.mxu0 0
      %3493 = vmatprep.subr.bf16.mxu0 0
      %3494 = vmatpush1.bf16.msra.mxu0 0
      %3495 = vmatprep.subr.bf16.mxu0 0
      %3496 = vmatpush1.bf16.msra.mxu0 0
      %3497 = vmatprep.subr.bf16.mxu0 0
      %3498 = vmatpush1.bf16.msra.mxu0 0
      %3499 = vmatprep.subr.bf16.mxu0 0
      %3500 = vmatpush1.bf16.msra.mxu0 0
      %3501 = vmatprep.mubr.bf16.mxu0 0
      %3502 = vmatmul.mubr.bf16.gmra.mrb[0].mxu0 %v3397
      %v3503 = vpop.f32.mrb[0].mxu0
      %v3504 = vadd.f32 %v3419, %v3503
      %v3505 = vpop.f32.mrb[0].mxu0
      %v3506 = vpop.f32.mrb[0].mxu0
      %v3507 = vpop.f32.mrb[0].mxu0
      %3508 = vdwg.mxu0
      %3509 = vst [vmem:[#allocation9] sm:$0x3] %v3504
    $region57: #{simple_ff_forward.1} parent=1 // pred_fallthru
      _
    // Predicated region
    $region58: #{simple_ff_forward.1} parent=1 // pred_check
      _
    $region59: #{simple_ff_forward.1} parent=1 // pred_check_branch
      %3511 = sbr.rel (0) target = $region61
    $region60: #{simple_ff_forward.1} parent=1 // pred_region
      %s3513 = ssub.s32 32, 32
      %3514 = vsyncadd [#allocation5], %s3513
      %s3516 = sshll.u32 [#allocation9], 4
      %s3517 = int_to_ptr.vmem [resolvable:$true] %s3516
      %3519 = dma.vmem_to_hbm [thread:$0]  %s3517, 32, %s9, [#allocation5]
    $region61: #{simple_ff_forward.1} parent=1 // pred_fallthru
      _
    // Predicated region
    $region62: #{simple_ff_forward.1} parent=1 // pred_check
      _
    $region63: #{simple_ff_forward.1} parent=1 // pred_check_branch
      %3521 = sbr.rel (0) target = $region65
    $region64: #{simple_ff_forward.1} parent=1 // pred_region
      %3522 = dma.done [#allocation5], 32
    $region65: #{simple_ff_forward.1} parent=1 // pred_fallthru
      _
    %3523 = vsyncpa [#allocation4], 1
    %3524 = vsyncpa [#allocation7], 1
    %3525 = vsyncpa [#allocation5], 1

</llo_original>
